<compile_context>
chip_gen: v6e
topology: v6e:2x2x1
jax: 0.10.0
libtpu: 0.0.40
codegen_flags: <defaults>
</compile_context>

<pallas_src>
import jax
import jax.numpy as jnp
import numpy as np
from jax.experimental import pallas as pl
from jax.experimental.pallas import tpu as pltpu

BN_EPS = 1e-5


# ----------------------------------------------------------------------------
# Fused residual-block kernel
# ----------------------------------------------------------------------------
def _make_residual_block_kernel(H, W, Cin, Cout, Cmid, has_shortcut):
    def conv3x3(a, w_ref, cin, cout):
        # 1-pixel zero halo built in registers (no VMEM scratch zero-fill).
        zr = jnp.zeros((1, W, cin), jnp.float32)
        zc = jnp.zeros((H + 2, 1, cin), jnp.float32)
        ap = jnp.concatenate([zr, a, zr], axis=0)          # (H+2, W,   cin)
        ap = jnp.concatenate([zc, ap, zc], axis=1)         # (H+2, W+2, cin)
        # im2col: single (H*W, 9*cin) x (9*cin, cout) matmul, f32 accumulate on MXU.
        patches = jnp.concatenate(
            [ap[dy:dy + H, dx:dx + W, :] for dy in range(3) for dx in range(3)],
            axis=-1)                                       # (H, W, 9*cin)
        lhs = patches.reshape(H * W, 9 * cin).astype(jnp.bfloat16)
        rhs = w_ref[...].astype(jnp.bfloat16)              # (9*cin, cout)
        out = jnp.dot(lhs, rhs, preferred_element_type=jnp.float32)
        return out.reshape(H, W, cout)

    def conv1x1(a, w_ref, cin, cout):
        lhs = a.reshape(H * W, cin).astype(jnp.bfloat16)
        rhs = w_ref[...].astype(jnp.bfloat16)              # (cin, cout)
        out = jnp.dot(lhs, rhs, preferred_element_type=jnp.float32)
        return out.reshape(H, W, cout)

    def kernel(*refs):
        if has_shortcut:
            (x_ref, s1, b1, w1, s2, b2, w2, s3, b3, wadd,
             s4, b4, w3, wsc, o_ref) = refs
        else:
            (x_ref, s1, b1, w1, s2, b2, w2, s3, b3, wadd,
             s4, b4, w3, o_ref) = refs

        x = x_ref[0].astype(jnp.float32)                   # (H, W, Cin)

        a = jnp.maximum(x * s1[...] + b1[...], 0.0)        # BN1 + ReLU
        t = conv3x3(a, w1, Cin, Cout)                      # conv1 (3x3, pad 1)

        a = jnp.maximum(t * s2[...] + b2[...], 0.0)        # BN2 + ReLU
        t = conv1x1(a, w2, Cout, Cmid)                     # conv2 (1x1)

        a = jnp.maximum(t * s3[...] + b3[...], 0.0)        # BN3 + ReLU
        t = conv3x3(a, wadd, Cmid, Cmid)                   # convadd (3x3, pad 1)

        a = jnp.maximum(t * s4[...] + b4[...], 0.0)        # BNadd + ReLU
        t = conv3x3(a, w3, Cmid, Cout)                     # conv3 (3x3, pad 1)

        if has_shortcut:
            sc = conv1x1(x, wsc, Cin, Cout)                # 1x1 shortcut conv
        else:
            sc = x                                         # Identity (Cin == Cout)

        out = t + sc
        # Lane-dense store: (H, W*Cout) slab (W*Cout is a multiple of 128 at these sizes).
        o_ref[0] = out.reshape(H, W * Cout).astype(o_ref.dtype)

    return kernel


# ----------------------------------------------------------------------------
# Wrapper (pallas_call plumbing)
# ----------------------------------------------------------------------------
def residual_block_forward(x_nhwc, p):
    """ResidualBlock.forward (eval-mode BN, stride=1) on NHWC input."""
    N, H, W, Cin = x_nhwc.shape
    Cout = p["w1"].shape[-1]
    Cmid = p["w2"].shape[-1]
    has_shortcut = "wsc" in p
    if not has_shortcut and Cin != Cout:
        raise ValueError(
            "Identity shortcut requires input_channels == output_channels "
            f"(got Cin={Cin}, Cout={Cout}); provide 'wsc' instead.")

    def aff(c, bn):  # fold BN into per-channel scale/shift
        g, b, m, v = bn
        s = g / jnp.sqrt(v + BN_EPS)
        return (s.reshape(1, 1, c).astype(jnp.float32),
                (b - m * s).reshape(1, 1, c).astype(jnp.float32))

    s1, b1 = aff(Cin, p["bn1"])
    s2, b2 = aff(Cout, p["bn2"])
    s3, b3 = aff(Cmid, p["bn3"])
    s4, b4 = aff(Cmid, p["bnadd"])

    # Pre-flatten 3x3 HWIO weights to (9*Cin, Cout) for the im2col matmul
    # (flattening order (kh, kw, cin) matches the in-kernel patch concat order).
    w1r = p["w1"].reshape(9 * Cin, Cout)
    waddr = p["wadd"].reshape(9 * Cmid, Cmid)
    w3r = p["w3"].reshape(9 * Cmid, Cout)

    kernel = _make_residual_block_kernel(H, W, Cin, Cout, Cmid, has_shortcut)

    def vec_spec(c):
        return pl.BlockSpec((1, 1, c), lambda n: (0, 0, 0))

    def mat_spec(r, c):
        return pl.BlockSpec((r, c), lambda n: (0, 0))

    in_specs = [
        pl.BlockSpec((1, H, W, Cin), lambda n: (n, 0, 0, 0)),      # x
        vec_spec(Cin), vec_spec(Cin), mat_spec(9 * Cin, Cout),     # BN1, conv1
        vec_spec(Cout), vec_spec(Cout), mat_spec(Cout, Cmid),      # BN2, conv2
        vec_spec(Cmid), vec_spec(Cmid), mat_spec(9 * Cmid, Cmid),  # BN3, convadd
        vec_spec(Cmid), vec_spec(Cmid), mat_spec(9 * Cmid, Cout),  # BNadd, conv3
    ]
    args = [x_nhwc, s1, b1, w1r, s2, b2, p["w2"],
            s3, b3, waddr, s4, b4, w3r]
    if has_shortcut:
        in_specs.append(mat_spec(Cin, Cout))
        args.append(p["wsc"])

    out_slab = pl.pallas_call(
        kernel,
        out_shape=jax.ShapeDtypeStruct((N, H, W * Cout), jnp.float32),
        grid_spec=pltpu.PrefetchScalarGridSpec(
            num_scalar_prefetch=0,
            grid=(N,),
            in_specs=in_specs,
            out_specs=pl.BlockSpec((1, H, W * Cout), lambda n: (n, 0, 0)),
        ),
        compiler_params=pltpu.CompilerParams(
            dimension_semantics=("parallel",)),  # batch items independent -> megacore
    )(*args)

    return out_slab.reshape(N, H, W, Cout)


# ----------------------------------------------------------------------------
# Pure-JAX reference (for verification only)
# ----------------------------------------------------------------------------
def reference_forward(x_nhwc, p):
    def bn(x, g, b, m, v):
        return (x - m) / jnp.sqrt(v + BN_EPS) * g + b

    def conv(x, w, pad):
        return jax.lax.conv_general_dilated(
            x, w, (1, 1), pad, dimension_numbers=("NHWC", "HWIO", "NHWC"),
            preferred_element_type=jnp.float32)

    out = conv(jax.nn.relu(bn(x_nhwc, *p["bn1"])), p["w1"], "SAME")
    out = conv(jax.nn.relu(bn(out, *p["bn2"])), p["w2"][None, None], "VALID")
    out = conv(jax.nn.relu(bn(out, *p["bn3"])), p["wadd"], "SAME")
    out = conv(jax.nn.relu(bn(out, *p["bnadd"])), p["w3"], "SAME")
    sc = conv(x_nhwc, p["wsc"][None, None], "VALID") if "wsc" in p else x_nhwc
    return out + sc


# ----------------------------------------------------------------------------
# Main
# ----------------------------------------------------------------------------
if __name__ == "__main__":
    N, Cin, H, W = 2, 4, 16, 16
    Cout, mwf = 8, 2
    Cmid = Cout * mwf

    key = jax.random.PRNGKey(0)
    keys = jax.random.split(key, 32)   # enough for the 22 draws below
    ki = iter(keys)

    def bn_params(c):
        return (jax.random.uniform(next(ki), (c,), jnp.float32, 0.5, 1.5),   # gamma
                0.1 * jax.random.normal(next(ki), (c,), jnp.float32),        # beta
                0.1 * jax.random.normal(next(ki), (c,), jnp.float32),        # running_mean
                jax.random.uniform(next(ki), (c,), jnp.float32, 0.5, 1.5))   # running_var

    params = {
        "bn1": bn_params(Cin),
        "w1": 0.1 * jax.random.normal(next(ki), (3, 3, Cin, Cout), jnp.float32),
        "bn2": bn_params(Cout),
        "w2": 0.1 * jax.random.normal(next(ki), (Cout, Cmid), jnp.float32),
        "bn3": bn_params(Cmid),
        "wadd": 0.1 * jax.random.normal(next(ki), (3, 3, Cmid, Cmid), jnp.float32),
        "bnadd": bn_params(Cmid),
        "w3": 0.1 * jax.random.normal(next(ki), (3, 3, Cmid, Cout), jnp.float32),
        # input_channels != output_channels -> 1x1 shortcut conv
        "wsc": 0.1 * jax.random.normal(next(ki), (Cin, Cout), jnp.float32),
    }

    x_nchw = jax.random.normal(next(ki), (N, Cin, H, W), jnp.float32)  # PyTorch layout
    x_nhwc = jnp.transpose(x_nchw, (0, 2, 3, 1))                        # kernel layout

    out_nhwc = residual_block_forward(x_nhwc, params)
    out_nchw = jnp.transpose(out_nhwc, (0, 3, 1, 2))
    jax.block_until_ready(out_nchw)

    ref_nhwc = reference_forward(x_nhwc, params)
    ref_nchw = jnp.transpose(ref_nhwc, (0, 3, 1, 2))

    # bf16 matmul inputs with f32 accumulation -> slightly looser tolerance.
    np.testing.assert_allclose(np.asarray(out_nchw), np.asarray(ref_nchw),
                               rtol=3e-2, atol=3e-2)
    print("KERNEL_OK")
</pallas_src>

<mosaic_0001>
module attributes {stable_mosaic.version = 11 : i64} {
  func.func @kernel(%arg0: i32, %arg1: memref<1x16x16x4xf32, #tpu.memory_space<vmem>>, %arg2: memref<1x1x4xf32, #tpu.memory_space<vmem>>, %arg3: memref<1x1x4xf32, #tpu.memory_space<vmem>>, %arg4: memref<36x8xf32, #tpu.memory_space<vmem>>, %arg5: memref<1x1x8xf32, #tpu.memory_space<vmem>>, %arg6: memref<1x1x8xf32, #tpu.memory_space<vmem>>, %arg7: memref<8x16xf32, #tpu.memory_space<vmem>>, %arg8: memref<1x1x16xf32, #tpu.memory_space<vmem>>, %arg9: memref<1x1x16xf32, #tpu.memory_space<vmem>>, %arg10: memref<144x16xf32, #tpu.memory_space<vmem>>, %arg11: memref<1x1x16xf32, #tpu.memory_space<vmem>>, %arg12: memref<1x1x16xf32, #tpu.memory_space<vmem>>, %arg13: memref<144x8xf32, #tpu.memory_space<vmem>>, %arg14: memref<4x8xf32, #tpu.memory_space<vmem>>, %arg15: memref<1x16x128xf32, #tpu.memory_space<vmem>>) attributes {dimension_semantics = [#tpu.dimension_semantics<parallel>], iteration_bounds = array<i64: 2>, scalar_prefetch = 0 : i64, scratch_operands = 0 : i64, tpu.core_type = #tpu.core_type<tc>, window_params = [{transform_indices = @transform_0, window_bounds = array<i64: 1, 16, 16, 4>}, {pipeline_mode = #tpu.pipeline_mode<synchronous>, transform_indices = @transform_1, window_bounds = array<i64: 1, 1, 4>}, {pipeline_mode = #tpu.pipeline_mode<synchronous>, transform_indices = @transform_2, window_bounds = array<i64: 1, 1, 4>}, {pipeline_mode = #tpu.pipeline_mode<synchronous>, transform_indices = @transform_3, window_bounds = array<i64: 36, 8>}, {pipeline_mode = #tpu.pipeline_mode<synchronous>, transform_indices = @transform_4, window_bounds = array<i64: 1, 1, 8>}, {pipeline_mode = #tpu.pipeline_mode<synchronous>, transform_indices = @transform_5, window_bounds = array<i64: 1, 1, 8>}, {pipeline_mode = #tpu.pipeline_mode<synchronous>, transform_indices = @transform_6, window_bounds = array<i64: 8, 16>}, {pipeline_mode = #tpu.pipeline_mode<synchronous>, transform_indices = @transform_7, window_bounds = array<i64: 1, 1, 16>}, {pipeline_mode = #tpu.pipeline_mode<synchronous>, transform_indices = @transform_8, window_bounds = array<i64: 1, 1, 16>}, {pipeline_mode = #tpu.pipeline_mode<synchronous>, transform_indices = @transform_9, window_bounds = array<i64: 144, 16>}, {pipeline_mode = #tpu.pipeline_mode<synchronous>, transform_indices = @transform_10, window_bounds = array<i64: 1, 1, 16>}, {pipeline_mode = #tpu.pipeline_mode<synchronous>, transform_indices = @transform_11, window_bounds = array<i64: 1, 1, 16>}, {pipeline_mode = #tpu.pipeline_mode<synchronous>, transform_indices = @transform_12, window_bounds = array<i64: 144, 8>}, {pipeline_mode = #tpu.pipeline_mode<synchronous>, transform_indices = @transform_13, window_bounds = array<i64: 4, 8>}, {transform_indices = @transform_14, window_bounds = array<i64: 1, 16, 128>}]} {
    %c0 = arith.constant 0 : index
    %c0_0 = arith.constant 0 : index
    %c0_1 = arith.constant 0 : index
    %c0_2 = arith.constant 0 : index
    %0 = vector.load %arg1[%c0, %c0_0, %c0_1, %c0_2] : memref<1x16x16x4xf32, #tpu.memory_space<vmem>>, vector<1x16x16x4xf32>
    %1 = vector.shape_cast %0 : vector<1x16x16x4xf32> to vector<16x16x4xf32>
    %c0_3 = arith.constant 0 : index
    %c0_4 = arith.constant 0 : index
    %c0_5 = arith.constant 0 : index
    %2 = vector.load %arg2[%c0_3, %c0_4, %c0_5] : memref<1x1x4xf32, #tpu.memory_space<vmem>>, vector<1x1x4xf32>
    %3 = vector.broadcast %2 : vector<1x1x4xf32> to vector<16x16x4xf32>
    %4 = arith.mulf %1, %3 : vector<16x16x4xf32>
    %c0_6 = arith.constant 0 : index
    %c0_7 = arith.constant 0 : index
    %c0_8 = arith.constant 0 : index
    %5 = vector.load %arg3[%c0_6, %c0_7, %c0_8] : memref<1x1x4xf32, #tpu.memory_space<vmem>>, vector<1x1x4xf32>
    %6 = vector.broadcast %5 : vector<1x1x4xf32> to vector<16x16x4xf32>
    %7 = arith.addf %4, %6 : vector<16x16x4xf32>
    %cst = arith.constant 0.000000e+00 : f32
    %8 = vector.broadcast %cst : f32 to vector<16x16x4xf32>
    %9 = arith.maximumf %7, %8 : vector<16x16x4xf32>
    %cst_9 = arith.constant 0.000000e+00 : f32
    %10 = vector.broadcast %cst_9 : f32 to vector<1x16x4xf32>
    %cst_10 = arith.constant 0.000000e+00 : f32
    %11 = vector.broadcast %cst_10 : f32 to vector<18x1x4xf32>
    %12 = tpu.concatenate %10, %9, %10 in 0 : vector<1x16x4xf32>, vector<16x16x4xf32>, vector<1x16x4xf32> -> vector<18x16x4xf32>
    %13 = tpu.concatenate %11, %12, %11 in 1 : vector<18x1x4xf32>, vector<18x16x4xf32>, vector<18x1x4xf32> -> vector<18x18x4xf32>
    %14 = vector.extract_strided_slice %13 {offsets = [0, 0, 0], sizes = [16, 16, 4], strides = [1, 1, 1]} : vector<18x18x4xf32> to vector<16x16x4xf32>
    %15 = vector.extract_strided_slice %13 {offsets = [0, 1, 0], sizes = [16, 16, 4], strides = [1, 1, 1]} : vector<18x18x4xf32> to vector<16x16x4xf32>
    %16 = vector.extract_strided_slice %13 {offsets = [0, 2, 0], sizes = [16, 16, 4], strides = [1, 1, 1]} : vector<18x18x4xf32> to vector<16x16x4xf32>
    %17 = vector.extract_strided_slice %13 {offsets = [1, 0, 0], sizes = [16, 16, 4], strides = [1, 1, 1]} : vector<18x18x4xf32> to vector<16x16x4xf32>
    %18 = vector.extract_strided_slice %13 {offsets = [1, 1, 0], sizes = [16, 16, 4], strides = [1, 1, 1]} : vector<18x18x4xf32> to vector<16x16x4xf32>
    %19 = vector.extract_strided_slice %13 {offsets = [1, 2, 0], sizes = [16, 16, 4], strides = [1, 1, 1]} : vector<18x18x4xf32> to vector<16x16x4xf32>
    %20 = vector.extract_strided_slice %13 {offsets = [2, 0, 0], sizes = [16, 16, 4], strides = [1, 1, 1]} : vector<18x18x4xf32> to vector<16x16x4xf32>
    %21 = vector.extract_strided_slice %13 {offsets = [2, 1, 0], sizes = [16, 16, 4], strides = [1, 1, 1]} : vector<18x18x4xf32> to vector<16x16x4xf32>
    %22 = vector.extract_strided_slice %13 {offsets = [2, 2, 0], sizes = [16, 16, 4], strides = [1, 1, 1]} : vector<18x18x4xf32> to vector<16x16x4xf32>
    %23 = tpu.concatenate %14, %15, %16, %17, %18, %19, %20, %21, %22 in 2 : vector<16x16x4xf32>, vector<16x16x4xf32>, vector<16x16x4xf32>, vector<16x16x4xf32>, vector<16x16x4xf32>, vector<16x16x4xf32>, vector<16x16x4xf32>, vector<16x16x4xf32>, vector<16x16x4xf32> -> vector<16x16x36xf32>
    %24 = vector.shape_cast %23 : vector<16x16x36xf32> to vector<256x36xf32>
    %25 = arith.truncf %24 : vector<256x36xf32> to vector<256x36xbf16>
    %c0_11 = arith.constant 0 : index
    %c0_12 = arith.constant 0 : index
    %26 = vector.load %arg4[%c0_11, %c0_12] : memref<36x8xf32, #tpu.memory_space<vmem>>, vector<36x8xf32>
    %27 = arith.truncf %26 : vector<36x8xf32> to vector<36x8xbf16>
    %cst_13 = arith.constant dense<0.000000e+00> : vector<256x8xf32>
    %28 = tpu.matmul %25, %27, %cst_13 {dimension_numbers = #tpu.dot_dimension_numbers<[1], [0], [0], [1], [0, 0, 1, 1], [], []>} : vector<256x36xbf16>, vector<36x8xbf16>, vector<256x8xf32> -> vector<256x8xf32>
    %29 = vector.shape_cast %28 : vector<256x8xf32> to vector<16x16x8xf32>
    %c0_14 = arith.constant 0 : index
    %c0_15 = arith.constant 0 : index
    %c0_16 = arith.constant 0 : index
    %30 = vector.load %arg5[%c0_14, %c0_15, %c0_16] : memref<1x1x8xf32, #tpu.memory_space<vmem>>, vector<1x1x8xf32>
    %31 = vector.broadcast %30 : vector<1x1x8xf32> to vector<16x16x8xf32>
    %32 = arith.mulf %29, %31 : vector<16x16x8xf32>
    %c0_17 = arith.constant 0 : index
    %c0_18 = arith.constant 0 : index
    %c0_19 = arith.constant 0 : index
    %33 = vector.load %arg6[%c0_17, %c0_18, %c0_19] : memref<1x1x8xf32, #tpu.memory_space<vmem>>, vector<1x1x8xf32>
    %34 = vector.broadcast %33 : vector<1x1x8xf32> to vector<16x16x8xf32>
    %35 = arith.addf %32, %34 : vector<16x16x8xf32>
    %cst_20 = arith.constant 0.000000e+00 : f32
    %36 = vector.broadcast %cst_20 : f32 to vector<16x16x8xf32>
    %37 = arith.maximumf %35, %36 : vector<16x16x8xf32>
    %38 = vector.shape_cast %37 : vector<16x16x8xf32> to vector<256x8xf32>
    %39 = arith.truncf %38 : vector<256x8xf32> to vector<256x8xbf16>
    %c0_21 = arith.constant 0 : index
    %c0_22 = arith.constant 0 : index
    %40 = vector.load %arg7[%c0_21, %c0_22] : memref<8x16xf32, #tpu.memory_space<vmem>>, vector<8x16xf32>
    %41 = arith.truncf %40 : vector<8x16xf32> to vector<8x16xbf16>
    %cst_23 = arith.constant dense<0.000000e+00> : vector<256x16xf32>
    %42 = tpu.matmul %39, %41, %cst_23 {dimension_numbers = #tpu.dot_dimension_numbers<[1], [0], [0], [1], [0, 0, 1, 1], [], []>} : vector<256x8xbf16>, vector<8x16xbf16>, vector<256x16xf32> -> vector<256x16xf32>
    %43 = vector.shape_cast %42 : vector<256x16xf32> to vector<16x16x16xf32>
    %c0_24 = arith.constant 0 : index
    %c0_25 = arith.constant 0 : index
    %c0_26 = arith.constant 0 : index
    %44 = vector.load %arg8[%c0_24, %c0_25, %c0_26] : memref<1x1x16xf32, #tpu.memory_space<vmem>>, vector<1x1x16xf32>
    %45 = vector.broadcast %44 : vector<1x1x16xf32> to vector<16x16x16xf32>
    %46 = arith.mulf %43, %45 : vector<16x16x16xf32>
    %c0_27 = arith.constant 0 : index
    %c0_28 = arith.constant 0 : index
    %c0_29 = arith.constant 0 : index
    %47 = vector.load %arg9[%c0_27, %c0_28, %c0_29] : memref<1x1x16xf32, #tpu.memory_space<vmem>>, vector<1x1x16xf32>
    %48 = vector.broadcast %47 : vector<1x1x16xf32> to vector<16x16x16xf32>
    %49 = arith.addf %46, %48 : vector<16x16x16xf32>
    %cst_30 = arith.constant 0.000000e+00 : f32
    %50 = vector.broadcast %cst_30 : f32 to vector<16x16x16xf32>
    %51 = arith.maximumf %49, %50 : vector<16x16x16xf32>
    %cst_31 = arith.constant 0.000000e+00 : f32
    %52 = vector.broadcast %cst_31 : f32 to vector<1x16x16xf32>
    %cst_32 = arith.constant 0.000000e+00 : f32
    %53 = vector.broadcast %cst_32 : f32 to vector<18x1x16xf32>
    %54 = tpu.concatenate %52, %51, %52 in 0 : vector<1x16x16xf32>, vector<16x16x16xf32>, vector<1x16x16xf32> -> vector<18x16x16xf32>
    %55 = tpu.concatenate %53, %54, %53 in 1 : vector<18x1x16xf32>, vector<18x16x16xf32>, vector<18x1x16xf32> -> vector<18x18x16xf32>
    %56 = vector.extract_strided_slice %55 {offsets = [0, 0, 0], sizes = [16, 16, 16], strides = [1, 1, 1]} : vector<18x18x16xf32> to vector<16x16x16xf32>
    %57 = vector.extract_strided_slice %55 {offsets = [0, 1, 0], sizes = [16, 16, 16], strides = [1, 1, 1]} : vector<18x18x16xf32> to vector<16x16x16xf32>
    %58 = vector.extract_strided_slice %55 {offsets = [0, 2, 0], sizes = [16, 16, 16], strides = [1, 1, 1]} : vector<18x18x16xf32> to vector<16x16x16xf32>
    %59 = vector.extract_strided_slice %55 {offsets = [1, 0, 0], sizes = [16, 16, 16], strides = [1, 1, 1]} : vector<18x18x16xf32> to vector<16x16x16xf32>
    %60 = vector.extract_strided_slice %55 {offsets = [1, 1, 0], sizes = [16, 16, 16], strides = [1, 1, 1]} : vector<18x18x16xf32> to vector<16x16x16xf32>
    %61 = vector.extract_strided_slice %55 {offsets = [1, 2, 0], sizes = [16, 16, 16], strides = [1, 1, 1]} : vector<18x18x16xf32> to vector<16x16x16xf32>
    %62 = vector.extract_strided_slice %55 {offsets = [2, 0, 0], sizes = [16, 16, 16], strides = [1, 1, 1]} : vector<18x18x16xf32> to vector<16x16x16xf32>
    %63 = vector.extract_strided_slice %55 {offsets = [2, 1, 0], sizes = [16, 16, 16], strides = [1, 1, 1]} : vector<18x18x16xf32> to vector<16x16x16xf32>
    %64 = vector.extract_strided_slice %55 {offsets = [2, 2, 0], sizes = [16, 16, 16], strides = [1, 1, 1]} : vector<18x18x16xf32> to vector<16x16x16xf32>
    %65 = tpu.concatenate %56, %57, %58, %59, %60, %61, %62, %63, %64 in 2 : vector<16x16x16xf32>, vector<16x16x16xf32>, vector<16x16x16xf32>, vector<16x16x16xf32>, vector<16x16x16xf32>, vector<16x16x16xf32>, vector<16x16x16xf32>, vector<16x16x16xf32>, vector<16x16x16xf32> -> vector<16x16x144xf32>
    %66 = vector.shape_cast %65 : vector<16x16x144xf32> to vector<256x144xf32>
    %67 = arith.truncf %66 : vector<256x144xf32> to vector<256x144xbf16>
    %c0_33 = arith.constant 0 : index
    %c0_34 = arith.constant 0 : index
    %68 = vector.load %arg10[%c0_33, %c0_34] : memref<144x16xf32, #tpu.memory_space<vmem>>, vector<144x16xf32>
    %69 = arith.truncf %68 : vector<144x16xf32> to vector<144x16xbf16>
    %cst_35 = arith.constant dense<0.000000e+00> : vector<256x16xf32>
    %70 = tpu.matmul %67, %69, %cst_35 {dimension_numbers = #tpu.dot_dimension_numbers<[1], [0], [0], [1], [0, 0, 1, 1], [], []>} : vector<256x144xbf16>, vector<144x16xbf16>, vector<256x16xf32> -> vector<256x16xf32>
    %71 = vector.shape_cast %70 : vector<256x16xf32> to vector<16x16x16xf32>
    %c0_36 = arith.constant 0 : index
    %c0_37 = arith.constant 0 : index
    %c0_38 = arith.constant 0 : index
    %72 = vector.load %arg11[%c0_36, %c0_37, %c0_38] : memref<1x1x16xf32, #tpu.memory_space<vmem>>, vector<1x1x16xf32>
    %73 = vector.broadcast %72 : vector<1x1x16xf32> to vector<16x16x16xf32>
    %74 = arith.mulf %71, %73 : vector<16x16x16xf32>
    %c0_39 = arith.constant 0 : index
    %c0_40 = arith.constant 0 : index
    %c0_41 = arith.constant 0 : index
    %75 = vector.load %arg12[%c0_39, %c0_40, %c0_41] : memref<1x1x16xf32, #tpu.memory_space<vmem>>, vector<1x1x16xf32>
    %76 = vector.broadcast %75 : vector<1x1x16xf32> to vector<16x16x16xf32>
    %77 = arith.addf %74, %76 : vector<16x16x16xf32>
    %cst_42 = arith.constant 0.000000e+00 : f32
    %78 = vector.broadcast %cst_42 : f32 to vector<16x16x16xf32>
    %79 = arith.maximumf %77, %78 : vector<16x16x16xf32>
    %cst_43 = arith.constant 0.000000e+00 : f32
    %80 = vector.broadcast %cst_43 : f32 to vector<1x16x16xf32>
    %cst_44 = arith.constant 0.000000e+00 : f32
    %81 = vector.broadcast %cst_44 : f32 to vector<18x1x16xf32>
    %82 = tpu.concatenate %80, %79, %80 in 0 : vector<1x16x16xf32>, vector<16x16x16xf32>, vector<1x16x16xf32> -> vector<18x16x16xf32>
    %83 = tpu.concatenate %81, %82, %81 in 1 : vector<18x1x16xf32>, vector<18x16x16xf32>, vector<18x1x16xf32> -> vector<18x18x16xf32>
    %84 = vector.extract_strided_slice %83 {offsets = [0, 0, 0], sizes = [16, 16, 16], strides = [1, 1, 1]} : vector<18x18x16xf32> to vector<16x16x16xf32>
    %85 = vector.extract_strided_slice %83 {offsets = [0, 1, 0], sizes = [16, 16, 16], strides = [1, 1, 1]} : vector<18x18x16xf32> to vector<16x16x16xf32>
    %86 = vector.extract_strided_slice %83 {offsets = [0, 2, 0], sizes = [16, 16, 16], strides = [1, 1, 1]} : vector<18x18x16xf32> to vector<16x16x16xf32>
    %87 = vector.extract_strided_slice %83 {offsets = [1, 0, 0], sizes = [16, 16, 16], strides = [1, 1, 1]} : vector<18x18x16xf32> to vector<16x16x16xf32>
    %88 = vector.extract_strided_slice %83 {offsets = [1, 1, 0], sizes = [16, 16, 16], strides = [1, 1, 1]} : vector<18x18x16xf32> to vector<16x16x16xf32>
    %89 = vector.extract_strided_slice %83 {offsets = [1, 2, 0], sizes = [16, 16, 16], strides = [1, 1, 1]} : vector<18x18x16xf32> to vector<16x16x16xf32>
    %90 = vector.extract_strided_slice %83 {offsets = [2, 0, 0], sizes = [16, 16, 16], strides = [1, 1, 1]} : vector<18x18x16xf32> to vector<16x16x16xf32>
    %91 = vector.extract_strided_slice %83 {offsets = [2, 1, 0], sizes = [16, 16, 16], strides = [1, 1, 1]} : vector<18x18x16xf32> to vector<16x16x16xf32>
    %92 = vector.extract_strided_slice %83 {offsets = [2, 2, 0], sizes = [16, 16, 16], strides = [1, 1, 1]} : vector<18x18x16xf32> to vector<16x16x16xf32>
    %93 = tpu.concatenate %84, %85, %86, %87, %88, %89, %90, %91, %92 in 2 : vector<16x16x16xf32>, vector<16x16x16xf32>, vector<16x16x16xf32>, vector<16x16x16xf32>, vector<16x16x16xf32>, vector<16x16x16xf32>, vector<16x16x16xf32>, vector<16x16x16xf32>, vector<16x16x16xf32> -> vector<16x16x144xf32>
    %94 = vector.shape_cast %93 : vector<16x16x144xf32> to vector<256x144xf32>
    %95 = arith.truncf %94 : vector<256x144xf32> to vector<256x144xbf16>
    %c0_45 = arith.constant 0 : index
    %c0_46 = arith.constant 0 : index
    %96 = vector.load %arg13[%c0_45, %c0_46] : memref<144x8xf32, #tpu.memory_space<vmem>>, vector<144x8xf32>
    %97 = arith.truncf %96 : vector<144x8xf32> to vector<144x8xbf16>
    %cst_47 = arith.constant dense<0.000000e+00> : vector<256x8xf32>
    %98 = tpu.matmul %95, %97, %cst_47 {dimension_numbers = #tpu.dot_dimension_numbers<[1], [0], [0], [1], [0, 0, 1, 1], [], []>} : vector<256x144xbf16>, vector<144x8xbf16>, vector<256x8xf32> -> vector<256x8xf32>
    %99 = vector.shape_cast %98 : vector<256x8xf32> to vector<16x16x8xf32>
    %100 = vector.shape_cast %1 : vector<16x16x4xf32> to vector<256x4xf32>
    %101 = arith.truncf %100 : vector<256x4xf32> to vector<256x4xbf16>
    %c0_48 = arith.constant 0 : index
    %c0_49 = arith.constant 0 : index
    %102 = vector.load %arg14[%c0_48, %c0_49] : memref<4x8xf32, #tpu.memory_space<vmem>>, vector<4x8xf32>
    %103 = arith.truncf %102 : vector<4x8xf32> to vector<4x8xbf16>
    %cst_50 = arith.constant dense<0.000000e+00> : vector<256x8xf32>
    %104 = tpu.matmul %101, %103, %cst_50 {dimension_numbers = #tpu.dot_dimension_numbers<[1], [0], [0], [1], [0, 0, 1, 1], [], []>} : vector<256x4xbf16>, vector<4x8xbf16>, vector<256x8xf32> -> vector<256x8xf32>
    %105 = vector.shape_cast %104 : vector<256x8xf32> to vector<16x16x8xf32>
    %106 = arith.addf %99, %105 : vector<16x16x8xf32>
    %107 = vector.shape_cast %106 : vector<16x16x8xf32> to vector<16x128xf32>
    %c0_51 = arith.constant 0 : index
    %c0_52 = arith.constant 0 : index
    %c0_53 = arith.constant 0 : index
    %108 = vector.load %arg15[%c0_51, %c0_52, %c0_53] : memref<1x16x128xf32, #tpu.memory_space<vmem>>, vector<1x16x128xf32>
    %109 = vector.shape_cast %108 : vector<1x16x128xf32> to vector<16x128xf32>
    %110 = vector.shape_cast %107 : vector<16x128xf32> to vector<1x16x128xf32>
    tpu.vector_store %arg15[%c0_51, %c0_52, %c0_53], %110 {strides = array<i32>} : memref<1x16x128xf32, #tpu.memory_space<vmem>>, vector<1x16x128xf32>,
    return
  }
  func.func @transform_0(%arg0: i32) -> (i32, i32, i32, i32) {
    %c0_i32 = arith.constant 0 : i32
    %c0_i32_0 = arith.constant 0 : i32
    %c0_i32_1 = arith.constant 0 : i32
    %c0_i32_2 = arith.constant 0 : i32
    return %arg0, %c0_i32, %c0_i32_0, %c0_i32_1 : i32, i32, i32, i32
  }
  func.func @transform_1(%arg0: i32) -> (i32, i32, i32) {
    %c0_i32 = arith.constant 0 : i32
    %c0_i32_0 = arith.constant 0 : i32
    %c0_i32_1 = arith.constant 0 : i32
    %c0_i32_2 = arith.constant 0 : i32
    return %c0_i32, %c0_i32_0, %c0_i32_1 : i32, i32, i32
  }
  func.func @transform_2(%arg0: i32) -> (i32, i32, i32) {
    %c0_i32 = arith.constant 0 : i32
    %c0_i32_0 = arith.constant 0 : i32
    %c0_i32_1 = arith.constant 0 : i32
    %c0_i32_2 = arith.constant 0 : i32
    return %c0_i32, %c0_i32_0, %c0_i32_1 : i32, i32, i32
  }
  func.func @transform_3(%arg0: i32) -> (i32, i32) {
    %c0_i32 = arith.constant 0 : i32
    %c0_i32_0 = arith.constant 0 : i32
    %c0_i32_1 = arith.constant 0 : i32
    return %c0_i32, %c0_i32_0 : i32, i32
  }
  func.func @transform_4(%arg0: i32) -> (i32, i32, i32) {
    %c0_i32 = arith.constant 0 : i32
    %c0_i32_0 = arith.constant 0 : i32
    %c0_i32_1 = arith.constant 0 : i32
    %c0_i32_2 = arith.constant 0 : i32
    return %c0_i32, %c0_i32_0, %c0_i32_1 : i32, i32, i32
  }
  func.func @transform_5(%arg0: i32) -> (i32, i32, i32) {
    %c0_i32 = arith.constant 0 : i32
    %c0_i32_0 = arith.constant 0 : i32
    %c0_i32_1 = arith.constant 0 : i32
    %c0_i32_2 = arith.constant 0 : i32
    return %c0_i32, %c0_i32_0, %c0_i32_1 : i32, i32, i32
  }
  func.func @transform_6(%arg0: i32) -> (i32, i32) {
    %c0_i32 = arith.constant 0 : i32
    %c0_i32_0 = arith.constant 0 : i32
    %c0_i32_1 = arith.constant 0 : i32
    return %c0_i32, %c0_i32_0 : i32, i32
  }
  func.func @transform_7(%arg0: i32) -> (i32, i32, i32) {
    %c0_i32 = arith.constant 0 : i32
    %c0_i32_0 = arith.constant 0 : i32
    %c0_i32_1 = arith.constant 0 : i32
    %c0_i32_2 = arith.constant 0 : i32
    return %c0_i32, %c0_i32_0, %c0_i32_1 : i32, i32, i32
  }
  func.func @transform_8(%arg0: i32) -> (i32, i32, i32) {
    %c0_i32 = arith.constant 0 : i32
    %c0_i32_0 = arith.constant 0 : i32
    %c0_i32_1 = arith.constant 0 : i32
    %c0_i32_2 = arith.constant 0 : i32
    return %c0_i32, %c0_i32_0, %c0_i32_1 : i32, i32, i32
  }
  func.func @transform_9(%arg0: i32) -> (i32, i32) {
    %c0_i32 = arith.constant 0 : i32
    %c0_i32_0 = arith.constant 0 : i32
    %c0_i32_1 = arith.constant 0 : i32
    return %c0_i32, %c0_i32_0 : i32, i32
  }
  func.func @transform_10(%arg0: i32) -> (i32, i32, i32) {
    %c0_i32 = arith.constant 0 : i32
    %c0_i32_0 = arith.constant 0 : i32
    %c0_i32_1 = arith.constant 0 : i32
    %c0_i32_2 = arith.constant 0 : i32
    return %c0_i32, %c0_i32_0, %c0_i32_1 : i32, i32, i32
  }
  func.func @transform_11(%arg0: i32) -> (i32, i32, i32) {
    %c0_i32 = arith.constant 0 : i32
    %c0_i32_0 = arith.constant 0 : i32
    %c0_i32_1 = arith.constant 0 : i32
    %c0_i32_2 = arith.constant 0 : i32
    return %c0_i32, %c0_i32_0, %c0_i32_1 : i32, i32, i32
  }
  func.func @transform_12(%arg0: i32) -> (i32, i32) {
    %c0_i32 = arith.constant 0 : i32
    %c0_i32_0 = arith.constant 0 : i32
    %c0_i32_1 = arith.constant 0 : i32
    return %c0_i32, %c0_i32_0 : i32, i32
  }
  func.func @transform_13(%arg0: i32) -> (i32, i32) {
    %c0_i32 = arith.constant 0 : i32
    %c0_i32_0 = arith.constant 0 : i32
    %c0_i32_1 = arith.constant 0 : i32
    return %c0_i32, %c0_i32_0 : i32, i32
  }
  func.func @transform_14(%arg0: i32) -> (i32, i32, i32) {
    %c0_i32 = arith.constant 0 : i32
    %c0_i32_0 = arith.constant 0 : i32
    %c0_i32_1 = arith.constant 0 : i32
    return %arg0, %c0_i32, %c0_i32_0 : i32, i32, i32
  }
}

</mosaic_0001>

<llo_original>
// kernel: tpu_custom_call.1
$region0: #{tpu_custom_call.1}
  #allocation0 [shape = 'u32[]', space=smem, size = 0x4, offset = 0x4, fixed_abs, tag = 'smem constant byte address 0x4 - core index']
  #allocation1 [shape = 'u32[144,128]{1,0:T(1,128)}', space=vmem, size = 0x12000, scoped, tag = 'internal scratch']
  %s0 = inlined_call_operand.vmem [shape: f32[2,16,16,4], index: 0, kind: input, shape index: {}]
  %s1 = inlined_call_operand.vmem [shape: f32[1,1,4], index: 1, kind: input, shape index: {}]
  %s2 = inlined_call_operand.vmem [shape: f32[1,1,4], index: 2, kind: input, shape index: {}]
  %s3 = inlined_call_operand.vmem [shape: f32[36,8], index: 3, kind: input, shape index: {}]
  %s4 = inlined_call_operand.vmem [shape: f32[1,1,8], index: 4, kind: input, shape index: {}]
  %s5 = inlined_call_operand.vmem [shape: f32[1,1,8], index: 5, kind: input, shape index: {}]
  %s6 = inlined_call_operand.vmem [shape: f32[8,16], index: 6, kind: input, shape index: {}]
  %s7 = inlined_call_operand.vmem [shape: f32[1,1,16], index: 7, kind: input, shape index: {}]
  %s8 = inlined_call_operand.vmem [shape: f32[1,1,16], index: 8, kind: input, shape index: {}]
  %s9 = inlined_call_operand.vmem [shape: f32[144,16], index: 9, kind: input, shape index: {}]
  %s10 = inlined_call_operand.vmem [shape: f32[1,1,16], index: 10, kind: input, shape index: {}]
  %s11 = inlined_call_operand.vmem [shape: f32[1,1,16], index: 11, kind: input, shape index: {}]
  %s12 = inlined_call_operand.vmem [shape: f32[144,8], index: 12, kind: input, shape index: {}]
  %s13 = inlined_call_operand.vmem [shape: f32[4,8], index: 13, kind: input, shape index: {}]
  %s14 = inlined_call_operand.hbm [shape: f32[2,16,128], index: 14, kind: output, shape index: {}]
  %s15 = sld [smem:[#allocation0]]
  $region89: #{tpu_custom_call.1} parent=0
    _
  %s17 = ssub.s32 1, %s15
  %s18 = scalar_select 0, %s17, %s15
  $region1: #{tpu_custom_call.1} parent=0
    #allocation2 [shape = 'u8[16384]{0}', space=vmem, size = 0x4000, scoped, tag = 'output window, operand 0']
    #allocation3 [shape = 's32[2]{0}', space=sflag, size = 0x8, scoped, tag = 'scoped memory for tpu_custom_call.1']
    %19 = vsyncpa [#allocation3], 0
    %s20 = scalar_lea.sflag [#allocation3], 1
    %21 = vsyncpa %s20, 0
    loop: start=0, step=1, limit=4
    $region2: #{tpu_custom_call.1} parent=1 // loop_pre_header
      _
    $region3: #{tpu_custom_call.1} parent=1 // loop_header
      %s23 = sphi 0, %s27
      %p24 = scmp.ge.s32.totalorder %s23, 4
      %s33 = sphi 0, %s35
      %s36 = sphi 0, %s33
      %s37 = sphi 0, %s36
      %s53 = sphi 0, %s37
      %s57 = sphi 0, %s57
      %s59 = sphi 0, %s57
      %s60 = sphi 0, %s59
      %s74 = sphi 0, %s60
      %s78 = sphi 0, %s78
      %s80 = sphi 0, %s78
      %s81 = sphi 0, %s80
      %s95 = sphi 0, %s81
      %s99 = sphi 0, %s99
      %s101 = sphi 0, %s99
      %s102 = sphi 0, %s101
      %s116 = sphi 0, %s102
      %s120 = sphi 0, %s120
      %s122 = sphi 0, %s120
      %s123 = sphi 0, %s122
      %s137 = sphi 0, %s123
      %s141 = sphi 0, %s141
      %s143 = sphi 0, %s141
      %s144 = sphi 0, %s143
      %s158 = sphi 0, %s144
      %s162 = sphi 0, %s162
      %s164 = sphi 0, %s162
      %s165 = sphi 0, %s164
      %s179 = sphi 0, %s165
      %s183 = sphi 0, %s183
      %s185 = sphi 0, %s183
      %s186 = sphi 0, %s185
      %s200 = sphi 0, %s186
      %s204 = sphi 0, %s204
      %s206 = sphi 0, %s204
      %s207 = sphi 0, %s206
      %s221 = sphi 0, %s207
      %s225 = sphi 0, %s225
      %s227 = sphi 0, %s225
      %s228 = sphi 0, %s227
      %s242 = sphi 0, %s228
      %s246 = sphi 0, %s246
      %s248 = sphi 0, %s246
      %s249 = sphi 0, %s248
      %s263 = sphi 0, %s249
      %s267 = sphi 0, %s267
      %s269 = sphi 0, %s267
      %s270 = sphi 0, %s269
      %s284 = sphi 0, %s270
      %s288 = sphi 0, %s288
      %s290 = sphi 0, %s288
      %s291 = sphi 0, %s290
      %s305 = sphi 0, %s291
      %s309 = sphi 0, %s309
      %s311 = sphi 0, %s309
      %s312 = sphi 0, %s311
      %s326 = sphi 0, %s312
      %s332 = sphi 0, %s334
      %s335 = sphi 0, %s332
      %s336 = sphi 0, %s335
      %s352 = sphi 0, %s336
    $region4: #{tpu_custom_call.1} parent=1 // loop_header_branch
      %26 = sbr.rel (%p24) target = $region8
    $region5: #{tpu_custom_call.1} parent=1 // loop_body
      %s28 = ssub.s32 %s23, 1
      %s29 = ssub.s32 %s23, 2
      %s30 = sadd.s32 %s23, 1
      %s31 = ssub.s32 %s23, %s30
      %p32 = scmp.eq.s32.totalorder %s31, 0
      %s34 = sadd.s32 %s33, 1
      %s35 = scalar_select %p32, %s33, %s34
      %p38 = pneg %p32
      %p39 = scmp.eq.s32.totalorder %s23, 1
      %p40 = por %p38, %p39
      %p41 = scmp.ne.s32.totalorder %s33, %s36
      %p42 = scmp.eq.s32.totalorder %s23, 0
      %p43 = por %p41, %p42
      %p44 = scmp.ne.s32.totalorder %s33, %s36
      %p45 = scmp.eq.s32.totalorder %s28, 1
      %p46 = por %p44, %p45
      %p47 = scmp.ne.s32.totalorder %s36, %s37
      %p48 = scmp.eq.s32.totalorder %s28, 0
      %p49 = por %p47, %p48
      %p50 = scmp.ne.s32.totalorder %s36, %s37
      %p51 = scmp.eq.s32.totalorder %s29, 1
      %p52 = por %p50, %p51
      %p54 = scmp.ne.s32.totalorder %s37, %s53
      %p55 = scmp.eq.s32.totalorder %s29, 0
      %p56 = por %p54, %p55
      %s58 = sadd.s32 %s57, 1
      %p61 = scmp.eq.s32.totalorder %s23, 1
      %p62 = scmp.ne.s32.totalorder %s57, %s59
      %p63 = scmp.eq.s32.totalorder %s23, 0
      %p64 = por %p62, %p63
      %p65 = scmp.ne.s32.totalorder %s57, %s59
      %p66 = scmp.eq.s32.totalorder %s28, 1
      %p67 = por %p65, %p66
      %p68 = scmp.ne.s32.totalorder %s59, %s60
      %p69 = scmp.eq.s32.totalorder %s28, 0
      %p70 = por %p68, %p69
      %p71 = scmp.ne.s32.totalorder %s59, %s60
      %p72 = scmp.eq.s32.totalorder %s29, 1
      %p73 = por %p71, %p72
      %p75 = scmp.ne.s32.totalorder %s60, %s74
      %p76 = scmp.eq.s32.totalorder %s29, 0
      %p77 = por %p75, %p76
      %s79 = sadd.s32 %s78, 1
      %p82 = scmp.eq.s32.totalorder %s23, 1
      %p83 = scmp.ne.s32.totalorder %s78, %s80
      %p84 = scmp.eq.s32.totalorder %s23, 0
      %p85 = por %p83, %p84
      %p86 = scmp.ne.s32.totalorder %s78, %s80
      %p87 = scmp.eq.s32.totalorder %s28, 1
      %p88 = por %p86, %p87
      %p89 = scmp.ne.s32.totalorder %s80, %s81
      %p90 = scmp.eq.s32.totalorder %s28, 0
      %p91 = por %p89, %p90
      %p92 = scmp.ne.s32.totalorder %s80, %s81
      %p93 = scmp.eq.s32.totalorder %s29, 1
      %p94 = por %p92, %p93
      %p96 = scmp.ne.s32.totalorder %s81, %s95
      %p97 = scmp.eq.s32.totalorder %s29, 0
      %p98 = por %p96, %p97
      %s100 = sadd.s32 %s99, 1
      %p103 = scmp.eq.s32.totalorder %s23, 1
      %p104 = scmp.ne.s32.totalorder %s99, %s101
      %p105 = scmp.eq.s32.totalorder %s23, 0
      %p106 = por %p104, %p105
      %p107 = scmp.ne.s32.totalorder %s99, %s101
      %p108 = scmp.eq.s32.totalorder %s28, 1
      %p109 = por %p107, %p108
      %p110 = scmp.ne.s32.totalorder %s101, %s102
      %p111 = scmp.eq.s32.totalorder %s28, 0
      %p112 = por %p110, %p111
      %p113 = scmp.ne.s32.totalorder %s101, %s102
      %p114 = scmp.eq.s32.totalorder %s29, 1
      %p115 = por %p113, %p114
      %p117 = scmp.ne.s32.totalorder %s102, %s116
      %p118 = scmp.eq.s32.totalorder %s29, 0
      %p119 = por %p117, %p118
      %s121 = sadd.s32 %s120, 1
      %p124 = scmp.eq.s32.totalorder %s23, 1
      %p125 = scmp.ne.s32.totalorder %s120, %s122
      %p126 = scmp.eq.s32.totalorder %s23, 0
      %p127 = por %p125, %p126
      %p128 = scmp.ne.s32.totalorder %s120, %s122
      %p129 = scmp.eq.s32.totalorder %s28, 1
      %p130 = por %p128, %p129
      %p131 = scmp.ne.s32.totalorder %s122, %s123
      %p132 = scmp.eq.s32.totalorder %s28, 0
      %p133 = por %p131, %p132
      %p134 = scmp.ne.s32.totalorder %s122, %s123
      %p135 = scmp.eq.s32.totalorder %s29, 1
      %p136 = por %p134, %p135
      %p138 = scmp.ne.s32.totalorder %s123, %s137
      %p139 = scmp.eq.s32.totalorder %s29, 0
      %p140 = por %p138, %p139
      %s142 = sadd.s32 %s141, 1
      %p145 = scmp.eq.s32.totalorder %s23, 1
      %p146 = scmp.ne.s32.totalorder %s141, %s143
      %p147 = scmp.eq.s32.totalorder %s23, 0
      %p148 = por %p146, %p147
      %p149 = scmp.ne.s32.totalorder %s141, %s143
      %p150 = scmp.eq.s32.totalorder %s28, 1
      %p151 = por %p149, %p150
      %p152 = scmp.ne.s32.totalorder %s143, %s144
      %p153 = scmp.eq.s32.totalorder %s28, 0
      %p154 = por %p152, %p153
      %p155 = scmp.ne.s32.totalorder %s143, %s144
      %p156 = scmp.eq.s32.totalorder %s29, 1
      %p157 = por %p155, %p156
      %p159 = scmp.ne.s32.totalorder %s144, %s158
      %p160 = scmp.eq.s32.totalorder %s29, 0
      %p161 = por %p159, %p160
      %s163 = sadd.s32 %s162, 1
      %p166 = scmp.eq.s32.totalorder %s23, 1
      %p167 = scmp.ne.s32.totalorder %s162, %s164
      %p168 = scmp.eq.s32.totalorder %s23, 0
      %p169 = por %p167, %p168
      %p170 = scmp.ne.s32.totalorder %s162, %s164
      %p171 = scmp.eq.s32.totalorder %s28, 1
      %p172 = por %p170, %p171
      %p173 = scmp.ne.s32.totalorder %s164, %s165
      %p174 = scmp.eq.s32.totalorder %s28, 0
      %p175 = por %p173, %p174
      %p176 = scmp.ne.s32.totalorder %s164, %s165
      %p177 = scmp.eq.s32.totalorder %s29, 1
      %p178 = por %p176, %p177
      %p180 = scmp.ne.s32.totalorder %s165, %s179
      %p181 = scmp.eq.s32.totalorder %s29, 0
      %p182 = por %p180, %p181
      %s184 = sadd.s32 %s183, 1
      %p187 = scmp.eq.s32.totalorder %s23, 1
      %p188 = scmp.ne.s32.totalorder %s183, %s185
      %p189 = scmp.eq.s32.totalorder %s23, 0
      %p190 = por %p188, %p189
      %p191 = scmp.ne.s32.totalorder %s183, %s185
      %p192 = scmp.eq.s32.totalorder %s28, 1
      %p193 = por %p191, %p192
      %p194 = scmp.ne.s32.totalorder %s185, %s186
      %p195 = scmp.eq.s32.totalorder %s28, 0
      %p196 = por %p194, %p195
      %p197 = scmp.ne.s32.totalorder %s185, %s186
      %p198 = scmp.eq.s32.totalorder %s29, 1
      %p199 = por %p197, %p198
      %p201 = scmp.ne.s32.totalorder %s186, %s200
      %p202 = scmp.eq.s32.totalorder %s29, 0
      %p203 = por %p201, %p202
      %s205 = sadd.s32 %s204, 1
      %p208 = scmp.eq.s32.totalorder %s23, 1
      %p209 = scmp.ne.s32.totalorder %s204, %s206
      %p210 = scmp.eq.s32.totalorder %s23, 0
      %p211 = por %p209, %p210
      %p212 = scmp.ne.s32.totalorder %s204, %s206
      %p213 = scmp.eq.s32.totalorder %s28, 1
      %p214 = por %p212, %p213
      %p215 = scmp.ne.s32.totalorder %s206, %s207
      %p216 = scmp.eq.s32.totalorder %s28, 0
      %p217 = por %p215, %p216
      %p218 = scmp.ne.s32.totalorder %s206, %s207
      %p219 = scmp.eq.s32.totalorder %s29, 1
      %p220 = por %p218, %p219
      %p222 = scmp.ne.s32.totalorder %s207, %s221
      %p223 = scmp.eq.s32.totalorder %s29, 0
      %p224 = por %p222, %p223
      %s226 = sadd.s32 %s225, 1
      %p229 = scmp.eq.s32.totalorder %s23, 1
      %p230 = scmp.ne.s32.totalorder %s225, %s227
      %p231 = scmp.eq.s32.totalorder %s23, 0
      %p232 = por %p230, %p231
      %p233 = scmp.ne.s32.totalorder %s225, %s227
      %p234 = scmp.eq.s32.totalorder %s28, 1
      %p235 = por %p233, %p234
      %p236 = scmp.ne.s32.totalorder %s227, %s228
      %p237 = scmp.eq.s32.totalorder %s28, 0
      %p238 = por %p236, %p237
      %p239 = scmp.ne.s32.totalorder %s227, %s228
      %p240 = scmp.eq.s32.totalorder %s29, 1
      %p241 = por %p239, %p240
      %p243 = scmp.ne.s32.totalorder %s228, %s242
      %p244 = scmp.eq.s32.totalorder %s29, 0
      %p245 = por %p243, %p244
      %s247 = sadd.s32 %s246, 1
      %p250 = scmp.eq.s32.totalorder %s23, 1
      %p251 = scmp.ne.s32.totalorder %s246, %s248
      %p252 = scmp.eq.s32.totalorder %s23, 0
      %p253 = por %p251, %p252
      %p254 = scmp.ne.s32.totalorder %s246, %s248
      %p255 = scmp.eq.s32.totalorder %s28, 1
      %p256 = por %p254, %p255
      %p257 = scmp.ne.s32.totalorder %s248, %s249
      %p258 = scmp.eq.s32.totalorder %s28, 0
      %p259 = por %p257, %p258
      %p260 = scmp.ne.s32.totalorder %s248, %s249
      %p261 = scmp.eq.s32.totalorder %s29, 1
      %p262 = por %p260, %p261
      %p264 = scmp.ne.s32.totalorder %s249, %s263
      %p265 = scmp.eq.s32.totalorder %s29, 0
      %p266 = por %p264, %p265
      %s268 = sadd.s32 %s267, 1
      %p271 = scmp.eq.s32.totalorder %s23, 1
      %p272 = scmp.ne.s32.totalorder %s267, %s269
      %p273 = scmp.eq.s32.totalorder %s23, 0
      %p274 = por %p272, %p273
      %p275 = scmp.ne.s32.totalorder %s267, %s269
      %p276 = scmp.eq.s32.totalorder %s28, 1
      %p277 = por %p275, %p276
      %p278 = scmp.ne.s32.totalorder %s269, %s270
      %p279 = scmp.eq.s32.totalorder %s28, 0
      %p280 = por %p278, %p279
      %p281 = scmp.ne.s32.totalorder %s269, %s270
      %p282 = scmp.eq.s32.totalorder %s29, 1
      %p283 = por %p281, %p282
      %p285 = scmp.ne.s32.totalorder %s270, %s284
      %p286 = scmp.eq.s32.totalorder %s29, 0
      %p287 = por %p285, %p286
      %s289 = sadd.s32 %s288, 1
      %p292 = scmp.eq.s32.totalorder %s23, 1
      %p293 = scmp.ne.s32.totalorder %s288, %s290
      %p294 = scmp.eq.s32.totalorder %s23, 0
      %p295 = por %p293, %p294
      %p296 = scmp.ne.s32.totalorder %s288, %s290
      %p297 = scmp.eq.s32.totalorder %s28, 1
      %p298 = por %p296, %p297
      %p299 = scmp.ne.s32.totalorder %s290, %s291
      %p300 = scmp.eq.s32.totalorder %s28, 0
      %p301 = por %p299, %p300
      %p302 = scmp.ne.s32.totalorder %s290, %s291
      %p303 = scmp.eq.s32.totalorder %s29, 1
      %p304 = por %p302, %p303
      %p306 = scmp.ne.s32.totalorder %s291, %s305
      %p307 = scmp.eq.s32.totalorder %s29, 0
      %p308 = por %p306, %p307
      %s310 = sadd.s32 %s309, 1
      %p313 = scmp.eq.s32.totalorder %s23, 1
      %p314 = scmp.ne.s32.totalorder %s309, %s311
      %p315 = scmp.eq.s32.totalorder %s23, 0
      %p316 = por %p314, %p315
      %p317 = scmp.ne.s32.totalorder %s309, %s311
      %p318 = scmp.eq.s32.totalorder %s28, 1
      %p319 = por %p317, %p318
      %p320 = scmp.ne.s32.totalorder %s311, %s312
      %p321 = scmp.eq.s32.totalorder %s28, 0
      %p322 = por %p320, %p321
      %p323 = scmp.ne.s32.totalorder %s311, %s312
      %p324 = scmp.eq.s32.totalorder %s29, 1
      %p325 = por %p323, %p324
      %p327 = scmp.ne.s32.totalorder %s312, %s326
      %p328 = scmp.eq.s32.totalorder %s29, 0
      %p329 = por %p327, %p328
      %s330 = ssub.s32 %s23, %s30
      %p331 = scmp.eq.s32.totalorder %s330, 0
      %s333 = sadd.s32 %s332, 1
      %s334 = scalar_select %p331, %s332, %s333
      %p337 = pneg %p331
      %p338 = scmp.eq.s32.totalorder %s23, 1
      %p339 = por %p337, %p338
      %p340 = scmp.ne.s32.totalorder %s332, %s335
      %p341 = scmp.eq.s32.totalorder %s23, 0
      %p342 = por %p340, %p341
      %p343 = scmp.ne.s32.totalorder %s332, %s335
      %p344 = scmp.eq.s32.totalorder %s28, 1
      %p345 = por %p343, %p344
      %p346 = scmp.ne.s32.totalorder %s335, %s336
      %p347 = scmp.eq.s32.totalorder %s28, 0
      %p348 = por %p346, %p347
      %p349 = scmp.ne.s32.totalorder %s335, %s336
      %p350 = scmp.eq.s32.totalorder %s29, 1
      %p351 = por %p349, %p350
      %p353 = scmp.ne.s32.totalorder %s336, %s352
      %p354 = scmp.eq.s32.totalorder %s29, 0
      %p355 = por %p353, %p354
      %p356 = scmp.le.s32.totalorder 1, %s23
      %p357 = scmp.lt.s32.totalorder %s23, 3
      %p358 = pnand %p356, %p357
      %p359 = pneg %p358
      // Predicated region
      $region9: #{tpu_custom_call.1} parent=5 // pred_check
        _
      $region10: #{tpu_custom_call.1} parent=5 // pred_check_branch
        %361 = sbr.rel (%p358) target = $region12
      $region11: #{tpu_custom_call.1} parent=5 // pred_region
        %s362 = ssub.s32 %s23, 1
        // Predicated region
        $region13: #{tpu_custom_call.1} parent=11 // pred_check
          %p363 = pneg %p70
        $region14: #{tpu_custom_call.1} parent=11 // pred_check_branch
          %365 = sbr.rel (%p363) target = $region16
        $region15: #{tpu_custom_call.1} parent=11 // pred_region
          _
        $region16: #{tpu_custom_call.1} parent=11 // pred_fallthru
          _
        // Predicated region
        $region17: #{tpu_custom_call.1} parent=11 // pred_check
          %p366 = pneg %p91
        $region18: #{tpu_custom_call.1} parent=11 // pred_check_branch
          %368 = sbr.rel (%p366) target = $region20
        $region19: #{tpu_custom_call.1} parent=11 // pred_region
          _
        $region20: #{tpu_custom_call.1} parent=11 // pred_fallthru
          _
        // Predicated region
        $region21: #{tpu_custom_call.1} parent=11 // pred_check
          %p369 = pneg %p112
        $region22: #{tpu_custom_call.1} parent=11 // pred_check_branch
          %371 = sbr.rel (%p369) target = $region24
        $region23: #{tpu_custom_call.1} parent=11 // pred_region
          _
        $region24: #{tpu_custom_call.1} parent=11 // pred_fallthru
          _
        // Predicated region
        $region25: #{tpu_custom_call.1} parent=11 // pred_check
          %p372 = pneg %p133
        $region26: #{tpu_custom_call.1} parent=11 // pred_check_branch
          %374 = sbr.rel (%p372) target = $region28
        $region27: #{tpu_custom_call.1} parent=11 // pred_region
          _
        $region28: #{tpu_custom_call.1} parent=11 // pred_fallthru
          _
        // Predicated region
        $region29: #{tpu_custom_call.1} parent=11 // pred_check
          %p375 = pneg %p154
        $region30: #{tpu_custom_call.1} parent=11 // pred_check_branch
          %377 = sbr.rel (%p375) target = $region32
        $region31: #{tpu_custom_call.1} parent=11 // pred_region
          _
        $region32: #{tpu_custom_call.1} parent=11 // pred_fallthru
          _
        // Predicated region
        $region33: #{tpu_custom_call.1} parent=11 // pred_check
          %p378 = pneg %p175
        $region34: #{tpu_custom_call.1} parent=11 // pred_check_branch
          %380 = sbr.rel (%p378) target = $region36
        $region35: #{tpu_custom_call.1} parent=11 // pred_region
          _
        $region36: #{tpu_custom_call.1} parent=11 // pred_fallthru
          _
        // Predicated region
        $region37: #{tpu_custom_call.1} parent=11 // pred_check
          %p381 = pneg %p196
        $region38: #{tpu_custom_call.1} parent=11 // pred_check_branch
          %383 = sbr.rel (%p381) target = $region40
        $region39: #{tpu_custom_call.1} parent=11 // pred_region
          _
        $region40: #{tpu_custom_call.1} parent=11 // pred_fallthru
          _
        // Predicated region
        $region41: #{tpu_custom_call.1} parent=11 // pred_check
          %p384 = pneg %p217
        $region42: #{tpu_custom_call.1} parent=11 // pred_check_branch
          %386 = sbr.rel (%p384) target = $region44
        $region43: #{tpu_custom_call.1} parent=11 // pred_region
          _
        $region44: #{tpu_custom_call.1} parent=11 // pred_fallthru
          _
        // Predicated region
        $region45: #{tpu_custom_call.1} parent=11 // pred_check
          %p387 = pneg %p238
        $region46: #{tpu_custom_call.1} parent=11 // pred_check_branch
          %389 = sbr.rel (%p387) target = $region48
        $region47: #{tpu_custom_call.1} parent=11 // pred_region
          _
        $region48: #{tpu_custom_call.1} parent=11 // pred_fallthru
          _
        // Predicated region
        $region49: #{tpu_custom_call.1} parent=11 // pred_check
          %p390 = pneg %p259
        $region50: #{tpu_custom_call.1} parent=11 // pred_check_branch
          %392 = sbr.rel (%p390) target = $region52
        $region51: #{tpu_custom_call.1} parent=11 // pred_region
          _
        $region52: #{tpu_custom_call.1} parent=11 // pred_fallthru
          _
        // Predicated region
        $region53: #{tpu_custom_call.1} parent=11 // pred_check
          %p393 = pneg %p280
        $region54: #{tpu_custom_call.1} parent=11 // pred_check_branch
          %395 = sbr.rel (%p393) target = $region56
        $region55: #{tpu_custom_call.1} parent=11 // pred_region
          _
        $region56: #{tpu_custom_call.1} parent=11 // pred_fallthru
          _
        // Predicated region
        $region57: #{tpu_custom_call.1} parent=11 // pred_check
          %p396 = pneg %p301
        $region58: #{tpu_custom_call.1} parent=11 // pred_check_branch
          %398 = sbr.rel (%p396) target = $region60
        $region59: #{tpu_custom_call.1} parent=11 // pred_region
          _
        $region60: #{tpu_custom_call.1} parent=11 // pred_fallthru
          _
        // Predicated region
        $region61: #{tpu_custom_call.1} parent=11 // pred_check
          %p399 = pneg %p322
        $region62: #{tpu_custom_call.1} parent=11 // pred_check_branch
          %401 = sbr.rel (%p399) target = $region64
        $region63: #{tpu_custom_call.1} parent=11 // pred_region
          _
        $region64: #{tpu_custom_call.1} parent=11 // pred_fallthru
          _
      $region12: #{tpu_custom_call.1} parent=5 // pred_fallthru
        _
      %p402 = scmp.lt.s32.totalorder %s23, 2
      // Predicated region
      $region65: #{tpu_custom_call.1} parent=5 // pred_check
        %p403 = pneg %p402
      $region66: #{tpu_custom_call.1} parent=5 // pred_check_branch
        %405 = sbr.rel (%p403) target = $region68
      $region67: #{tpu_custom_call.1} parent=5 // pred_region
        // Predicated region
        $region69: #{tpu_custom_call.1} parent=67 // pred_check
          %p406 = pneg %p43
        $region70: #{tpu_custom_call.1} parent=67 // pred_check_branch
          %408 = sbr.rel (%p406) target = $region72
        $region71: #{tpu_custom_call.1} parent=67 // pred_region
          %p409 = scmp.lt.s32.totalorder %s23, 1
          %s410 = scalar_select %p409, %s23, 1
          %s411 = smul.addr %s410, 32
          %s412 = smul.addr %s411, 8
          %s413 = scalar_lea.vmem %s0, %s412
        $region72: #{tpu_custom_call.1} parent=67 // pred_fallthru
          _
      $region68: #{tpu_custom_call.1} parent=5 // pred_fallthru
        _
      %p414 = scmp.le.s32.totalorder 1, %s23
      %p415 = scmp.lt.s32.totalorder %s23, 3
      %p416 = pnand %p414, %p415
      %p417 = pneg %p416
      // Predicated region
      $region73: #{tpu_custom_call.1} parent=5 // pred_check
        _
      $region74: #{tpu_custom_call.1} parent=5 // pred_check_branch
        %419 = sbr.rel (%p416) target = $region76
      $region75: #{tpu_custom_call.1} parent=5 // pred_region
        %s420 = ssub.s32 %s23, 1
        %p421 = scmp.lt.s32.totalorder %s28, 1
        %s422 = scalar_select %p421, %s28, 1
        %s423 = smul.addr %s422, 32
        %s424 = smul.addr %s423, 8
        %s425 = scalar_lea.vmem %s0, %s424
        %p426 = pneg %p49
        %p427 = pneg %p46
        %p428 = pneg %p70
        %p429 = pneg %p67
        %p430 = pneg %p91
        %p431 = pneg %p88
        %p432 = pneg %p112
        %p433 = pneg %p109
        %p434 = pneg %p133
        %p435 = pneg %p130
        %p436 = pneg %p154
        %p437 = pneg %p151
        %p438 = pneg %p175
        %p439 = pneg %p172
        %p440 = pneg %p196
        %p441 = pneg %p193
        %p442 = pneg %p217
        %p443 = pneg %p214
        %p444 = pneg %p238
        %p445 = pneg %p235
        %p446 = pneg %p259
        %p447 = pneg %p256
        %p448 = pneg %p280
        %p449 = pneg %p277
        %p450 = pneg %p301
        %p451 = pneg %p298
        %p452 = pneg %p322
        %p453 = pneg %p319
        %p454 = pneg %p348
        %p455 = pneg %p345
        %s456 = sand.u32 %s335, 1
        %s457 = scalar_lea.sflag [#allocation3], %s456
        %s458 = sand.u32 %s335, 1
        %s459 = smul.addr %s458, 16
        %s460 = scalar_lea.vmem [#allocation2], %s459
        %p461 = scmp.lt.s32.totalorder %s28, 1
        %s462 = scalar_select %p461, %s28, 1
        %s463 = smul.addr %s462, 32
        %s464 = smul.addr %s463, 8
        %s465 = scalar_lea.vmem %s0, %s464
        %v467 = vld [vmem:[%s465] sm:$0xff]
        %v468 = vld [vmem:[%s465 + $0x8] sm:$0xff]
        %v469 = vld [vmem:[%s465 + $0x10] sm:$0xff]
        %v470 = vld [vmem:[%s465 + $0x18] sm:$0xff]
        %v471 = vld [vmem:[%s465 + $0x20] sm:$0xff]
        %v472 = vld [vmem:[%s465 + $0x28] sm:$0xff]
        %v473 = vld [vmem:[%s465 + $0x30] sm:$0xff]
        %v474 = vld [vmem:[%s465 + $0x38] sm:$0xff]
        %v475 = vld [vmem:[%s465 + $0x40] sm:$0xff]
        %v476 = vld [vmem:[%s465 + $0x48] sm:$0xff]
        %v477 = vld [vmem:[%s465 + $0x50] sm:$0xff]
        %v478 = vld [vmem:[%s465 + $0x58] sm:$0xff]
        %v479 = vld [vmem:[%s465 + $0x60] sm:$0xff]
        %v480 = vld [vmem:[%s465 + $0x68] sm:$0xff]
        %v481 = vld [vmem:[%s465 + $0x70] sm:$0xff]
        %v482 = vld [vmem:[%s465 + $0x78] sm:$0xff]
        %v483 = vld [vmem:[%s465 + $0x80] sm:$0xff]
        %v484 = vld [vmem:[%s465 + $0x88] sm:$0xff]
        %v485 = vld [vmem:[%s465 + $0x90] sm:$0xff]
        %v486 = vld [vmem:[%s465 + $0x98] sm:$0xff]
        %v487 = vld [vmem:[%s465 + $0xa0] sm:$0xff]
        %v488 = vld [vmem:[%s465 + $0xa8] sm:$0xff]
        %v489 = vld [vmem:[%s465 + $0xb0] sm:$0xff]
        %v490 = vld [vmem:[%s465 + $0xb8] sm:$0xff]
        %v491 = vld [vmem:[%s465 + $0xc0] sm:$0xff]
        %v492 = vld [vmem:[%s465 + $0xc8] sm:$0xff]
        %v493 = vld [vmem:[%s465 + $0xd0] sm:$0xff]
        %v494 = vld [vmem:[%s465 + $0xd8] sm:$0xff]
        %v495 = vld [vmem:[%s465 + $0xe0] sm:$0xff]
        %v496 = vld [vmem:[%s465 + $0xe8] sm:$0xff]
        %v497 = vld [vmem:[%s465 + $0xf0] sm:$0xff]
        %v498 = vld [vmem:[%s465 + $0xf8] sm:$0xff]
        %v499 = vld [vmem:[%s1] sm:$0x1]
        %v501 = vlaneseq
        %v502 = vshrl.u32 %v501, 7
        %v503 = vsub.s32 0, %v502
        %v504 = vrot.slane %v499, %v503
        %v506 = vmul.f32 %v467, %v504
        %v507 = vmul.f32 %v468, %v504
        %v508 = vmul.f32 %v469, %v504
        %v509 = vmul.f32 %v470, %v504
        %v510 = vmul.f32 %v471, %v504
        %v511 = vmul.f32 %v472, %v504
        %v512 = vmul.f32 %v473, %v504
        %v513 = vmul.f32 %v474, %v504
        %v514 = vmul.f32 %v475, %v504
        %v515 = vmul.f32 %v476, %v504
        %v516 = vmul.f32 %v477, %v504
        %v517 = vmul.f32 %v478, %v504
        %v518 = vmul.f32 %v479, %v504
        %v519 = vmul.f32 %v480, %v504
        %v520 = vmul.f32 %v481, %v504
        %v521 = vmul.f32 %v482, %v504
        %v522 = vmul.f32 %v483, %v504
        %v523 = vmul.f32 %v484, %v504
        %v524 = vmul.f32 %v485, %v504
        %v525 = vmul.f32 %v486, %v504
        %v526 = vmul.f32 %v487, %v504
        %v527 = vmul.f32 %v488, %v504
        %v528 = vmul.f32 %v489, %v504
        %v529 = vmul.f32 %v490, %v504
        %v530 = vmul.f32 %v491, %v504
        %v531 = vmul.f32 %v492, %v504
        %v532 = vmul.f32 %v493, %v504
        %v533 = vmul.f32 %v494, %v504
        %v534 = vmul.f32 %v495, %v504
        %v535 = vmul.f32 %v496, %v504
        %v536 = vmul.f32 %v497, %v504
        %v537 = vmul.f32 %v498, %v504
        %v538 = vld [vmem:[%s2] sm:$0x1]
        %v540 = vlaneseq
        %v541 = vshrl.u32 %v540, 7
        %v542 = vsub.s32 0, %v541
        %v543 = vrot.slane %v538, %v542
        %v545 = vadd.f32 %v506, %v543
        %v546 = vadd.f32 %v507, %v543
        %v547 = vadd.f32 %v508, %v543
        %v548 = vadd.f32 %v509, %v543
        %v549 = vadd.f32 %v510, %v543
        %v550 = vadd.f32 %v511, %v543
        %v551 = vadd.f32 %v512, %v543
        %v552 = vadd.f32 %v513, %v543
        %v553 = vadd.f32 %v514, %v543
        %v554 = vadd.f32 %v515, %v543
        %v555 = vadd.f32 %v516, %v543
        %v556 = vadd.f32 %v517, %v543
        %v557 = vadd.f32 %v518, %v543
        %v558 = vadd.f32 %v519, %v543
        %v559 = vadd.f32 %v520, %v543
        %v560 = vadd.f32 %v521, %v543
        %v561 = vadd.f32 %v522, %v543
        %v562 = vadd.f32 %v523, %v543
        %v563 = vadd.f32 %v524, %v543
        %v564 = vadd.f32 %v525, %v543
        %v565 = vadd.f32 %v526, %v543
        %v566 = vadd.f32 %v527, %v543
        %v567 = vadd.f32 %v528, %v543
        %v568 = vadd.f32 %v529, %v543
        %v569 = vadd.f32 %v530, %v543
        %v570 = vadd.f32 %v531, %v543
        %v571 = vadd.f32 %v532, %v543
        %v572 = vadd.f32 %v533, %v543
        %v573 = vadd.f32 %v534, %v543
        %v574 = vadd.f32 %v535, %v543
        %v575 = vadd.f32 %v536, %v543
        %v576 = vadd.f32 %v537, %v543
        %v577 = vmax.f32 %v545, 0.0
        %v578 = vmax.f32 %v546, 0.0
        %v579 = vmax.f32 %v547, 0.0
        %v580 = vmax.f32 %v548, 0.0
        %v581 = vmax.f32 %v549, 0.0
        %v582 = vmax.f32 %v550, 0.0
        %v583 = vmax.f32 %v551, 0.0
        %v584 = vmax.f32 %v552, 0.0
        %v585 = vmax.f32 %v553, 0.0
        %v586 = vmax.f32 %v554, 0.0
        %v587 = vmax.f32 %v555, 0.0
        %v588 = vmax.f32 %v556, 0.0
        %v589 = vmax.f32 %v557, 0.0
        %v590 = vmax.f32 %v558, 0.0
        %v591 = vmax.f32 %v559, 0.0
        %v592 = vmax.f32 %v560, 0.0
        %v593 = vmax.f32 %v561, 0.0
        %v594 = vmax.f32 %v562, 0.0
        %v595 = vmax.f32 %v563, 0.0
        %v596 = vmax.f32 %v564, 0.0
        %v597 = vmax.f32 %v565, 0.0
        %v598 = vmax.f32 %v566, 0.0
        %v599 = vmax.f32 %v567, 0.0
        %v600 = vmax.f32 %v568, 0.0
        %v601 = vmax.f32 %v569, 0.0
        %v602 = vmax.f32 %v570, 0.0
        %v603 = vmax.f32 %v571, 0.0
        %v604 = vmax.f32 %v572, 0.0
        %v605 = vmax.f32 %v573, 0.0
        %v606 = vmax.f32 %v574, 0.0
        %v607 = vmax.f32 %v575, 0.0
        %v608 = vmax.f32 %v576, 0.0
        %vm642 = vcmask 1040384
        %v643 = vrot.slane 0.0, 7
        %v644 = vsel %vm642, %v643, %v643
        %v645 = vrot.slane %v577, 7
        %v646 = vrot.slane %v578, 7
        %v647 = vsel %vm642, %v645, %v646
        %v648 = vrot.slane %v579, 7
        %v649 = vrot.slane %v580, 7
        %v650 = vsel %vm642, %v648, %v649
        %v651 = vrot.slane %v581, 7
        %v652 = vrot.slane %v582, 7
        %v653 = vsel %vm642, %v651, %v652
        %v654 = vrot.slane %v583, 7
        %v655 = vrot.slane %v584, 7
        %v656 = vsel %vm642, %v654, %v655
        %v657 = vrot.slane %v585, 7
        %v658 = vrot.slane %v586, 7
        %v659 = vsel %vm642, %v657, %v658
        %v660 = vrot.slane %v587, 7
        %v661 = vrot.slane %v588, 7
        %v662 = vsel %vm642, %v660, %v661
        %v663 = vrot.slane %v589, 7
        %v664 = vrot.slane %v590, 7
        %v665 = vsel %vm642, %v663, %v664
        %v666 = vrot.slane %v591, 7
        %v667 = vrot.slane %v592, 7
        %v668 = vsel %vm642, %v666, %v667
        %v669 = vrot.slane %v593, 7
        %v670 = vrot.slane %v594, 7
        %v671 = vsel %vm642, %v669, %v670
        %v672 = vrot.slane %v595, 7
        %v673 = vrot.slane %v596, 7
        %v674 = vsel %vm642, %v672, %v673
        %v675 = vrot.slane %v597, 7
        %v676 = vrot.slane %v598, 7
        %v677 = vsel %vm642, %v675, %v676
        %v678 = vrot.slane %v599, 7
        %v679 = vrot.slane %v600, 7
        %v680 = vsel %vm642, %v678, %v679
        %v681 = vrot.slane %v601, 7
        %v682 = vrot.slane %v602, 7
        %v683 = vsel %vm642, %v681, %v682
        %v684 = vrot.slane %v603, 7
        %v685 = vrot.slane %v604, 7
        %v686 = vsel %vm642, %v684, %v685
        %v687 = vrot.slane %v605, 7
        %v688 = vrot.slane %v606, 7
        %v689 = vsel %vm642, %v687, %v688
        %v690 = vrot.slane %v607, 7
        %v691 = vrot.slane %v608, 7
        %v692 = vsel %vm642, %v690, %v691
        %v742 = vsel %vm642, 0.0, %v643
        %v743 = vsel %vm642, 0.0, %v645
        %v744 = vsel %vm642, 0.0, %v648
        %v745 = vsel %vm642, 0.0, %v651
        %v746 = vsel %vm642, 0.0, %v654
        %v747 = vsel %vm642, 0.0, %v657
        %v748 = vsel %vm642, 0.0, %v660
        %v749 = vsel %vm642, 0.0, %v663
        %v750 = vsel %vm642, 0.0, %v666
        %v751 = vsel %vm642, 0.0, %v669
        %v752 = vsel %vm642, 0.0, %v672
        %v753 = vsel %vm642, 0.0, %v675
        %v754 = vsel %vm642, 0.0, %v678
        %v755 = vsel %vm642, 0.0, %v681
        %v756 = vsel %vm642, 0.0, %v684
        %v757 = vsel %vm642, 0.0, %v687
        %v758 = vsel %vm642, 0.0, %v690
        %v759 = vsel %vm642, %v643, 0.0
        %v760 = vsel %vm642, %v646, 0.0
        %v761 = vsel %vm642, %v649, 0.0
        %v762 = vsel %vm642, %v652, 0.0
        %v763 = vsel %vm642, %v655, 0.0
        %v764 = vsel %vm642, %v658, 0.0
        %v765 = vsel %vm642, %v661, 0.0
        %v766 = vsel %vm642, %v664, 0.0
        %v767 = vsel %vm642, %v667, 0.0
        %v768 = vsel %vm642, %v670, 0.0
        %v769 = vsel %vm642, %v673, 0.0
        %v770 = vsel %vm642, %v676, 0.0
        %v771 = vsel %vm642, %v679, 0.0
        %v772 = vsel %vm642, %v682, 0.0
        %v773 = vsel %vm642, %v685, 0.0
        %v774 = vsel %vm642, %v688, 0.0
        %v775 = vsel %vm642, %v691, 0.0
        %vm808 = vcmask 1046528
        %v809 = vrot.slane %v742, 1
        %v810 = vrot.slane %v644, 1
        %v811 = vsel %vm808, %v809, %v810
        %v812 = vrot.slane %v759, 1
        %v813 = vsel %vm808, %v810, %v812
        %v814 = vrot.slane %v743, 1
        %v815 = vrot.slane %v647, 1
        %v816 = vsel %vm808, %v814, %v815
        %v817 = vrot.slane %v760, 1
        %v818 = vsel %vm808, %v815, %v817
        %v819 = vrot.slane %v744, 1
        %v820 = vrot.slane %v650, 1
        %v821 = vsel %vm808, %v819, %v820
        %v822 = vrot.slane %v761, 1
        %v823 = vsel %vm808, %v820, %v822
        %v824 = vrot.slane %v745, 1
        %v825 = vrot.slane %v653, 1
        %v826 = vsel %vm808, %v824, %v825
        %v827 = vrot.slane %v762, 1
        %v828 = vsel %vm808, %v825, %v827
        %v829 = vrot.slane %v746, 1
        %v830 = vrot.slane %v656, 1
        %v831 = vsel %vm808, %v829, %v830
        %v832 = vrot.slane %v763, 1
        %v833 = vsel %vm808, %v830, %v832
        %v834 = vrot.slane %v747, 1
        %v835 = vrot.slane %v659, 1
        %v836 = vsel %vm808, %v834, %v835
        %v837 = vrot.slane %v764, 1
        %v838 = vsel %vm808, %v835, %v837
        %v839 = vrot.slane %v748, 1
        %v840 = vrot.slane %v662, 1
        %v841 = vsel %vm808, %v839, %v840
        %v842 = vrot.slane %v765, 1
        %v843 = vsel %vm808, %v840, %v842
        %v844 = vrot.slane %v749, 1
        %v845 = vrot.slane %v665, 1
        %v846 = vsel %vm808, %v844, %v845
        %v847 = vrot.slane %v766, 1
        %v848 = vsel %vm808, %v845, %v847
        %v849 = vrot.slane %v750, 1
        %v850 = vrot.slane %v668, 1
        %v851 = vsel %vm808, %v849, %v850
        %v852 = vrot.slane %v767, 1
        %v853 = vsel %vm808, %v850, %v852
        %v854 = vrot.slane %v751, 1
        %v855 = vrot.slane %v671, 1
        %v856 = vsel %vm808, %v854, %v855
        %v857 = vrot.slane %v768, 1
        %v858 = vsel %vm808, %v855, %v857
        %v859 = vrot.slane %v752, 1
        %v860 = vrot.slane %v674, 1
        %v861 = vsel %vm808, %v859, %v860
        %v862 = vrot.slane %v769, 1
        %v863 = vsel %vm808, %v860, %v862
        %v864 = vrot.slane %v753, 1
        %v865 = vrot.slane %v677, 1
        %v866 = vsel %vm808, %v864, %v865
        %v867 = vrot.slane %v770, 1
        %v868 = vsel %vm808, %v865, %v867
        %v869 = vrot.slane %v754, 1
        %v870 = vrot.slane %v680, 1
        %v871 = vsel %vm808, %v869, %v870
        %v872 = vrot.slane %v771, 1
        %v873 = vsel %vm808, %v870, %v872
        %v874 = vrot.slane %v755, 1
        %v875 = vrot.slane %v683, 1
        %v876 = vsel %vm808, %v874, %v875
        %v877 = vrot.slane %v772, 1
        %v878 = vsel %vm808, %v875, %v877
        %v879 = vrot.slane %v756, 1
        %v880 = vrot.slane %v686, 1
        %v881 = vsel %vm808, %v879, %v880
        %v882 = vrot.slane %v773, 1
        %v883 = vsel %vm808, %v880, %v882
        %v884 = vrot.slane %v757, 1
        %v885 = vrot.slane %v689, 1
        %v886 = vsel %vm808, %v884, %v885
        %v887 = vrot.slane %v774, 1
        %v888 = vsel %vm808, %v885, %v887
        %889 = vrot.lane.b32.xlu0 %v811, 4
        %v890 = vpop.permute.xlu0 %889
        %891 = vrot.lane.b32.xlu0 %v813, 4
        %v892 = vpop.permute.xlu0 %891
        %893 = vrot.lane.b32.xlu0 %v816, 4
        %v894 = vpop.permute.xlu0 %893
        %895 = vrot.lane.b32.xlu0 %v818, 4
        %v896 = vpop.permute.xlu0 %895
        %897 = vrot.lane.b32.xlu0 %v821, 4
        %v898 = vpop.permute.xlu0 %897
        %899 = vrot.lane.b32.xlu0 %v823, 4
        %v900 = vpop.permute.xlu0 %899
        %901 = vrot.lane.b32.xlu0 %v826, 4
        %v902 = vpop.permute.xlu0 %901
        %903 = vrot.lane.b32.xlu0 %v828, 4
        %v904 = vpop.permute.xlu0 %903
        %905 = vrot.lane.b32.xlu0 %v831, 4
        %v906 = vpop.permute.xlu0 %905
        %907 = vrot.lane.b32.xlu0 %v833, 4
        %v908 = vpop.permute.xlu0 %907
        %909 = vrot.lane.b32.xlu0 %v836, 4
        %v910 = vpop.permute.xlu0 %909
        %911 = vrot.lane.b32.xlu0 %v838, 4
        %v912 = vpop.permute.xlu0 %911
        %913 = vrot.lane.b32.xlu0 %v841, 4
        %v914 = vpop.permute.xlu0 %913
        %915 = vrot.lane.b32.xlu0 %v843, 4
        %v916 = vpop.permute.xlu0 %915
        %917 = vrot.lane.b32.xlu0 %v846, 4
        %v918 = vpop.permute.xlu0 %917
        %919 = vrot.lane.b32.xlu0 %v848, 4
        %v920 = vpop.permute.xlu0 %919
        %921 = vrot.lane.b32.xlu0 %v851, 4
        %v922 = vpop.permute.xlu0 %921
        %923 = vrot.lane.b32.xlu0 %v853, 4
        %v924 = vpop.permute.xlu0 %923
        %925 = vrot.lane.b32.xlu0 %v856, 4
        %v926 = vpop.permute.xlu0 %925
        %927 = vrot.lane.b32.xlu0 %v858, 4
        %v928 = vpop.permute.xlu0 %927
        %929 = vrot.lane.b32.xlu0 %v861, 4
        %v930 = vpop.permute.xlu0 %929
        %931 = vrot.lane.b32.xlu0 %v863, 4
        %v932 = vpop.permute.xlu0 %931
        %933 = vrot.lane.b32.xlu0 %v866, 4
        %v934 = vpop.permute.xlu0 %933
        %935 = vrot.lane.b32.xlu0 %v868, 4
        %v936 = vpop.permute.xlu0 %935
        %937 = vrot.lane.b32.xlu0 %v871, 4
        %v938 = vpop.permute.xlu0 %937
        %939 = vrot.lane.b32.xlu0 %v873, 4
        %v940 = vpop.permute.xlu0 %939
        %941 = vrot.lane.b32.xlu0 %v876, 4
        %v942 = vpop.permute.xlu0 %941
        %943 = vrot.lane.b32.xlu0 %v878, 4
        %v944 = vpop.permute.xlu0 %943
        %945 = vrot.lane.b32.xlu0 %v881, 4
        %v946 = vpop.permute.xlu0 %945
        %947 = vrot.lane.b32.xlu0 %v883, 4
        %v948 = vpop.permute.xlu0 %947
        %949 = vrot.lane.b32.xlu0 %v886, 4
        %v950 = vpop.permute.xlu0 %949
        %951 = vrot.lane.b32.xlu0 %v888, 4
        %v952 = vpop.permute.xlu0 %951
        %vm985 = vcmask 1045504
        %v986 = vrot.slane %v742, 2
        %v987 = vrot.slane %v644, 2
        %v988 = vsel %vm985, %v986, %v987
        %v989 = vrot.slane %v759, 2
        %v990 = vsel %vm985, %v987, %v989
        %v991 = vrot.slane %v743, 2
        %v992 = vrot.slane %v647, 2
        %v993 = vsel %vm985, %v991, %v992
        %v994 = vrot.slane %v760, 2
        %v995 = vsel %vm985, %v992, %v994
        %v996 = vrot.slane %v744, 2
        %v997 = vrot.slane %v650, 2
        %v998 = vsel %vm985, %v996, %v997
        %v999 = vrot.slane %v761, 2
        %v1000 = vsel %vm985, %v997, %v999
        %v1001 = vrot.slane %v745, 2
        %v1002 = vrot.slane %v653, 2
        %v1003 = vsel %vm985, %v1001, %v1002
        %v1004 = vrot.slane %v762, 2
        %v1005 = vsel %vm985, %v1002, %v1004
        %v1006 = vrot.slane %v746, 2
        %v1007 = vrot.slane %v656, 2
        %v1008 = vsel %vm985, %v1006, %v1007
        %v1009 = vrot.slane %v763, 2
        %v1010 = vsel %vm985, %v1007, %v1009
        %v1011 = vrot.slane %v747, 2
        %v1012 = vrot.slane %v659, 2
        %v1013 = vsel %vm985, %v1011, %v1012
        %v1014 = vrot.slane %v764, 2
        %v1015 = vsel %vm985, %v1012, %v1014
        %v1016 = vrot.slane %v748, 2
        %v1017 = vrot.slane %v662, 2
        %v1018 = vsel %vm985, %v1016, %v1017
        %v1019 = vrot.slane %v765, 2
        %v1020 = vsel %vm985, %v1017, %v1019
        %v1021 = vrot.slane %v749, 2
        %v1022 = vrot.slane %v665, 2
        %v1023 = vsel %vm985, %v1021, %v1022
        %v1024 = vrot.slane %v766, 2
        %v1025 = vsel %vm985, %v1022, %v1024
        %v1026 = vrot.slane %v750, 2
        %v1027 = vrot.slane %v668, 2
        %v1028 = vsel %vm985, %v1026, %v1027
        %v1029 = vrot.slane %v767, 2
        %v1030 = vsel %vm985, %v1027, %v1029
        %v1031 = vrot.slane %v751, 2
        %v1032 = vrot.slane %v671, 2
        %v1033 = vsel %vm985, %v1031, %v1032
        %v1034 = vrot.slane %v768, 2
        %v1035 = vsel %vm985, %v1032, %v1034
        %v1036 = vrot.slane %v752, 2
        %v1037 = vrot.slane %v674, 2
        %v1038 = vsel %vm985, %v1036, %v1037
        %v1039 = vrot.slane %v769, 2
        %v1040 = vsel %vm985, %v1037, %v1039
        %v1041 = vrot.slane %v753, 2
        %v1042 = vrot.slane %v677, 2
        %v1043 = vsel %vm985, %v1041, %v1042
        %v1044 = vrot.slane %v770, 2
        %v1045 = vsel %vm985, %v1042, %v1044
        %v1046 = vrot.slane %v754, 2
        %v1047 = vrot.slane %v680, 2
        %v1048 = vsel %vm985, %v1046, %v1047
        %v1049 = vrot.slane %v771, 2
        %v1050 = vsel %vm985, %v1047, %v1049
        %v1051 = vrot.slane %v755, 2
        %v1052 = vrot.slane %v683, 2
        %v1053 = vsel %vm985, %v1051, %v1052
        %v1054 = vrot.slane %v772, 2
        %v1055 = vsel %vm985, %v1052, %v1054
        %v1056 = vrot.slane %v756, 2
        %v1057 = vrot.slane %v686, 2
        %v1058 = vsel %vm985, %v1056, %v1057
        %v1059 = vrot.slane %v773, 2
        %v1060 = vsel %vm985, %v1057, %v1059
        %v1061 = vrot.slane %v757, 2
        %v1062 = vrot.slane %v689, 2
        %v1063 = vsel %vm985, %v1061, %v1062
        %v1064 = vrot.slane %v774, 2
        %v1065 = vsel %vm985, %v1062, %v1064
        %1066 = vrot.lane.b32.xlu0 %v988, 8
        %v1067 = vpop.permute.xlu0 %1066
        %1068 = vrot.lane.b32.xlu0 %v990, 8
        %v1069 = vpop.permute.xlu0 %1068
        %1070 = vrot.lane.b32.xlu0 %v993, 8
        %v1071 = vpop.permute.xlu0 %1070
        %1072 = vrot.lane.b32.xlu0 %v995, 8
        %v1073 = vpop.permute.xlu0 %1072
        %1074 = vrot.lane.b32.xlu0 %v998, 8
        %v1075 = vpop.permute.xlu0 %1074
        %1076 = vrot.lane.b32.xlu0 %v1000, 8
        %v1077 = vpop.permute.xlu0 %1076
        %1078 = vrot.lane.b32.xlu0 %v1003, 8
        %v1079 = vpop.permute.xlu0 %1078
        %1080 = vrot.lane.b32.xlu0 %v1005, 8
        %v1081 = vpop.permute.xlu0 %1080
        %1082 = vrot.lane.b32.xlu0 %v1008, 8
        %v1083 = vpop.permute.xlu0 %1082
        %1084 = vrot.lane.b32.xlu0 %v1010, 8
        %v1085 = vpop.permute.xlu0 %1084
        %1086 = vrot.lane.b32.xlu0 %v1013, 8
        %v1087 = vpop.permute.xlu0 %1086
        %1088 = vrot.lane.b32.xlu0 %v1015, 8
        %v1089 = vpop.permute.xlu0 %1088
        %1090 = vrot.lane.b32.xlu0 %v1018, 8
        %v1091 = vpop.permute.xlu0 %1090
        %1092 = vrot.lane.b32.xlu0 %v1020, 8
        %v1093 = vpop.permute.xlu0 %1092
        %1094 = vrot.lane.b32.xlu0 %v1023, 8
        %v1095 = vpop.permute.xlu0 %1094
        %1096 = vrot.lane.b32.xlu0 %v1025, 8
        %v1097 = vpop.permute.xlu0 %1096
        %1098 = vrot.lane.b32.xlu0 %v1028, 8
        %v1099 = vpop.permute.xlu0 %1098
        %1100 = vrot.lane.b32.xlu0 %v1030, 8
        %v1101 = vpop.permute.xlu0 %1100
        %1102 = vrot.lane.b32.xlu0 %v1033, 8
        %v1103 = vpop.permute.xlu0 %1102
        %1104 = vrot.lane.b32.xlu0 %v1035, 8
        %v1105 = vpop.permute.xlu0 %1104
        %1106 = vrot.lane.b32.xlu0 %v1038, 8
        %v1107 = vpop.permute.xlu0 %1106
        %1108 = vrot.lane.b32.xlu0 %v1040, 8
        %v1109 = vpop.permute.xlu0 %1108
        %1110 = vrot.lane.b32.xlu0 %v1043, 8
        %v1111 = vpop.permute.xlu0 %1110
        %1112 = vrot.lane.b32.xlu0 %v1045, 8
        %v1113 = vpop.permute.xlu0 %1112
        %1114 = vrot.lane.b32.xlu0 %v1048, 8
        %v1115 = vpop.permute.xlu0 %1114
        %1116 = vrot.lane.b32.xlu0 %v1050, 8
        %v1117 = vpop.permute.xlu0 %1116
        %1118 = vrot.lane.b32.xlu0 %v1053, 8
        %v1119 = vpop.permute.xlu0 %1118
        %1120 = vrot.lane.b32.xlu0 %v1055, 8
        %v1121 = vpop.permute.xlu0 %1120
        %1122 = vrot.lane.b32.xlu0 %v1058, 8
        %v1123 = vpop.permute.xlu0 %1122
        %1124 = vrot.lane.b32.xlu0 %v1060, 8
        %v1125 = vpop.permute.xlu0 %1124
        %1126 = vrot.lane.b32.xlu0 %v1063, 8
        %v1127 = vpop.permute.xlu0 %1126
        %1128 = vrot.lane.b32.xlu0 %v1065, 8
        %v1129 = vpop.permute.xlu0 %1128
        %1163 = vrot.lane.b32.xlu0 %v743, 12
        %v1164 = vpop.permute.xlu0 %1163
        %1165 = vrot.lane.b32.xlu0 %v647, 12
        %v1166 = vpop.permute.xlu0 %1165
        %1167 = vrot.lane.b32.xlu0 %v744, 12
        %v1168 = vpop.permute.xlu0 %1167
        %1169 = vrot.lane.b32.xlu0 %v650, 12
        %v1170 = vpop.permute.xlu0 %1169
        %1171 = vrot.lane.b32.xlu0 %v745, 12
        %v1172 = vpop.permute.xlu0 %1171
        %1173 = vrot.lane.b32.xlu0 %v653, 12
        %v1174 = vpop.permute.xlu0 %1173
        %1175 = vrot.lane.b32.xlu0 %v746, 12
        %v1176 = vpop.permute.xlu0 %1175
        %1177 = vrot.lane.b32.xlu0 %v656, 12
        %v1178 = vpop.permute.xlu0 %1177
        %1179 = vrot.lane.b32.xlu0 %v747, 12
        %v1180 = vpop.permute.xlu0 %1179
        %1181 = vrot.lane.b32.xlu0 %v659, 12
        %v1182 = vpop.permute.xlu0 %1181
        %1183 = vrot.lane.b32.xlu0 %v748, 12
        %v1184 = vpop.permute.xlu0 %1183
        %1185 = vrot.lane.b32.xlu0 %v662, 12
        %v1186 = vpop.permute.xlu0 %1185
        %1187 = vrot.lane.b32.xlu0 %v749, 12
        %v1188 = vpop.permute.xlu0 %1187
        %1189 = vrot.lane.b32.xlu0 %v665, 12
        %v1190 = vpop.permute.xlu0 %1189
        %1191 = vrot.lane.b32.xlu0 %v750, 12
        %v1192 = vpop.permute.xlu0 %1191
        %1193 = vrot.lane.b32.xlu0 %v668, 12
        %v1194 = vpop.permute.xlu0 %1193
        %1195 = vrot.lane.b32.xlu0 %v751, 12
        %v1196 = vpop.permute.xlu0 %1195
        %1197 = vrot.lane.b32.xlu0 %v671, 12
        %v1198 = vpop.permute.xlu0 %1197
        %1199 = vrot.lane.b32.xlu0 %v752, 12
        %v1200 = vpop.permute.xlu0 %1199
        %1201 = vrot.lane.b32.xlu0 %v674, 12
        %v1202 = vpop.permute.xlu0 %1201
        %1203 = vrot.lane.b32.xlu0 %v753, 12
        %v1204 = vpop.permute.xlu0 %1203
        %1205 = vrot.lane.b32.xlu0 %v677, 12
        %v1206 = vpop.permute.xlu0 %1205
        %1207 = vrot.lane.b32.xlu0 %v754, 12
        %v1208 = vpop.permute.xlu0 %1207
        %1209 = vrot.lane.b32.xlu0 %v680, 12
        %v1210 = vpop.permute.xlu0 %1209
        %1211 = vrot.lane.b32.xlu0 %v755, 12
        %v1212 = vpop.permute.xlu0 %1211
        %1213 = vrot.lane.b32.xlu0 %v683, 12
        %v1214 = vpop.permute.xlu0 %1213
        %1215 = vrot.lane.b32.xlu0 %v756, 12
        %v1216 = vpop.permute.xlu0 %1215
        %1217 = vrot.lane.b32.xlu0 %v686, 12
        %v1218 = vpop.permute.xlu0 %1217
        %1219 = vrot.lane.b32.xlu0 %v757, 12
        %v1220 = vpop.permute.xlu0 %1219
        %1221 = vrot.lane.b32.xlu0 %v689, 12
        %v1222 = vpop.permute.xlu0 %1221
        %1223 = vrot.lane.b32.xlu0 %v758, 12
        %v1224 = vpop.permute.xlu0 %1223
        %1225 = vrot.lane.b32.xlu0 %v692, 12
        %v1226 = vpop.permute.xlu0 %1225
        %v1260 = vrot.slane %v758, 1
        %v1261 = vrot.slane %v692, 1
        %v1262 = vsel %vm808, %v1260, %v1261
        %v1263 = vrot.slane %v775, 1
        %v1264 = vsel %vm808, %v1261, %v1263
        %1265 = vrot.lane.b32.xlu0 %v816, 16
        %v1266 = vpop.permute.xlu0 %1265
        %1267 = vrot.lane.b32.xlu0 %v818, 16
        %v1268 = vpop.permute.xlu0 %1267
        %1269 = vrot.lane.b32.xlu0 %v821, 16
        %v1270 = vpop.permute.xlu0 %1269
        %1271 = vrot.lane.b32.xlu0 %v823, 16
        %v1272 = vpop.permute.xlu0 %1271
        %1273 = vrot.lane.b32.xlu0 %v826, 16
        %v1274 = vpop.permute.xlu0 %1273
        %1275 = vrot.lane.b32.xlu0 %v828, 16
        %v1276 = vpop.permute.xlu0 %1275
        %1277 = vrot.lane.b32.xlu0 %v831, 16
        %v1278 = vpop.permute.xlu0 %1277
        %1279 = vrot.lane.b32.xlu0 %v833, 16
        %v1280 = vpop.permute.xlu0 %1279
        %1281 = vrot.lane.b32.xlu0 %v836, 16
        %v1282 = vpop.permute.xlu0 %1281
        %1283 = vrot.lane.b32.xlu0 %v838, 16
        %v1284 = vpop.permute.xlu0 %1283
        %1285 = vrot.lane.b32.xlu0 %v841, 16
        %v1286 = vpop.permute.xlu0 %1285
        %1287 = vrot.lane.b32.xlu0 %v843, 16
        %v1288 = vpop.permute.xlu0 %1287
        %1289 = vrot.lane.b32.xlu0 %v846, 16
        %v1290 = vpop.permute.xlu0 %1289
        %1291 = vrot.lane.b32.xlu0 %v848, 16
        %v1292 = vpop.permute.xlu0 %1291
        %1293 = vrot.lane.b32.xlu0 %v851, 16
        %v1294 = vpop.permute.xlu0 %1293
        %1295 = vrot.lane.b32.xlu0 %v853, 16
        %v1296 = vpop.permute.xlu0 %1295
        %1297 = vrot.lane.b32.xlu0 %v856, 16
        %v1298 = vpop.permute.xlu0 %1297
        %1299 = vrot.lane.b32.xlu0 %v858, 16
        %v1300 = vpop.permute.xlu0 %1299
        %1301 = vrot.lane.b32.xlu0 %v861, 16
        %v1302 = vpop.permute.xlu0 %1301
        %1303 = vrot.lane.b32.xlu0 %v863, 16
        %v1304 = vpop.permute.xlu0 %1303
        %1305 = vrot.lane.b32.xlu0 %v866, 16
        %v1306 = vpop.permute.xlu0 %1305
        %1307 = vrot.lane.b32.xlu0 %v868, 16
        %v1308 = vpop.permute.xlu0 %1307
        %1309 = vrot.lane.b32.xlu0 %v871, 16
        %v1310 = vpop.permute.xlu0 %1309
        %1311 = vrot.lane.b32.xlu0 %v873, 16
        %v1312 = vpop.permute.xlu0 %1311
        %1313 = vrot.lane.b32.xlu0 %v876, 16
        %v1314 = vpop.permute.xlu0 %1313
        %1315 = vrot.lane.b32.xlu0 %v878, 16
        %v1316 = vpop.permute.xlu0 %1315
        %1317 = vrot.lane.b32.xlu0 %v881, 16
        %v1318 = vpop.permute.xlu0 %1317
        %1319 = vrot.lane.b32.xlu0 %v883, 16
        %v1320 = vpop.permute.xlu0 %1319
        %1321 = vrot.lane.b32.xlu0 %v886, 16
        %v1322 = vpop.permute.xlu0 %1321
        %1323 = vrot.lane.b32.xlu0 %v888, 16
        %v1324 = vpop.permute.xlu0 %1323
        %1325 = vrot.lane.b32.xlu0 %v1262, 16
        %v1326 = vpop.permute.xlu0 %1325
        %1327 = vrot.lane.b32.xlu0 %v1264, 16
        %v1328 = vpop.permute.xlu0 %1327
        %v1361 = vrot.slane %v758, 2
        %v1362 = vrot.slane %v692, 2
        %v1363 = vsel %vm985, %v1361, %v1362
        %v1364 = vrot.slane %v775, 2
        %v1365 = vsel %vm985, %v1362, %v1364
        %1366 = vrot.lane.b32.xlu0 %v993, 20
        %v1367 = vpop.permute.xlu0 %1366
        %1368 = vrot.lane.b32.xlu0 %v995, 20
        %v1369 = vpop.permute.xlu0 %1368
        %1370 = vrot.lane.b32.xlu0 %v998, 20
        %v1371 = vpop.permute.xlu0 %1370
        %1372 = vrot.lane.b32.xlu0 %v1000, 20
        %v1373 = vpop.permute.xlu0 %1372
        %1374 = vrot.lane.b32.xlu0 %v1003, 20
        %v1375 = vpop.permute.xlu0 %1374
        %1376 = vrot.lane.b32.xlu0 %v1005, 20
        %v1377 = vpop.permute.xlu0 %1376
        %1378 = vrot.lane.b32.xlu0 %v1008, 20
        %v1379 = vpop.permute.xlu0 %1378
        %1380 = vrot.lane.b32.xlu0 %v1010, 20
        %v1381 = vpop.permute.xlu0 %1380
        %1382 = vrot.lane.b32.xlu0 %v1013, 20
        %v1383 = vpop.permute.xlu0 %1382
        %1384 = vrot.lane.b32.xlu0 %v1015, 20
        %v1385 = vpop.permute.xlu0 %1384
        %1386 = vrot.lane.b32.xlu0 %v1018, 20
        %v1387 = vpop.permute.xlu0 %1386
        %1388 = vrot.lane.b32.xlu0 %v1020, 20
        %v1389 = vpop.permute.xlu0 %1388
        %1390 = vrot.lane.b32.xlu0 %v1023, 20
        %v1391 = vpop.permute.xlu0 %1390
        %1392 = vrot.lane.b32.xlu0 %v1025, 20
        %v1393 = vpop.permute.xlu0 %1392
        %1394 = vrot.lane.b32.xlu0 %v1028, 20
        %v1395 = vpop.permute.xlu0 %1394
        %1396 = vrot.lane.b32.xlu0 %v1030, 20
        %v1397 = vpop.permute.xlu0 %1396
        %1398 = vrot.lane.b32.xlu0 %v1033, 20
        %v1399 = vpop.permute.xlu0 %1398
        %1400 = vrot.lane.b32.xlu0 %v1035, 20
        %v1401 = vpop.permute.xlu0 %1400
        %1402 = vrot.lane.b32.xlu0 %v1038, 20
        %v1403 = vpop.permute.xlu0 %1402
        %1404 = vrot.lane.b32.xlu0 %v1040, 20
        %v1405 = vpop.permute.xlu0 %1404
        %1406 = vrot.lane.b32.xlu0 %v1043, 20
        %v1407 = vpop.permute.xlu0 %1406
        %1408 = vrot.lane.b32.xlu0 %v1045, 20
        %v1409 = vpop.permute.xlu0 %1408
        %1410 = vrot.lane.b32.xlu0 %v1048, 20
        %v1411 = vpop.permute.xlu0 %1410
        %1412 = vrot.lane.b32.xlu0 %v1050, 20
        %v1413 = vpop.permute.xlu0 %1412
        %1414 = vrot.lane.b32.xlu0 %v1053, 20
        %v1415 = vpop.permute.xlu0 %1414
        %1416 = vrot.lane.b32.xlu0 %v1055, 20
        %v1417 = vpop.permute.xlu0 %1416
        %1418 = vrot.lane.b32.xlu0 %v1058, 20
        %v1419 = vpop.permute.xlu0 %1418
        %1420 = vrot.lane.b32.xlu0 %v1060, 20
        %v1421 = vpop.permute.xlu0 %1420
        %1422 = vrot.lane.b32.xlu0 %v1063, 20
        %v1423 = vpop.permute.xlu0 %1422
        %1424 = vrot.lane.b32.xlu0 %v1065, 20
        %v1425 = vpop.permute.xlu0 %1424
        %1426 = vrot.lane.b32.xlu0 %v1363, 20
        %v1427 = vpop.permute.xlu0 %1426
        %1428 = vrot.lane.b32.xlu0 %v1365, 20
        %v1429 = vpop.permute.xlu0 %1428
        %1462 = vrot.lane.b32.xlu0 %v744, 24
        %v1463 = vpop.permute.xlu0 %1462
        %1464 = vrot.lane.b32.xlu0 %v650, 24
        %v1465 = vpop.permute.xlu0 %1464
        %1466 = vrot.lane.b32.xlu0 %v745, 24
        %v1467 = vpop.permute.xlu0 %1466
        %1468 = vrot.lane.b32.xlu0 %v653, 24
        %v1469 = vpop.permute.xlu0 %1468
        %1470 = vrot.lane.b32.xlu0 %v746, 24
        %v1471 = vpop.permute.xlu0 %1470
        %1472 = vrot.lane.b32.xlu0 %v656, 24
        %v1473 = vpop.permute.xlu0 %1472
        %1474 = vrot.lane.b32.xlu0 %v747, 24
        %v1475 = vpop.permute.xlu0 %1474
        %1476 = vrot.lane.b32.xlu0 %v659, 24
        %v1477 = vpop.permute.xlu0 %1476
        %1478 = vrot.lane.b32.xlu0 %v748, 24
        %v1479 = vpop.permute.xlu0 %1478
        %1480 = vrot.lane.b32.xlu0 %v662, 24
        %v1481 = vpop.permute.xlu0 %1480
        %1482 = vrot.lane.b32.xlu0 %v749, 24
        %v1483 = vpop.permute.xlu0 %1482
        %1484 = vrot.lane.b32.xlu0 %v665, 24
        %v1485 = vpop.permute.xlu0 %1484
        %1486 = vrot.lane.b32.xlu0 %v750, 24
        %v1487 = vpop.permute.xlu0 %1486
        %1488 = vrot.lane.b32.xlu0 %v668, 24
        %v1489 = vpop.permute.xlu0 %1488
        %1490 = vrot.lane.b32.xlu0 %v751, 24
        %v1491 = vpop.permute.xlu0 %1490
        %1492 = vrot.lane.b32.xlu0 %v671, 24
        %v1493 = vpop.permute.xlu0 %1492
        %1494 = vrot.lane.b32.xlu0 %v752, 24
        %v1495 = vpop.permute.xlu0 %1494
        %1496 = vrot.lane.b32.xlu0 %v674, 24
        %v1497 = vpop.permute.xlu0 %1496
        %1498 = vrot.lane.b32.xlu0 %v753, 24
        %v1499 = vpop.permute.xlu0 %1498
        %1500 = vrot.lane.b32.xlu0 %v677, 24
        %v1501 = vpop.permute.xlu0 %1500
        %1502 = vrot.lane.b32.xlu0 %v754, 24
        %v1503 = vpop.permute.xlu0 %1502
        %1504 = vrot.lane.b32.xlu0 %v680, 24
        %v1505 = vpop.permute.xlu0 %1504
        %1506 = vrot.lane.b32.xlu0 %v755, 24
        %v1507 = vpop.permute.xlu0 %1506
        %1508 = vrot.lane.b32.xlu0 %v683, 24
        %v1509 = vpop.permute.xlu0 %1508
        %1510 = vrot.lane.b32.xlu0 %v756, 24
        %v1511 = vpop.permute.xlu0 %1510
        %1512 = vrot.lane.b32.xlu0 %v686, 24
        %v1513 = vpop.permute.xlu0 %1512
        %1514 = vrot.lane.b32.xlu0 %v757, 24
        %v1515 = vpop.permute.xlu0 %1514
        %1516 = vrot.lane.b32.xlu0 %v689, 24
        %v1517 = vpop.permute.xlu0 %1516
        %1518 = vrot.lane.b32.xlu0 %v758, 24
        %v1519 = vpop.permute.xlu0 %1518
        %1520 = vrot.lane.b32.xlu0 %v692, 24
        %v1521 = vpop.permute.xlu0 %1520
        %1522 = vrot.lane.b32.xlu0 %v742, 24
        %v1523 = vpop.permute.xlu0 %1522
        %1524 = vrot.lane.b32.xlu0 %v644, 24
        %v1525 = vpop.permute.xlu0 %1524
        %1558 = vrot.lane.b32.xlu0 %v821, 28
        %v1559 = vpop.permute.xlu0 %1558
        %1560 = vrot.lane.b32.xlu0 %v823, 28
        %v1561 = vpop.permute.xlu0 %1560
        %1562 = vrot.lane.b32.xlu0 %v826, 28
        %v1563 = vpop.permute.xlu0 %1562
        %1564 = vrot.lane.b32.xlu0 %v828, 28
        %v1565 = vpop.permute.xlu0 %1564
        %1566 = vrot.lane.b32.xlu0 %v831, 28
        %v1567 = vpop.permute.xlu0 %1566
        %1568 = vrot.lane.b32.xlu0 %v833, 28
        %v1569 = vpop.permute.xlu0 %1568
        %1570 = vrot.lane.b32.xlu0 %v836, 28
        %v1571 = vpop.permute.xlu0 %1570
        %1572 = vrot.lane.b32.xlu0 %v838, 28
        %v1573 = vpop.permute.xlu0 %1572
        %1574 = vrot.lane.b32.xlu0 %v841, 28
        %v1575 = vpop.permute.xlu0 %1574
        %1576 = vrot.lane.b32.xlu0 %v843, 28
        %v1577 = vpop.permute.xlu0 %1576
        %1578 = vrot.lane.b32.xlu0 %v846, 28
        %v1579 = vpop.permute.xlu0 %1578
        %1580 = vrot.lane.b32.xlu0 %v848, 28
        %v1581 = vpop.permute.xlu0 %1580
        %1582 = vrot.lane.b32.xlu0 %v851, 28
        %v1583 = vpop.permute.xlu0 %1582
        %1584 = vrot.lane.b32.xlu0 %v853, 28
        %v1585 = vpop.permute.xlu0 %1584
        %1586 = vrot.lane.b32.xlu0 %v856, 28
        %v1587 = vpop.permute.xlu0 %1586
        %1588 = vrot.lane.b32.xlu0 %v858, 28
        %v1589 = vpop.permute.xlu0 %1588
        %1590 = vrot.lane.b32.xlu0 %v861, 28
        %v1591 = vpop.permute.xlu0 %1590
        %1592 = vrot.lane.b32.xlu0 %v863, 28
        %v1593 = vpop.permute.xlu0 %1592
        %1594 = vrot.lane.b32.xlu0 %v866, 28
        %v1595 = vpop.permute.xlu0 %1594
        %1596 = vrot.lane.b32.xlu0 %v868, 28
        %v1597 = vpop.permute.xlu0 %1596
        %1598 = vrot.lane.b32.xlu0 %v871, 28
        %v1599 = vpop.permute.xlu0 %1598
        %1600 = vrot.lane.b32.xlu0 %v873, 28
        %v1601 = vpop.permute.xlu0 %1600
        %1602 = vrot.lane.b32.xlu0 %v876, 28
        %v1603 = vpop.permute.xlu0 %1602
        %1604 = vrot.lane.b32.xlu0 %v878, 28
        %v1605 = vpop.permute.xlu0 %1604
        %1606 = vrot.lane.b32.xlu0 %v881, 28
        %v1607 = vpop.permute.xlu0 %1606
        %1608 = vrot.lane.b32.xlu0 %v883, 28
        %v1609 = vpop.permute.xlu0 %1608
        %1610 = vrot.lane.b32.xlu0 %v886, 28
        %v1611 = vpop.permute.xlu0 %1610
        %1612 = vrot.lane.b32.xlu0 %v888, 28
        %v1613 = vpop.permute.xlu0 %1612
        %1614 = vrot.lane.b32.xlu0 %v1262, 28
        %v1615 = vpop.permute.xlu0 %1614
        %1616 = vrot.lane.b32.xlu0 %v1264, 28
        %v1617 = vpop.permute.xlu0 %1616
        %1618 = vrot.lane.b32.xlu0 %v811, 28
        %v1619 = vpop.permute.xlu0 %1618
        %1620 = vrot.lane.b32.xlu0 %v813, 28
        %v1621 = vpop.permute.xlu0 %1620
        %1654 = vrot.lane.b32.xlu0 %v998, 32
        %v1655 = vpop.permute.xlu0 %1654
        %1656 = vrot.lane.b32.xlu0 %v1000, 32
        %v1657 = vpop.permute.xlu0 %1656
        %1658 = vrot.lane.b32.xlu0 %v1003, 32
        %v1659 = vpop.permute.xlu0 %1658
        %1660 = vrot.lane.b32.xlu0 %v1005, 32
        %v1661 = vpop.permute.xlu0 %1660
        %1662 = vrot.lane.b32.xlu0 %v1008, 32
        %v1663 = vpop.permute.xlu0 %1662
        %1664 = vrot.lane.b32.xlu0 %v1010, 32
        %v1665 = vpop.permute.xlu0 %1664
        %1666 = vrot.lane.b32.xlu0 %v1013, 32
        %v1667 = vpop.permute.xlu0 %1666
        %1668 = vrot.lane.b32.xlu0 %v1015, 32
        %v1669 = vpop.permute.xlu0 %1668
        %1670 = vrot.lane.b32.xlu0 %v1018, 32
        %v1671 = vpop.permute.xlu0 %1670
        %1672 = vrot.lane.b32.xlu0 %v1020, 32
        %v1673 = vpop.permute.xlu0 %1672
        %1674 = vrot.lane.b32.xlu0 %v1023, 32
        %v1675 = vpop.permute.xlu0 %1674
        %1676 = vrot.lane.b32.xlu0 %v1025, 32
        %v1677 = vpop.permute.xlu0 %1676
        %1678 = vrot.lane.b32.xlu0 %v1028, 32
        %v1679 = vpop.permute.xlu0 %1678
        %1680 = vrot.lane.b32.xlu0 %v1030, 32
        %v1681 = vpop.permute.xlu0 %1680
        %1682 = vrot.lane.b32.xlu0 %v1033, 32
        %v1683 = vpop.permute.xlu0 %1682
        %1684 = vrot.lane.b32.xlu0 %v1035, 32
        %v1685 = vpop.permute.xlu0 %1684
        %1686 = vrot.lane.b32.xlu0 %v1038, 32
        %v1687 = vpop.permute.xlu0 %1686
        %1688 = vrot.lane.b32.xlu0 %v1040, 32
        %v1689 = vpop.permute.xlu0 %1688
        %1690 = vrot.lane.b32.xlu0 %v1043, 32
        %v1691 = vpop.permute.xlu0 %1690
        %1692 = vrot.lane.b32.xlu0 %v1045, 32
        %v1693 = vpop.permute.xlu0 %1692
        %1694 = vrot.lane.b32.xlu0 %v1048, 32
        %v1695 = vpop.permute.xlu0 %1694
        %1696 = vrot.lane.b32.xlu0 %v1050, 32
        %v1697 = vpop.permute.xlu0 %1696
        %1698 = vrot.lane.b32.xlu0 %v1053, 32
        %v1699 = vpop.permute.xlu0 %1698
        %1700 = vrot.lane.b32.xlu0 %v1055, 32
        %v1701 = vpop.permute.xlu0 %1700
        %1702 = vrot.lane.b32.xlu0 %v1058, 32
        %v1703 = vpop.permute.xlu0 %1702
        %1704 = vrot.lane.b32.xlu0 %v1060, 32
        %v1705 = vpop.permute.xlu0 %1704
        %1706 = vrot.lane.b32.xlu0 %v1063, 32
        %v1707 = vpop.permute.xlu0 %1706
        %1708 = vrot.lane.b32.xlu0 %v1065, 32
        %v1709 = vpop.permute.xlu0 %1708
        %1710 = vrot.lane.b32.xlu0 %v1363, 32
        %v1711 = vpop.permute.xlu0 %1710
        %1712 = vrot.lane.b32.xlu0 %v1365, 32
        %v1713 = vpop.permute.xlu0 %1712
        %1714 = vrot.lane.b32.xlu0 %v988, 32
        %v1715 = vpop.permute.xlu0 %1714
        %1716 = vrot.lane.b32.xlu0 %v990, 32
        %v1717 = vpop.permute.xlu0 %1716
        %vm1750 = vcmask 31744
        %v1751 = vsel %vm1750, %v742, %v890
        %v1752 = vsel %vm1750, %v644, %v892
        %v1753 = vsel %vm1750, %v743, %v894
        %v1754 = vsel %vm1750, %v647, %v896
        %v1755 = vsel %vm1750, %v744, %v898
        %v1756 = vsel %vm1750, %v650, %v900
        %v1757 = vsel %vm1750, %v745, %v902
        %v1758 = vsel %vm1750, %v653, %v904
        %v1759 = vsel %vm1750, %v746, %v906
        %v1760 = vsel %vm1750, %v656, %v908
        %v1761 = vsel %vm1750, %v747, %v910
        %v1762 = vsel %vm1750, %v659, %v912
        %v1763 = vsel %vm1750, %v748, %v914
        %v1764 = vsel %vm1750, %v662, %v916
        %v1765 = vsel %vm1750, %v749, %v918
        %v1766 = vsel %vm1750, %v665, %v920
        %v1767 = vsel %vm1750, %v750, %v922
        %v1768 = vsel %vm1750, %v668, %v924
        %v1769 = vsel %vm1750, %v751, %v926
        %v1770 = vsel %vm1750, %v671, %v928
        %v1771 = vsel %vm1750, %v752, %v930
        %v1772 = vsel %vm1750, %v674, %v932
        %v1773 = vsel %vm1750, %v753, %v934
        %v1774 = vsel %vm1750, %v677, %v936
        %v1775 = vsel %vm1750, %v754, %v938
        %v1776 = vsel %vm1750, %v680, %v940
        %v1777 = vsel %vm1750, %v755, %v942
        %v1778 = vsel %vm1750, %v683, %v944
        %v1779 = vsel %vm1750, %v756, %v946
        %v1780 = vsel %vm1750, %v686, %v948
        %v1781 = vsel %vm1750, %v757, %v950
        %v1782 = vsel %vm1750, %v689, %v952
        %vm1783 = vcmask 64512
        %v1784 = vsel %vm1783, %v1751, %v1067
        %v1785 = vsel %vm1783, %v1752, %v1069
        %v1786 = vsel %vm1783, %v1753, %v1071
        %v1787 = vsel %vm1783, %v1754, %v1073
        %v1788 = vsel %vm1783, %v1755, %v1075
        %v1789 = vsel %vm1783, %v1756, %v1077
        %v1790 = vsel %vm1783, %v1757, %v1079
        %v1791 = vsel %vm1783, %v1758, %v1081
        %v1792 = vsel %vm1783, %v1759, %v1083
        %v1793 = vsel %vm1783, %v1760, %v1085
        %v1794 = vsel %vm1783, %v1761, %v1087
        %v1795 = vsel %vm1783, %v1762, %v1089
        %v1796 = vsel %vm1783, %v1763, %v1091
        %v1797 = vsel %vm1783, %v1764, %v1093
        %v1798 = vsel %vm1783, %v1765, %v1095
        %v1799 = vsel %vm1783, %v1766, %v1097
        %v1800 = vsel %vm1783, %v1767, %v1099
        %v1801 = vsel %vm1783, %v1768, %v1101
        %v1802 = vsel %vm1783, %v1769, %v1103
        %v1803 = vsel %vm1783, %v1770, %v1105
        %v1804 = vsel %vm1783, %v1771, %v1107
        %v1805 = vsel %vm1783, %v1772, %v1109
        %v1806 = vsel %vm1783, %v1773, %v1111
        %v1807 = vsel %vm1783, %v1774, %v1113
        %v1808 = vsel %vm1783, %v1775, %v1115
        %v1809 = vsel %vm1783, %v1776, %v1117
        %v1810 = vsel %vm1783, %v1777, %v1119
        %v1811 = vsel %vm1783, %v1778, %v1121
        %v1812 = vsel %vm1783, %v1779, %v1123
        %v1813 = vsel %vm1783, %v1780, %v1125
        %v1814 = vsel %vm1783, %v1781, %v1127
        %v1815 = vsel %vm1783, %v1782, %v1129
        %vm1816 = vcmask 97280
        %v1817 = vsel %vm1816, %v1784, %v1164
        %v1818 = vsel %vm1816, %v1785, %v1166
        %v1819 = vsel %vm1816, %v1786, %v1168
        %v1820 = vsel %vm1816, %v1787, %v1170
        %v1821 = vsel %vm1816, %v1788, %v1172
        %v1822 = vsel %vm1816, %v1789, %v1174
        %v1823 = vsel %vm1816, %v1790, %v1176
        %v1824 = vsel %vm1816, %v1791, %v1178
        %v1825 = vsel %vm1816, %v1792, %v1180
        %v1826 = vsel %vm1816, %v1793, %v1182
        %v1827 = vsel %vm1816, %v1794, %v1184
        %v1828 = vsel %vm1816, %v1795, %v1186
        %v1829 = vsel %vm1816, %v1796, %v1188
        %v1830 = vsel %vm1816, %v1797, %v1190
        %v1831 = vsel %vm1816, %v1798, %v1192
        %v1832 = vsel %vm1816, %v1799, %v1194
        %v1833 = vsel %vm1816, %v1800, %v1196
        %v1834 = vsel %vm1816, %v1801, %v1198
        %v1835 = vsel %vm1816, %v1802, %v1200
        %v1836 = vsel %vm1816, %v1803, %v1202
        %v1837 = vsel %vm1816, %v1804, %v1204
        %v1838 = vsel %vm1816, %v1805, %v1206
        %v1839 = vsel %vm1816, %v1806, %v1208
        %v1840 = vsel %vm1816, %v1807, %v1210
        %v1841 = vsel %vm1816, %v1808, %v1212
        %v1842 = vsel %vm1816, %v1809, %v1214
        %v1843 = vsel %vm1816, %v1810, %v1216
        %v1844 = vsel %vm1816, %v1811, %v1218
        %v1845 = vsel %vm1816, %v1812, %v1220
        %v1846 = vsel %vm1816, %v1813, %v1222
        %v1847 = vsel %vm1816, %v1814, %v1224
        %v1848 = vsel %vm1816, %v1815, %v1226
        %vm1849 = vcmask 130048
        %v1850 = vsel %vm1849, %v1817, %v1266
        %v1851 = vsel %vm1849, %v1818, %v1268
        %v1852 = vsel %vm1849, %v1819, %v1270
        %v1853 = vsel %vm1849, %v1820, %v1272
        %v1854 = vsel %vm1849, %v1821, %v1274
        %v1855 = vsel %vm1849, %v1822, %v1276
        %v1856 = vsel %vm1849, %v1823, %v1278
        %v1857 = vsel %vm1849, %v1824, %v1280
        %v1858 = vsel %vm1849, %v1825, %v1282
        %v1859 = vsel %vm1849, %v1826, %v1284
        %v1860 = vsel %vm1849, %v1827, %v1286
        %v1861 = vsel %vm1849, %v1828, %v1288
        %v1862 = vsel %vm1849, %v1829, %v1290
        %v1863 = vsel %vm1849, %v1830, %v1292
        %v1864 = vsel %vm1849, %v1831, %v1294
        %v1865 = vsel %vm1849, %v1832, %v1296
        %v1866 = vsel %vm1849, %v1833, %v1298
        %v1867 = vsel %vm1849, %v1834, %v1300
        %v1868 = vsel %vm1849, %v1835, %v1302
        %v1869 = vsel %vm1849, %v1836, %v1304
        %v1870 = vsel %vm1849, %v1837, %v1306
        %v1871 = vsel %vm1849, %v1838, %v1308
        %v1872 = vsel %vm1849, %v1839, %v1310
        %v1873 = vsel %vm1849, %v1840, %v1312
        %v1874 = vsel %vm1849, %v1841, %v1314
        %v1875 = vsel %vm1849, %v1842, %v1316
        %v1876 = vsel %vm1849, %v1843, %v1318
        %v1877 = vsel %vm1849, %v1844, %v1320
        %v1878 = vsel %vm1849, %v1845, %v1322
        %v1879 = vsel %vm1849, %v1846, %v1324
        %v1880 = vsel %vm1849, %v1847, %v1326
        %v1881 = vsel %vm1849, %v1848, %v1328
        %vm1882 = vcmask 162816
        %v1883 = vsel %vm1882, %v1850, %v1367
        %v1884 = vsel %vm1882, %v1851, %v1369
        %v1885 = vsel %vm1882, %v1852, %v1371
        %v1886 = vsel %vm1882, %v1853, %v1373
        %v1887 = vsel %vm1882, %v1854, %v1375
        %v1888 = vsel %vm1882, %v1855, %v1377
        %v1889 = vsel %vm1882, %v1856, %v1379
        %v1890 = vsel %vm1882, %v1857, %v1381
        %v1891 = vsel %vm1882, %v1858, %v1383
        %v1892 = vsel %vm1882, %v1859, %v1385
        %v1893 = vsel %vm1882, %v1860, %v1387
        %v1894 = vsel %vm1882, %v1861, %v1389
        %v1895 = vsel %vm1882, %v1862, %v1391
        %v1896 = vsel %vm1882, %v1863, %v1393
        %v1897 = vsel %vm1882, %v1864, %v1395
        %v1898 = vsel %vm1882, %v1865, %v1397
        %v1899 = vsel %vm1882, %v1866, %v1399
        %v1900 = vsel %vm1882, %v1867, %v1401
        %v1901 = vsel %vm1882, %v1868, %v1403
        %v1902 = vsel %vm1882, %v1869, %v1405
        %v1903 = vsel %vm1882, %v1870, %v1407
        %v1904 = vsel %vm1882, %v1871, %v1409
        %v1905 = vsel %vm1882, %v1872, %v1411
        %v1906 = vsel %vm1882, %v1873, %v1413
        %v1907 = vsel %vm1882, %v1874, %v1415
        %v1908 = vsel %vm1882, %v1875, %v1417
        %v1909 = vsel %vm1882, %v1876, %v1419
        %v1910 = vsel %vm1882, %v1877, %v1421
        %v1911 = vsel %vm1882, %v1878, %v1423
        %v1912 = vsel %vm1882, %v1879, %v1425
        %v1913 = vsel %vm1882, %v1880, %v1427
        %v1914 = vsel %vm1882, %v1881, %v1429
        %vm1915 = vcmask 195584
        %v1916 = vsel %vm1915, %v1883, %v1463
        %v1917 = vsel %vm1915, %v1884, %v1465
        %v1918 = vsel %vm1915, %v1885, %v1467
        %v1919 = vsel %vm1915, %v1886, %v1469
        %v1920 = vsel %vm1915, %v1887, %v1471
        %v1921 = vsel %vm1915, %v1888, %v1473
        %v1922 = vsel %vm1915, %v1889, %v1475
        %v1923 = vsel %vm1915, %v1890, %v1477
        %v1924 = vsel %vm1915, %v1891, %v1479
        %v1925 = vsel %vm1915, %v1892, %v1481
        %v1926 = vsel %vm1915, %v1893, %v1483
        %v1927 = vsel %vm1915, %v1894, %v1485
        %v1928 = vsel %vm1915, %v1895, %v1487
        %v1929 = vsel %vm1915, %v1896, %v1489
        %v1930 = vsel %vm1915, %v1897, %v1491
        %v1931 = vsel %vm1915, %v1898, %v1493
        %v1932 = vsel %vm1915, %v1899, %v1495
        %v1933 = vsel %vm1915, %v1900, %v1497
        %v1934 = vsel %vm1915, %v1901, %v1499
        %v1935 = vsel %vm1915, %v1902, %v1501
        %v1936 = vsel %vm1915, %v1903, %v1503
        %v1937 = vsel %vm1915, %v1904, %v1505
        %v1938 = vsel %vm1915, %v1905, %v1507
        %v1939 = vsel %vm1915, %v1906, %v1509
        %v1940 = vsel %vm1915, %v1907, %v1511
        %v1941 = vsel %vm1915, %v1908, %v1513
        %v1942 = vsel %vm1915, %v1909, %v1515
        %v1943 = vsel %vm1915, %v1910, %v1517
        %v1944 = vsel %vm1915, %v1911, %v1519
        %v1945 = vsel %vm1915, %v1912, %v1521
        %v1946 = vsel %vm1915, %v1913, %v1523
        %v1947 = vsel %vm1915, %v1914, %v1525
        %vm1948 = vcmask 228352
        %v1949 = vsel %vm1948, %v1916, %v1559
        %v1950 = vsel %vm1948, %v1917, %v1561
        %v1951 = vsel %vm1948, %v1918, %v1563
        %v1952 = vsel %vm1948, %v1919, %v1565
        %v1953 = vsel %vm1948, %v1920, %v1567
        %v1954 = vsel %vm1948, %v1921, %v1569
        %v1955 = vsel %vm1948, %v1922, %v1571
        %v1956 = vsel %vm1948, %v1923, %v1573
        %v1957 = vsel %vm1948, %v1924, %v1575
        %v1958 = vsel %vm1948, %v1925, %v1577
        %v1959 = vsel %vm1948, %v1926, %v1579
        %v1960 = vsel %vm1948, %v1927, %v1581
        %v1961 = vsel %vm1948, %v1928, %v1583
        %v1962 = vsel %vm1948, %v1929, %v1585
        %v1963 = vsel %vm1948, %v1930, %v1587
        %v1964 = vsel %vm1948, %v1931, %v1589
        %v1965 = vsel %vm1948, %v1932, %v1591
        %v1966 = vsel %vm1948, %v1933, %v1593
        %v1967 = vsel %vm1948, %v1934, %v1595
        %v1968 = vsel %vm1948, %v1935, %v1597
        %v1969 = vsel %vm1948, %v1936, %v1599
        %v1970 = vsel %vm1948, %v1937, %v1601
        %v1971 = vsel %vm1948, %v1938, %v1603
        %v1972 = vsel %vm1948, %v1939, %v1605
        %v1973 = vsel %vm1948, %v1940, %v1607
        %v1974 = vsel %vm1948, %v1941, %v1609
        %v1975 = vsel %vm1948, %v1942, %v1611
        %v1976 = vsel %vm1948, %v1943, %v1613
        %v1977 = vsel %vm1948, %v1944, %v1615
        %v1978 = vsel %vm1948, %v1945, %v1617
        %v1979 = vsel %vm1948, %v1946, %v1619
        %v1980 = vsel %vm1948, %v1947, %v1621
        %vm1981 = vcmask 261120
        %v1982 = vsel %vm1981, %v1949, %v1655
        %v1983 = vsel %vm1981, %v1950, %v1657
        %v1984 = vsel %vm1981, %v1951, %v1659
        %v1985 = vsel %vm1981, %v1952, %v1661
        %v1986 = vsel %vm1981, %v1953, %v1663
        %v1987 = vsel %vm1981, %v1954, %v1665
        %v1988 = vsel %vm1981, %v1955, %v1667
        %v1989 = vsel %vm1981, %v1956, %v1669
        %v1990 = vsel %vm1981, %v1957, %v1671
        %v1991 = vsel %vm1981, %v1958, %v1673
        %v1992 = vsel %vm1981, %v1959, %v1675
        %v1993 = vsel %vm1981, %v1960, %v1677
        %v1994 = vsel %vm1981, %v1961, %v1679
        %v1995 = vsel %vm1981, %v1962, %v1681
        %v1996 = vsel %vm1981, %v1963, %v1683
        %v1997 = vsel %vm1981, %v1964, %v1685
        %v1998 = vsel %vm1981, %v1965, %v1687
        %v1999 = vsel %vm1981, %v1966, %v1689
        %v2000 = vsel %vm1981, %v1967, %v1691
        %v2001 = vsel %vm1981, %v1968, %v1693
        %v2002 = vsel %vm1981, %v1969, %v1695
        %v2003 = vsel %vm1981, %v1970, %v1697
        %v2004 = vsel %vm1981, %v1971, %v1699
        %v2005 = vsel %vm1981, %v1972, %v1701
        %v2006 = vsel %vm1981, %v1973, %v1703
        %v2007 = vsel %vm1981, %v1974, %v1705
        %v2008 = vsel %vm1981, %v1975, %v1707
        %v2009 = vsel %vm1981, %v1976, %v1709
        %v2010 = vsel %vm1981, %v1977, %v1711
        %v2011 = vsel %vm1981, %v1978, %v1713
        %v2012 = vsel %vm1981, %v1979, %v1715
        %v2013 = vsel %vm1981, %v1980, %v1717
        %v2014 = vpack.c.bf16 %v1983, %v1982
        %v2015 = vpack.c.bf16 %v1985, %v1984
        %v2016 = vpack.c.bf16 %v1987, %v1986
        %v2017 = vpack.c.bf16 %v1989, %v1988
        %v2018 = vpack.c.bf16 %v1991, %v1990
        %v2019 = vpack.c.bf16 %v1993, %v1992
        %v2020 = vpack.c.bf16 %v1995, %v1994
        %v2021 = vpack.c.bf16 %v1997, %v1996
        %v2022 = vpack.c.bf16 %v1999, %v1998
        %v2023 = vpack.c.bf16 %v2001, %v2000
        %v2024 = vpack.c.bf16 %v2003, %v2002
        %v2025 = vpack.c.bf16 %v2005, %v2004
        %v2026 = vpack.c.bf16 %v2007, %v2006
        %v2027 = vpack.c.bf16 %v2009, %v2008
        %v2028 = vpack.c.bf16 %v2011, %v2010
        %v2029 = vpack.c.bf16 %v2013, %v2012
        %v2030 = vld [vmem:[%s3] sm:$0xff]
        %v2031 = vld [vmem:[%s3 + $0x8] sm:$0xff]
        %v2032 = vld [vmem:[%s3 + $0x10] sm:$0xff]
        %v2033 = vld [vmem:[%s3 + $0x18] sm:$0xff]
        %v2034 = vld [vmem:[%s3 + $0x20] sm:$0xf]
        %v2035 = vpack.c.bf16 %v2031, %v2030
        %v2036 = vpack.c.bf16 %v2033, %v2032
        %v2037 = vpack.c.bf16 %v2034, %v2034
        %vm2038 = vcmask 293888
        %v2040 = vsel %vm2038, %v2014, 0
        %v2043 = vsel %vm2038, %v2015, 0
        %v2046 = vsel %vm2038, %v2016, 0
        %v2049 = vsel %vm2038, %v2017, 0
        %v2052 = vsel %vm2038, %v2018, 0
        %v2055 = vsel %vm2038, %v2019, 0
        %v2058 = vsel %vm2038, %v2020, 0
        %v2061 = vsel %vm2038, %v2021, 0
        %v2064 = vsel %vm2038, %v2022, 0
        %v2067 = vsel %vm2038, %v2023, 0
        %v2070 = vsel %vm2038, %v2024, 0
        %v2073 = vsel %vm2038, %v2025, 0
        %v2076 = vsel %vm2038, %v2026, 0
        %v2079 = vsel %vm2038, %v2027, 0
        %v2082 = vsel %vm2038, %v2028, 0
        %v2085 = vsel %vm2038, %v2029, 0
        %vm2087 = vcmask 1041408
        %v2089 = vsel %vm2087, %v2037, 0
        %2091 = vmatprep.subr.bf16.mxu0 0
        %2092 = vmatpush1.bf16.msra.mxu0 0
        %2093 = vmatprep.subr.bf16.mxu0 0
        %2094 = vmatpush1.bf16.msra.mxu0 0
        %2095 = vmatprep.subr.bf16.mxu0 0
        %2096 = vmatpush1.bf16.msra.mxu0 0
        %2097 = vmatprep.subr.bf16.mxu0 0
        %2098 = vmatpush1.bf16.msra.mxu0 0
        %2099 = vmatprep.subr.bf16.mxu0 0
        %2100 = vmatpush1.bf16.msra.mxu0 0
        %2101 = vmatprep.subr.bf16.mxu0 0
        %2102 = vmatpush1.bf16.msra.mxu0 %v2089
        %2103 = vmatprep.subr.bf16.mxu0 0
        %2104 = vmatpush1.bf16.msra.mxu0 %v2036
        %2105 = vmatprep.subr.bf16.mxu0 0
        %2106 = vmatpush1.bf16.msra.mxu0 %v2035
        %2107 = vmatprep.subr.bf16.mxu0 0
        %2108 = vmatpush2.bf16.msra.mxu0 0
        %2109 = vmatprep.subr.bf16.mxu0 0
        %2110 = vmatpush2.bf16.msra.mxu0 0
        %2111 = vmatprep.subr.bf16.mxu0 0
        %2112 = vmatpush2.bf16.msra.mxu0 0
        %2113 = vmatprep.subr.bf16.mxu0 0
        %2114 = vmatpush2.bf16.msra.mxu0 0
        %2115 = vmatprep.subr.bf16.mxu0 0
        %2116 = vmatpush2.bf16.msra.mxu0 0
        %2117 = vmatprep.subr.bf16.mxu0 0
        %2118 = vmatpush2.bf16.msra.mxu0 0
        %2119 = vmatprep.subr.bf16.mxu0 0
        %2120 = vmatpush2.bf16.msra.mxu0 0
        %2121 = vmatprep.subr.bf16.mxu0 0
        %2122 = vmatpush2.bf16.msra.mxu0 0
        %2123 = vmatprep.mubr.bf16.mxu0 0
        %2124 = vmatmul.mubr.bf16.gmra.mxu0 %v2040
        %v2125 = vpop.f32.mrf.mxu0
        %v2126 = vadd.f32 0.0, %v2125
        %v2127 = vpop.f32.mrf.mxu0
        %v2128 = vpop.f32.mrf.mxu0
        %v2129 = vadd.f32 0.0, %v2128
        %v2130 = vpop.f32.mrf.mxu0
        %2131 = vmatprep.mubr.bf16.mxu0 0
        %2132 = vmatmul.mubr.bf16.gmra.mxu0 %v2043
        %v2133 = vpop.f32.mrf.mxu0
        %v2134 = vadd.f32 0.0, %v2133
        %v2135 = vpop.f32.mrf.mxu0
        %v2136 = vpop.f32.mrf.mxu0
        %v2137 = vadd.f32 0.0, %v2136
        %v2138 = vpop.f32.mrf.mxu0
        %2139 = vmatprep.mubr.bf16.mxu0 0
        %2140 = vmatmul.mubr.bf16.gmra.mxu0 %v2046
        %v2141 = vpop.f32.mrf.mxu0
        %v2142 = vadd.f32 0.0, %v2141
        %v2143 = vpop.f32.mrf.mxu0
        %v2144 = vpop.f32.mrf.mxu0
        %v2145 = vadd.f32 0.0, %v2144
        %v2146 = vpop.f32.mrf.mxu0
        %2147 = vmatprep.mubr.bf16.mxu0 0
        %2148 = vmatmul.mubr.bf16.gmra.mxu0 %v2049
        %v2149 = vpop.f32.mrf.mxu0
        %v2150 = vadd.f32 0.0, %v2149
        %v2151 = vpop.f32.mrf.mxu0
        %v2152 = vpop.f32.mrf.mxu0
        %v2153 = vadd.f32 0.0, %v2152
        %v2154 = vpop.f32.mrf.mxu0
        %2155 = vmatprep.mubr.bf16.mxu0 0
        %2156 = vmatmul.mubr.bf16.gmra.mxu0 %v2052
        %v2157 = vpop.f32.mrf.mxu0
        %v2158 = vadd.f32 0.0, %v2157
        %v2159 = vpop.f32.mrf.mxu0
        %v2160 = vpop.f32.mrf.mxu0
        %v2161 = vadd.f32 0.0, %v2160
        %v2162 = vpop.f32.mrf.mxu0
        %2163 = vmatprep.mubr.bf16.mxu0 0
        %2164 = vmatmul.mubr.bf16.gmra.mxu0 %v2055
        %v2165 = vpop.f32.mrf.mxu0
        %v2166 = vadd.f32 0.0, %v2165
        %v2167 = vpop.f32.mrf.mxu0
        %v2168 = vpop.f32.mrf.mxu0
        %v2169 = vadd.f32 0.0, %v2168
        %v2170 = vpop.f32.mrf.mxu0
        %2171 = vmatprep.mubr.bf16.mxu0 0
        %2172 = vmatmul.mubr.bf16.gmra.mxu0 %v2058
        %v2173 = vpop.f32.mrf.mxu0
        %v2174 = vadd.f32 0.0, %v2173
        %v2175 = vpop.f32.mrf.mxu0
        %v2176 = vpop.f32.mrf.mxu0
        %v2177 = vadd.f32 0.0, %v2176
        %v2178 = vpop.f32.mrf.mxu0
        %2179 = vmatprep.mubr.bf16.mxu0 0
        %2180 = vmatmul.mubr.bf16.gmra.mxu0 %v2061
        %v2181 = vpop.f32.mrf.mxu0
        %v2182 = vadd.f32 0.0, %v2181
        %v2183 = vpop.f32.mrf.mxu0
        %v2184 = vpop.f32.mrf.mxu0
        %v2185 = vadd.f32 0.0, %v2184
        %v2186 = vpop.f32.mrf.mxu0
        %2187 = vmatprep.mubr.bf16.mxu0 0
        %2188 = vmatmul.mubr.bf16.gmra.mxu0 %v2064
        %v2189 = vpop.f32.mrf.mxu0
        %v2190 = vadd.f32 0.0, %v2189
        %v2191 = vpop.f32.mrf.mxu0
        %v2192 = vpop.f32.mrf.mxu0
        %v2193 = vadd.f32 0.0, %v2192
        %v2194 = vpop.f32.mrf.mxu0
        %2195 = vmatprep.mubr.bf16.mxu0 0
        %2196 = vmatmul.mubr.bf16.gmra.mxu0 %v2067
        %v2197 = vpop.f32.mrf.mxu0
        %v2198 = vadd.f32 0.0, %v2197
        %v2199 = vpop.f32.mrf.mxu0
        %v2200 = vpop.f32.mrf.mxu0
        %v2201 = vadd.f32 0.0, %v2200
        %v2202 = vpop.f32.mrf.mxu0
        %2203 = vmatprep.mubr.bf16.mxu0 0
        %2204 = vmatmul.mubr.bf16.gmra.mxu0 %v2070
        %v2205 = vpop.f32.mrf.mxu0
        %v2206 = vadd.f32 0.0, %v2205
        %v2207 = vpop.f32.mrf.mxu0
        %v2208 = vpop.f32.mrf.mxu0
        %v2209 = vadd.f32 0.0, %v2208
        %v2210 = vpop.f32.mrf.mxu0
        %2211 = vmatprep.mubr.bf16.mxu0 0
        %2212 = vmatmul.mubr.bf16.gmra.mxu0 %v2073
        %v2213 = vpop.f32.mrf.mxu0
        %v2214 = vadd.f32 0.0, %v2213
        %v2215 = vpop.f32.mrf.mxu0
        %v2216 = vpop.f32.mrf.mxu0
        %v2217 = vadd.f32 0.0, %v2216
        %v2218 = vpop.f32.mrf.mxu0
        %2219 = vmatprep.mubr.bf16.mxu0 0
        %2220 = vmatmul.mubr.bf16.gmra.mxu0 %v2076
        %v2221 = vpop.f32.mrf.mxu0
        %v2222 = vadd.f32 0.0, %v2221
        %v2223 = vpop.f32.mrf.mxu0
        %v2224 = vpop.f32.mrf.mxu0
        %v2225 = vadd.f32 0.0, %v2224
        %v2226 = vpop.f32.mrf.mxu0
        %2227 = vmatprep.mubr.bf16.mxu0 0
        %2228 = vmatmul.mubr.bf16.gmra.mxu0 %v2079
        %v2229 = vpop.f32.mrf.mxu0
        %v2230 = vadd.f32 0.0, %v2229
        %v2231 = vpop.f32.mrf.mxu0
        %v2232 = vpop.f32.mrf.mxu0
        %v2233 = vadd.f32 0.0, %v2232
        %v2234 = vpop.f32.mrf.mxu0
        %2235 = vmatprep.mubr.bf16.mxu0 0
        %2236 = vmatmul.mubr.bf16.gmra.mxu0 %v2082
        %v2237 = vpop.f32.mrf.mxu0
        %v2238 = vadd.f32 0.0, %v2237
        %v2239 = vpop.f32.mrf.mxu0
        %v2240 = vpop.f32.mrf.mxu0
        %v2241 = vadd.f32 0.0, %v2240
        %v2242 = vpop.f32.mrf.mxu0
        %2243 = vmatprep.mubr.bf16.mxu0 0
        %2244 = vmatmul.mubr.bf16.gmra.mxu0 %v2085
        %v2245 = vpop.f32.mrf.mxu0
        %v2246 = vadd.f32 0.0, %v2245
        %v2247 = vpop.f32.mrf.mxu0
        %v2248 = vpop.f32.mrf.mxu0
        %v2249 = vadd.f32 0.0, %v2248
        %v2250 = vpop.f32.mrf.mxu0
        %2251 = vdwg.mxu0
        %v2252 = vld [vmem:[%s4] sm:$0x1]
        %v2254 = vlaneseq
        %v2255 = vshrl.u32 %v2254, 7
        %v2256 = vsub.s32 0, %v2255
        %v2257 = vrot.slane %v2252, %v2256
        %v2259 = vmul.f32 %v2126, %v2257
        %v2260 = vmul.f32 %v2129, %v2257
        %v2261 = vmul.f32 %v2134, %v2257
        %v2262 = vmul.f32 %v2137, %v2257
        %v2263 = vmul.f32 %v2142, %v2257
        %v2264 = vmul.f32 %v2145, %v2257
        %v2265 = vmul.f32 %v2150, %v2257
        %v2266 = vmul.f32 %v2153, %v2257
        %v2267 = vmul.f32 %v2158, %v2257
        %v2268 = vmul.f32 %v2161, %v2257
        %v2269 = vmul.f32 %v2166, %v2257
        %v2270 = vmul.f32 %v2169, %v2257
        %v2271 = vmul.f32 %v2174, %v2257
        %v2272 = vmul.f32 %v2177, %v2257
        %v2273 = vmul.f32 %v2182, %v2257
        %v2274 = vmul.f32 %v2185, %v2257
        %v2275 = vmul.f32 %v2190, %v2257
        %v2276 = vmul.f32 %v2193, %v2257
        %v2277 = vmul.f32 %v2198, %v2257
        %v2278 = vmul.f32 %v2201, %v2257
        %v2279 = vmul.f32 %v2206, %v2257
        %v2280 = vmul.f32 %v2209, %v2257
        %v2281 = vmul.f32 %v2214, %v2257
        %v2282 = vmul.f32 %v2217, %v2257
        %v2283 = vmul.f32 %v2222, %v2257
        %v2284 = vmul.f32 %v2225, %v2257
        %v2285 = vmul.f32 %v2230, %v2257
        %v2286 = vmul.f32 %v2233, %v2257
        %v2287 = vmul.f32 %v2238, %v2257
        %v2288 = vmul.f32 %v2241, %v2257
        %v2289 = vmul.f32 %v2246, %v2257
        %v2290 = vmul.f32 %v2249, %v2257
        %v2291 = vld [vmem:[%s5] sm:$0x1]
        %v2293 = vlaneseq
        %v2294 = vshrl.u32 %v2293, 7
        %v2295 = vsub.s32 0, %v2294
        %v2296 = vrot.slane %v2291, %v2295
        %v2298 = vadd.f32 %v2259, %v2296
        %v2299 = vadd.f32 %v2260, %v2296
        %v2300 = vadd.f32 %v2261, %v2296
        %v2301 = vadd.f32 %v2262, %v2296
        %v2302 = vadd.f32 %v2263, %v2296
        %v2303 = vadd.f32 %v2264, %v2296
        %v2304 = vadd.f32 %v2265, %v2296
        %v2305 = vadd.f32 %v2266, %v2296
        %v2306 = vadd.f32 %v2267, %v2296
        %v2307 = vadd.f32 %v2268, %v2296
        %v2308 = vadd.f32 %v2269, %v2296
        %v2309 = vadd.f32 %v2270, %v2296
        %v2310 = vadd.f32 %v2271, %v2296
        %v2311 = vadd.f32 %v2272, %v2296
        %v2312 = vadd.f32 %v2273, %v2296
        %v2313 = vadd.f32 %v2274, %v2296
        %v2314 = vadd.f32 %v2275, %v2296
        %v2315 = vadd.f32 %v2276, %v2296
        %v2316 = vadd.f32 %v2277, %v2296
        %v2317 = vadd.f32 %v2278, %v2296
        %v2318 = vadd.f32 %v2279, %v2296
        %v2319 = vadd.f32 %v2280, %v2296
        %v2320 = vadd.f32 %v2281, %v2296
        %v2321 = vadd.f32 %v2282, %v2296
        %v2322 = vadd.f32 %v2283, %v2296
        %v2323 = vadd.f32 %v2284, %v2296
        %v2324 = vadd.f32 %v2285, %v2296
        %v2325 = vadd.f32 %v2286, %v2296
        %v2326 = vadd.f32 %v2287, %v2296
        %v2327 = vadd.f32 %v2288, %v2296
        %v2328 = vadd.f32 %v2289, %v2296
        %v2329 = vadd.f32 %v2290, %v2296
        %v2330 = vmax.f32 %v2298, 0.0
        %v2331 = vmax.f32 %v2299, 0.0
        %v2332 = vmax.f32 %v2300, 0.0
        %v2333 = vmax.f32 %v2301, 0.0
        %v2334 = vmax.f32 %v2302, 0.0
        %v2335 = vmax.f32 %v2303, 0.0
        %v2336 = vmax.f32 %v2304, 0.0
        %v2337 = vmax.f32 %v2305, 0.0
        %v2338 = vmax.f32 %v2306, 0.0
        %v2339 = vmax.f32 %v2307, 0.0
        %v2340 = vmax.f32 %v2308, 0.0
        %v2341 = vmax.f32 %v2309, 0.0
        %v2342 = vmax.f32 %v2310, 0.0
        %v2343 = vmax.f32 %v2311, 0.0
        %v2344 = vmax.f32 %v2312, 0.0
        %v2345 = vmax.f32 %v2313, 0.0
        %v2346 = vmax.f32 %v2314, 0.0
        %v2347 = vmax.f32 %v2315, 0.0
        %v2348 = vmax.f32 %v2316, 0.0
        %v2349 = vmax.f32 %v2317, 0.0
        %v2350 = vmax.f32 %v2318, 0.0
        %v2351 = vmax.f32 %v2319, 0.0
        %v2352 = vmax.f32 %v2320, 0.0
        %v2353 = vmax.f32 %v2321, 0.0
        %v2354 = vmax.f32 %v2322, 0.0
        %v2355 = vmax.f32 %v2323, 0.0
        %v2356 = vmax.f32 %v2324, 0.0
        %v2357 = vmax.f32 %v2325, 0.0
        %v2358 = vmax.f32 %v2326, 0.0
        %v2359 = vmax.f32 %v2327, 0.0
        %v2360 = vmax.f32 %v2328, 0.0
        %v2361 = vmax.f32 %v2329, 0.0
        %v2362 = vpack.c.bf16 %v2331, %v2330
        %v2363 = vpack.c.bf16 %v2333, %v2332
        %v2364 = vpack.c.bf16 %v2335, %v2334
        %v2365 = vpack.c.bf16 %v2337, %v2336
        %v2366 = vpack.c.bf16 %v2339, %v2338
        %v2367 = vpack.c.bf16 %v2341, %v2340
        %v2368 = vpack.c.bf16 %v2343, %v2342
        %v2369 = vpack.c.bf16 %v2345, %v2344
        %v2370 = vpack.c.bf16 %v2347, %v2346
        %v2371 = vpack.c.bf16 %v2349, %v2348
        %v2372 = vpack.c.bf16 %v2351, %v2350
        %v2373 = vpack.c.bf16 %v2353, %v2352
        %v2374 = vpack.c.bf16 %v2355, %v2354
        %v2375 = vpack.c.bf16 %v2357, %v2356
        %v2376 = vpack.c.bf16 %v2359, %v2358
        %v2377 = vpack.c.bf16 %v2361, %v2360
        %v2378 = vld [vmem:[%s6] sm:$0xff]
        %v2379 = vpack.c.bf16 %v2378, %v2378
        %v2381 = vsel %vm1783, %v2362, 0
        %v2384 = vsel %vm1783, %v2363, 0
        %v2387 = vsel %vm1783, %v2364, 0
        %v2390 = vsel %vm1783, %v2365, 0
        %v2393 = vsel %vm1783, %v2366, 0
        %v2396 = vsel %vm1783, %v2367, 0
        %v2399 = vsel %vm1783, %v2368, 0
        %v2402 = vsel %vm1783, %v2369, 0
        %v2405 = vsel %vm1783, %v2370, 0
        %v2408 = vsel %vm1783, %v2371, 0
        %v2411 = vsel %vm1783, %v2372, 0
        %v2414 = vsel %vm1783, %v2373, 0
        %v2417 = vsel %vm1783, %v2374, 0
        %v2420 = vsel %vm1783, %v2375, 0
        %v2423 = vsel %vm1783, %v2376, 0
        %v2426 = vsel %vm1783, %v2377, 0
        %vm2428 = vcmask 1043456
        %v2430 = vsel %vm2428, %v2379, 0
        %2432 = vmatprep.subr.bf16.mxu0 0
        %2433 = vmatpush1.bf16.msra.mxu0 0
        %2434 = vmatprep.subr.bf16.mxu0 0
        %2435 = vmatpush1.bf16.msra.mxu0 0
        %2436 = vmatprep.subr.bf16.mxu0 0
        %2437 = vmatpush1.bf16.msra.mxu0 0
        %2438 = vmatprep.subr.bf16.mxu0 0
        %2439 = vmatpush1.bf16.msra.mxu0 0
        %2440 = vmatprep.subr.bf16.mxu0 0
        %2441 = vmatpush1.bf16.msra.mxu0 0
        %2442 = vmatprep.subr.bf16.mxu0 0
        %2443 = vmatpush1.bf16.msra.mxu0 0
        %2444 = vmatprep.subr.bf16.mxu0 0
        %2445 = vmatpush1.bf16.msra.mxu0 0
        %2446 = vmatprep.subr.bf16.mxu0 0
        %2447 = vmatpush1.bf16.msra.mxu0 %v2430
        %2448 = vmatprep.subr.bf16.mxu0 0
        %2449 = vmatpush2.bf16.msra.mxu0 0
        %2450 = vmatprep.subr.bf16.mxu0 0
        %2451 = vmatpush2.bf16.msra.mxu0 0
        %2452 = vmatprep.subr.bf16.mxu0 0
        %2453 = vmatpush2.bf16.msra.mxu0 0
        %2454 = vmatprep.subr.bf16.mxu0 0
        %2455 = vmatpush2.bf16.msra.mxu0 0
        %2456 = vmatprep.subr.bf16.mxu0 0
        %2457 = vmatpush2.bf16.msra.mxu0 0
        %2458 = vmatprep.subr.bf16.mxu0 0
        %2459 = vmatpush2.bf16.msra.mxu0 0
        %2460 = vmatprep.subr.bf16.mxu0 0
        %2461 = vmatpush2.bf16.msra.mxu0 0
        %2462 = vmatprep.subr.bf16.mxu0 0
        %2463 = vmatpush2.bf16.msra.mxu0 0
        %2464 = vmatprep.mubr.bf16.mxu0 0
        %2465 = vmatmul.mubr.bf16.gmra.mxu0 %v2381
        %v2466 = vpop.f32.mrf.mxu0
        %v2467 = vadd.f32 0.0, %v2466
        %v2468 = vpop.f32.mrf.mxu0
        %v2469 = vpop.f32.mrf.mxu0
        %v2470 = vadd.f32 0.0, %v2469
        %v2471 = vpop.f32.mrf.mxu0
        %2472 = vmatprep.mubr.bf16.mxu0 0
        %2473 = vmatmul.mubr.bf16.gmra.mxu0 %v2384
        %v2474 = vpop.f32.mrf.mxu0
        %v2475 = vadd.f32 0.0, %v2474
        %v2476 = vpop.f32.mrf.mxu0
        %v2477 = vpop.f32.mrf.mxu0
        %v2478 = vadd.f32 0.0, %v2477
        %v2479 = vpop.f32.mrf.mxu0
        %2480 = vmatprep.mubr.bf16.mxu0 0
        %2481 = vmatmul.mubr.bf16.gmra.mxu0 %v2387
        %v2482 = vpop.f32.mrf.mxu0
        %v2483 = vadd.f32 0.0, %v2482
        %v2484 = vpop.f32.mrf.mxu0
        %v2485 = vpop.f32.mrf.mxu0
        %v2486 = vadd.f32 0.0, %v2485
        %v2487 = vpop.f32.mrf.mxu0
        %2488 = vmatprep.mubr.bf16.mxu0 0
        %2489 = vmatmul.mubr.bf16.gmra.mxu0 %v2390
        %v2490 = vpop.f32.mrf.mxu0
        %v2491 = vadd.f32 0.0, %v2490
        %v2492 = vpop.f32.mrf.mxu0
        %v2493 = vpop.f32.mrf.mxu0
        %v2494 = vadd.f32 0.0, %v2493
        %v2495 = vpop.f32.mrf.mxu0
        %2496 = vmatprep.mubr.bf16.mxu0 0
        %2497 = vmatmul.mubr.bf16.gmra.mxu0 %v2393
        %v2498 = vpop.f32.mrf.mxu0
        %v2499 = vadd.f32 0.0, %v2498
        %v2500 = vpop.f32.mrf.mxu0
        %v2501 = vpop.f32.mrf.mxu0
        %v2502 = vadd.f32 0.0, %v2501
        %v2503 = vpop.f32.mrf.mxu0
        %2504 = vmatprep.mubr.bf16.mxu0 0
        %2505 = vmatmul.mubr.bf16.gmra.mxu0 %v2396
        %v2506 = vpop.f32.mrf.mxu0
        %v2507 = vadd.f32 0.0, %v2506
        %v2508 = vpop.f32.mrf.mxu0
        %v2509 = vpop.f32.mrf.mxu0
        %v2510 = vadd.f32 0.0, %v2509
        %v2511 = vpop.f32.mrf.mxu0
        %2512 = vmatprep.mubr.bf16.mxu0 0
        %2513 = vmatmul.mubr.bf16.gmra.mxu0 %v2399
        %v2514 = vpop.f32.mrf.mxu0
        %v2515 = vadd.f32 0.0, %v2514
        %v2516 = vpop.f32.mrf.mxu0
        %v2517 = vpop.f32.mrf.mxu0
        %v2518 = vadd.f32 0.0, %v2517
        %v2519 = vpop.f32.mrf.mxu0
        %2520 = vmatprep.mubr.bf16.mxu0 0
        %2521 = vmatmul.mubr.bf16.gmra.mxu0 %v2402
        %v2522 = vpop.f32.mrf.mxu0
        %v2523 = vadd.f32 0.0, %v2522
        %v2524 = vpop.f32.mrf.mxu0
        %v2525 = vpop.f32.mrf.mxu0
        %v2526 = vadd.f32 0.0, %v2525
        %v2527 = vpop.f32.mrf.mxu0
        %2528 = vmatprep.mubr.bf16.mxu0 0
        %2529 = vmatmul.mubr.bf16.gmra.mxu0 %v2405
        %v2530 = vpop.f32.mrf.mxu0
        %v2531 = vadd.f32 0.0, %v2530
        %v2532 = vpop.f32.mrf.mxu0
        %v2533 = vpop.f32.mrf.mxu0
        %v2534 = vadd.f32 0.0, %v2533
        %v2535 = vpop.f32.mrf.mxu0
        %2536 = vmatprep.mubr.bf16.mxu0 0
        %2537 = vmatmul.mubr.bf16.gmra.mxu0 %v2408
        %v2538 = vpop.f32.mrf.mxu0
        %v2539 = vadd.f32 0.0, %v2538
        %v2540 = vpop.f32.mrf.mxu0
        %v2541 = vpop.f32.mrf.mxu0
        %v2542 = vadd.f32 0.0, %v2541
        %v2543 = vpop.f32.mrf.mxu0
        %2544 = vmatprep.mubr.bf16.mxu0 0
        %2545 = vmatmul.mubr.bf16.gmra.mxu0 %v2411
        %v2546 = vpop.f32.mrf.mxu0
        %v2547 = vadd.f32 0.0, %v2546
        %v2548 = vpop.f32.mrf.mxu0
        %v2549 = vpop.f32.mrf.mxu0
        %v2550 = vadd.f32 0.0, %v2549
        %v2551 = vpop.f32.mrf.mxu0
        %2552 = vmatprep.mubr.bf16.mxu0 0
        %2553 = vmatmul.mubr.bf16.gmra.mxu0 %v2414
        %v2554 = vpop.f32.mrf.mxu0
        %v2555 = vadd.f32 0.0, %v2554
        %v2556 = vpop.f32.mrf.mxu0
        %v2557 = vpop.f32.mrf.mxu0
        %v2558 = vadd.f32 0.0, %v2557
        %v2559 = vpop.f32.mrf.mxu0
        %2560 = vmatprep.mubr.bf16.mxu0 0
        %2561 = vmatmul.mubr.bf16.gmra.mxu0 %v2417
        %v2562 = vpop.f32.mrf.mxu0
        %v2563 = vadd.f32 0.0, %v2562
        %v2564 = vpop.f32.mrf.mxu0
        %v2565 = vpop.f32.mrf.mxu0
        %v2566 = vadd.f32 0.0, %v2565
        %v2567 = vpop.f32.mrf.mxu0
        %2568 = vmatprep.mubr.bf16.mxu0 0
        %2569 = vmatmul.mubr.bf16.gmra.mxu0 %v2420
        %v2570 = vpop.f32.mrf.mxu0
        %v2571 = vadd.f32 0.0, %v2570
        %v2572 = vpop.f32.mrf.mxu0
        %v2573 = vpop.f32.mrf.mxu0
        %v2574 = vadd.f32 0.0, %v2573
        %v2575 = vpop.f32.mrf.mxu0
        %2576 = vmatprep.mubr.bf16.mxu0 0
        %2577 = vmatmul.mubr.bf16.gmra.mxu0 %v2423
        %v2578 = vpop.f32.mrf.mxu0
        %v2579 = vadd.f32 0.0, %v2578
        %v2580 = vpop.f32.mrf.mxu0
        %v2581 = vpop.f32.mrf.mxu0
        %v2582 = vadd.f32 0.0, %v2581
        %v2583 = vpop.f32.mrf.mxu0
        %2584 = vmatprep.mubr.bf16.mxu0 0
        %2585 = vmatmul.mubr.bf16.gmra.mxu0 %v2426
        %v2586 = vpop.f32.mrf.mxu0
        %v2587 = vadd.f32 0.0, %v2586
        %v2588 = vpop.f32.mrf.mxu0
        %v2589 = vpop.f32.mrf.mxu0
        %v2590 = vadd.f32 0.0, %v2589
        %v2591 = vpop.f32.mrf.mxu0
        %2592 = vdwg.mxu0
        %v2593 = vld [vmem:[%s7] sm:$0x1]
        %v2595 = vlaneseq
        %v2596 = vshrl.u32 %v2595, 7
        %v2597 = vsub.s32 0, %v2596
        %v2598 = vrot.slane %v2593, %v2597
        %v2600 = vmul.f32 %v2467, %v2598
        %v2601 = vmul.f32 %v2470, %v2598
        %v2602 = vmul.f32 %v2475, %v2598
        %v2603 = vmul.f32 %v2478, %v2598
        %v2604 = vmul.f32 %v2483, %v2598
        %v2605 = vmul.f32 %v2486, %v2598
        %v2606 = vmul.f32 %v2491, %v2598
        %v2607 = vmul.f32 %v2494, %v2598
        %v2608 = vmul.f32 %v2499, %v2598
        %v2609 = vmul.f32 %v2502, %v2598
        %v2610 = vmul.f32 %v2507, %v2598
        %v2611 = vmul.f32 %v2510, %v2598
        %v2612 = vmul.f32 %v2515, %v2598
        %v2613 = vmul.f32 %v2518, %v2598
        %v2614 = vmul.f32 %v2523, %v2598
        %v2615 = vmul.f32 %v2526, %v2598
        %v2616 = vmul.f32 %v2531, %v2598
        %v2617 = vmul.f32 %v2534, %v2598
        %v2618 = vmul.f32 %v2539, %v2598
        %v2619 = vmul.f32 %v2542, %v2598
        %v2620 = vmul.f32 %v2547, %v2598
        %v2621 = vmul.f32 %v2550, %v2598
        %v2622 = vmul.f32 %v2555, %v2598
        %v2623 = vmul.f32 %v2558, %v2598
        %v2624 = vmul.f32 %v2563, %v2598
        %v2625 = vmul.f32 %v2566, %v2598
        %v2626 = vmul.f32 %v2571, %v2598
        %v2627 = vmul.f32 %v2574, %v2598
        %v2628 = vmul.f32 %v2579, %v2598
        %v2629 = vmul.f32 %v2582, %v2598
        %v2630 = vmul.f32 %v2587, %v2598
        %v2631 = vmul.f32 %v2590, %v2598
        %v2632 = vld [vmem:[%s8] sm:$0x1]
        %v2634 = vlaneseq
        %v2635 = vshrl.u32 %v2634, 7
        %v2636 = vsub.s32 0, %v2635
        %v2637 = vrot.slane %v2632, %v2636
        %v2639 = vadd.f32 %v2600, %v2637
        %v2640 = vadd.f32 %v2601, %v2637
        %v2641 = vadd.f32 %v2602, %v2637
        %v2642 = vadd.f32 %v2603, %v2637
        %v2643 = vadd.f32 %v2604, %v2637
        %v2644 = vadd.f32 %v2605, %v2637
        %v2645 = vadd.f32 %v2606, %v2637
        %v2646 = vadd.f32 %v2607, %v2637
        %v2647 = vadd.f32 %v2608, %v2637
        %v2648 = vadd.f32 %v2609, %v2637
        %v2649 = vadd.f32 %v2610, %v2637
        %v2650 = vadd.f32 %v2611, %v2637
        %v2651 = vadd.f32 %v2612, %v2637
        %v2652 = vadd.f32 %v2613, %v2637
        %v2653 = vadd.f32 %v2614, %v2637
        %v2654 = vadd.f32 %v2615, %v2637
        %v2655 = vadd.f32 %v2616, %v2637
        %v2656 = vadd.f32 %v2617, %v2637
        %v2657 = vadd.f32 %v2618, %v2637
        %v2658 = vadd.f32 %v2619, %v2637
        %v2659 = vadd.f32 %v2620, %v2637
        %v2660 = vadd.f32 %v2621, %v2637
        %v2661 = vadd.f32 %v2622, %v2637
        %v2662 = vadd.f32 %v2623, %v2637
        %v2663 = vadd.f32 %v2624, %v2637
        %v2664 = vadd.f32 %v2625, %v2637
        %v2665 = vadd.f32 %v2626, %v2637
        %v2666 = vadd.f32 %v2627, %v2637
        %v2667 = vadd.f32 %v2628, %v2637
        %v2668 = vadd.f32 %v2629, %v2637
        %v2669 = vadd.f32 %v2630, %v2637
        %v2670 = vadd.f32 %v2631, %v2637
        %v2671 = vmax.f32 %v2639, 0.0
        %v2672 = vmax.f32 %v2640, 0.0
        %v2673 = vmax.f32 %v2641, 0.0
        %v2674 = vmax.f32 %v2642, 0.0
        %v2675 = vmax.f32 %v2643, 0.0
        %v2676 = vmax.f32 %v2644, 0.0
        %v2677 = vmax.f32 %v2645, 0.0
        %v2678 = vmax.f32 %v2646, 0.0
        %v2679 = vmax.f32 %v2647, 0.0
        %v2680 = vmax.f32 %v2648, 0.0
        %v2681 = vmax.f32 %v2649, 0.0
        %v2682 = vmax.f32 %v2650, 0.0
        %v2683 = vmax.f32 %v2651, 0.0
        %v2684 = vmax.f32 %v2652, 0.0
        %v2685 = vmax.f32 %v2653, 0.0
        %v2686 = vmax.f32 %v2654, 0.0
        %v2687 = vmax.f32 %v2655, 0.0
        %v2688 = vmax.f32 %v2656, 0.0
        %v2689 = vmax.f32 %v2657, 0.0
        %v2690 = vmax.f32 %v2658, 0.0
        %v2691 = vmax.f32 %v2659, 0.0
        %v2692 = vmax.f32 %v2660, 0.0
        %v2693 = vmax.f32 %v2661, 0.0
        %v2694 = vmax.f32 %v2662, 0.0
        %v2695 = vmax.f32 %v2663, 0.0
        %v2696 = vmax.f32 %v2664, 0.0
        %v2697 = vmax.f32 %v2665, 0.0
        %v2698 = vmax.f32 %v2666, 0.0
        %v2699 = vmax.f32 %v2667, 0.0
        %v2700 = vmax.f32 %v2668, 0.0
        %v2701 = vmax.f32 %v2669, 0.0
        %v2702 = vmax.f32 %v2670, 0.0
        %v2735 = vrot.slane %v2671, 7
        %v2736 = vrot.slane %v2672, 7
        %v2737 = vsel %vm642, %v2735, %v2736
        %v2738 = vrot.slane %v2673, 7
        %v2739 = vrot.slane %v2674, 7
        %v2740 = vsel %vm642, %v2738, %v2739
        %v2741 = vrot.slane %v2675, 7
        %v2742 = vrot.slane %v2676, 7
        %v2743 = vsel %vm642, %v2741, %v2742
        %v2744 = vrot.slane %v2677, 7
        %v2745 = vrot.slane %v2678, 7
        %v2746 = vsel %vm642, %v2744, %v2745
        %v2747 = vrot.slane %v2679, 7
        %v2748 = vrot.slane %v2680, 7
        %v2749 = vsel %vm642, %v2747, %v2748
        %v2750 = vrot.slane %v2681, 7
        %v2751 = vrot.slane %v2682, 7
        %v2752 = vsel %vm642, %v2750, %v2751
        %v2753 = vrot.slane %v2683, 7
        %v2754 = vrot.slane %v2684, 7
        %v2755 = vsel %vm642, %v2753, %v2754
        %v2756 = vrot.slane %v2685, 7
        %v2757 = vrot.slane %v2686, 7
        %v2758 = vsel %vm642, %v2756, %v2757
        %v2759 = vrot.slane %v2687, 7
        %v2760 = vrot.slane %v2688, 7
        %v2761 = vsel %vm642, %v2759, %v2760
        %v2762 = vrot.slane %v2689, 7
        %v2763 = vrot.slane %v2690, 7
        %v2764 = vsel %vm642, %v2762, %v2763
        %v2765 = vrot.slane %v2691, 7
        %v2766 = vrot.slane %v2692, 7
        %v2767 = vsel %vm642, %v2765, %v2766
        %v2768 = vrot.slane %v2693, 7
        %v2769 = vrot.slane %v2694, 7
        %v2770 = vsel %vm642, %v2768, %v2769
        %v2771 = vrot.slane %v2695, 7
        %v2772 = vrot.slane %v2696, 7
        %v2773 = vsel %vm642, %v2771, %v2772
        %v2774 = vrot.slane %v2697, 7
        %v2775 = vrot.slane %v2698, 7
        %v2776 = vsel %vm642, %v2774, %v2775
        %v2777 = vrot.slane %v2699, 7
        %v2778 = vrot.slane %v2700, 7
        %v2779 = vsel %vm642, %v2777, %v2778
        %v2780 = vrot.slane %v2701, 7
        %v2781 = vrot.slane %v2702, 7
        %v2782 = vsel %vm642, %v2780, %v2781
        %v2830 = vsel %vm642, 0.0, %v2735
        %v2831 = vsel %vm642, 0.0, %v2738
        %v2832 = vsel %vm642, 0.0, %v2741
        %v2833 = vsel %vm642, 0.0, %v2744
        %v2834 = vsel %vm642, 0.0, %v2747
        %v2835 = vsel %vm642, 0.0, %v2750
        %v2836 = vsel %vm642, 0.0, %v2753
        %v2837 = vsel %vm642, 0.0, %v2756
        %v2838 = vsel %vm642, 0.0, %v2759
        %v2839 = vsel %vm642, 0.0, %v2762
        %v2840 = vsel %vm642, 0.0, %v2765
        %v2841 = vsel %vm642, 0.0, %v2768
        %v2842 = vsel %vm642, 0.0, %v2771
        %v2843 = vsel %vm642, 0.0, %v2774
        %v2844 = vsel %vm642, 0.0, %v2777
        %v2845 = vsel %vm642, 0.0, %v2780
        %v2846 = vsel %vm642, %v2736, 0.0
        %v2847 = vsel %vm642, %v2739, 0.0
        %v2848 = vsel %vm642, %v2742, 0.0
        %v2849 = vsel %vm642, %v2745, 0.0
        %v2850 = vsel %vm642, %v2748, 0.0
        %v2851 = vsel %vm642, %v2751, 0.0
        %v2852 = vsel %vm642, %v2754, 0.0
        %v2853 = vsel %vm642, %v2757, 0.0
        %v2854 = vsel %vm642, %v2760, 0.0
        %v2855 = vsel %vm642, %v2763, 0.0
        %v2856 = vsel %vm642, %v2766, 0.0
        %v2857 = vsel %vm642, %v2769, 0.0
        %v2858 = vsel %vm642, %v2772, 0.0
        %v2859 = vsel %vm642, %v2775, 0.0
        %v2860 = vsel %vm642, %v2778, 0.0
        %v2861 = vsel %vm642, %v2781, 0.0
        %v2892 = vrot.slane %v2830, 1
        %v2893 = vrot.slane %v2737, 1
        %v2894 = vsel %vm808, %v2892, %v2893
        %v2895 = vrot.slane %v2846, 1
        %v2896 = vsel %vm808, %v2893, %v2895
        %v2897 = vrot.slane %v2831, 1
        %v2898 = vrot.slane %v2740, 1
        %v2899 = vsel %vm808, %v2897, %v2898
        %v2900 = vrot.slane %v2847, 1
        %v2901 = vsel %vm808, %v2898, %v2900
        %v2902 = vrot.slane %v2832, 1
        %v2903 = vrot.slane %v2743, 1
        %v2904 = vsel %vm808, %v2902, %v2903
        %v2905 = vrot.slane %v2848, 1
        %v2906 = vsel %vm808, %v2903, %v2905
        %v2907 = vrot.slane %v2833, 1
        %v2908 = vrot.slane %v2746, 1
        %v2909 = vsel %vm808, %v2907, %v2908
        %v2910 = vrot.slane %v2849, 1
        %v2911 = vsel %vm808, %v2908, %v2910
        %v2912 = vrot.slane %v2834, 1
        %v2913 = vrot.slane %v2749, 1
        %v2914 = vsel %vm808, %v2912, %v2913
        %v2915 = vrot.slane %v2850, 1
        %v2916 = vsel %vm808, %v2913, %v2915
        %v2917 = vrot.slane %v2835, 1
        %v2918 = vrot.slane %v2752, 1
        %v2919 = vsel %vm808, %v2917, %v2918
        %v2920 = vrot.slane %v2851, 1
        %v2921 = vsel %vm808, %v2918, %v2920
        %v2922 = vrot.slane %v2836, 1
        %v2923 = vrot.slane %v2755, 1
        %v2924 = vsel %vm808, %v2922, %v2923
        %v2925 = vrot.slane %v2852, 1
        %v2926 = vsel %vm808, %v2923, %v2925
        %v2927 = vrot.slane %v2837, 1
        %v2928 = vrot.slane %v2758, 1
        %v2929 = vsel %vm808, %v2927, %v2928
        %v2930 = vrot.slane %v2853, 1
        %v2931 = vsel %vm808, %v2928, %v2930
        %v2932 = vrot.slane %v2838, 1
        %v2933 = vrot.slane %v2761, 1
        %v2934 = vsel %vm808, %v2932, %v2933
        %v2935 = vrot.slane %v2854, 1
        %v2936 = vsel %vm808, %v2933, %v2935
        %v2937 = vrot.slane %v2839, 1
        %v2938 = vrot.slane %v2764, 1
        %v2939 = vsel %vm808, %v2937, %v2938
        %v2940 = vrot.slane %v2855, 1
        %v2941 = vsel %vm808, %v2938, %v2940
        %v2942 = vrot.slane %v2840, 1
        %v2943 = vrot.slane %v2767, 1
        %v2944 = vsel %vm808, %v2942, %v2943
        %v2945 = vrot.slane %v2856, 1
        %v2946 = vsel %vm808, %v2943, %v2945
        %v2947 = vrot.slane %v2841, 1
        %v2948 = vrot.slane %v2770, 1
        %v2949 = vsel %vm808, %v2947, %v2948
        %v2950 = vrot.slane %v2857, 1
        %v2951 = vsel %vm808, %v2948, %v2950
        %v2952 = vrot.slane %v2842, 1
        %v2953 = vrot.slane %v2773, 1
        %v2954 = vsel %vm808, %v2952, %v2953
        %v2955 = vrot.slane %v2858, 1
        %v2956 = vsel %vm808, %v2953, %v2955
        %v2957 = vrot.slane %v2843, 1
        %v2958 = vrot.slane %v2776, 1
        %v2959 = vsel %vm808, %v2957, %v2958
        %v2960 = vrot.slane %v2859, 1
        %v2961 = vsel %vm808, %v2958, %v2960
        %v2962 = vrot.slane %v2844, 1
        %v2963 = vrot.slane %v2779, 1
        %v2964 = vsel %vm808, %v2962, %v2963
        %v2965 = vrot.slane %v2860, 1
        %v2966 = vsel %vm808, %v2963, %v2965
        %2967 = vrot.lane.b32.xlu0 %v811, 16
        %v2968 = vpop.permute.xlu0 %2967
        %2969 = vrot.lane.b32.xlu0 %v813, 16
        %v2970 = vpop.permute.xlu0 %2969
        %2971 = vrot.lane.b32.xlu0 %v2894, 16
        %v2972 = vpop.permute.xlu0 %2971
        %2973 = vrot.lane.b32.xlu0 %v2896, 16
        %v2974 = vpop.permute.xlu0 %2973
        %2975 = vrot.lane.b32.xlu0 %v2899, 16
        %v2976 = vpop.permute.xlu0 %2975
        %2977 = vrot.lane.b32.xlu0 %v2901, 16
        %v2978 = vpop.permute.xlu0 %2977
        %2979 = vrot.lane.b32.xlu0 %v2904, 16
        %v2980 = vpop.permute.xlu0 %2979
        %2981 = vrot.lane.b32.xlu0 %v2906, 16
        %v2982 = vpop.permute.xlu0 %2981
        %2983 = vrot.lane.b32.xlu0 %v2909, 16
        %v2984 = vpop.permute.xlu0 %2983
        %2985 = vrot.lane.b32.xlu0 %v2911, 16
        %v2986 = vpop.permute.xlu0 %2985
        %2987 = vrot.lane.b32.xlu0 %v2914, 16
        %v2988 = vpop.permute.xlu0 %2987
        %2989 = vrot.lane.b32.xlu0 %v2916, 16
        %v2990 = vpop.permute.xlu0 %2989
        %2991 = vrot.lane.b32.xlu0 %v2919, 16
        %v2992 = vpop.permute.xlu0 %2991
        %2993 = vrot.lane.b32.xlu0 %v2921, 16
        %v2994 = vpop.permute.xlu0 %2993
        %2995 = vrot.lane.b32.xlu0 %v2924, 16
        %v2996 = vpop.permute.xlu0 %2995
        %2997 = vrot.lane.b32.xlu0 %v2926, 16
        %v2998 = vpop.permute.xlu0 %2997
        %2999 = vrot.lane.b32.xlu0 %v2929, 16
        %v3000 = vpop.permute.xlu0 %2999
        %3001 = vrot.lane.b32.xlu0 %v2931, 16
        %v3002 = vpop.permute.xlu0 %3001
        %3003 = vrot.lane.b32.xlu0 %v2934, 16
        %v3004 = vpop.permute.xlu0 %3003
        %3005 = vrot.lane.b32.xlu0 %v2936, 16
        %v3006 = vpop.permute.xlu0 %3005
        %3007 = vrot.lane.b32.xlu0 %v2939, 16
        %v3008 = vpop.permute.xlu0 %3007
        %3009 = vrot.lane.b32.xlu0 %v2941, 16
        %v3010 = vpop.permute.xlu0 %3009
        %3011 = vrot.lane.b32.xlu0 %v2944, 16
        %v3012 = vpop.permute.xlu0 %3011
        %3013 = vrot.lane.b32.xlu0 %v2946, 16
        %v3014 = vpop.permute.xlu0 %3013
        %3015 = vrot.lane.b32.xlu0 %v2949, 16
        %v3016 = vpop.permute.xlu0 %3015
        %3017 = vrot.lane.b32.xlu0 %v2951, 16
        %v3018 = vpop.permute.xlu0 %3017
        %3019 = vrot.lane.b32.xlu0 %v2954, 16
        %v3020 = vpop.permute.xlu0 %3019
        %3021 = vrot.lane.b32.xlu0 %v2956, 16
        %v3022 = vpop.permute.xlu0 %3021
        %3023 = vrot.lane.b32.xlu0 %v2959, 16
        %v3024 = vpop.permute.xlu0 %3023
        %3025 = vrot.lane.b32.xlu0 %v2961, 16
        %v3026 = vpop.permute.xlu0 %3025
        %3027 = vrot.lane.b32.xlu0 %v2964, 16
        %v3028 = vpop.permute.xlu0 %3027
        %3029 = vrot.lane.b32.xlu0 %v2966, 16
        %v3030 = vpop.permute.xlu0 %3029
        %v3063 = vrot.slane %v2830, 2
        %v3064 = vrot.slane %v2737, 2
        %v3065 = vsel %vm985, %v3063, %v3064
        %v3066 = vrot.slane %v2846, 2
        %v3067 = vsel %vm985, %v3064, %v3066
        %v3068 = vrot.slane %v2831, 2
        %v3069 = vrot.slane %v2740, 2
        %v3070 = vsel %vm985, %v3068, %v3069
        %v3071 = vrot.slane %v2847, 2
        %v3072 = vsel %vm985, %v3069, %v3071
        %v3073 = vrot.slane %v2832, 2
        %v3074 = vrot.slane %v2743, 2
        %v3075 = vsel %vm985, %v3073, %v3074
        %v3076 = vrot.slane %v2848, 2
        %v3077 = vsel %vm985, %v3074, %v3076
        %v3078 = vrot.slane %v2833, 2
        %v3079 = vrot.slane %v2746, 2
        %v3080 = vsel %vm985, %v3078, %v3079
        %v3081 = vrot.slane %v2849, 2
        %v3082 = vsel %vm985, %v3079, %v3081
        %v3083 = vrot.slane %v2834, 2
        %v3084 = vrot.slane %v2749, 2
        %v3085 = vsel %vm985, %v3083, %v3084
        %v3086 = vrot.slane %v2850, 2
        %v3087 = vsel %vm985, %v3084, %v3086
        %v3088 = vrot.slane %v2835, 2
        %v3089 = vrot.slane %v2752, 2
        %v3090 = vsel %vm985, %v3088, %v3089
        %v3091 = vrot.slane %v2851, 2
        %v3092 = vsel %vm985, %v3089, %v3091
        %v3093 = vrot.slane %v2836, 2
        %v3094 = vrot.slane %v2755, 2
        %v3095 = vsel %vm985, %v3093, %v3094
        %v3096 = vrot.slane %v2852, 2
        %v3097 = vsel %vm985, %v3094, %v3096
        %v3098 = vrot.slane %v2837, 2
        %v3099 = vrot.slane %v2758, 2
        %v3100 = vsel %vm985, %v3098, %v3099
        %v3101 = vrot.slane %v2853, 2
        %v3102 = vsel %vm985, %v3099, %v3101
        %v3103 = vrot.slane %v2838, 2
        %v3104 = vrot.slane %v2761, 2
        %v3105 = vsel %vm985, %v3103, %v3104
        %v3106 = vrot.slane %v2854, 2
        %v3107 = vsel %vm985, %v3104, %v3106
        %v3108 = vrot.slane %v2839, 2
        %v3109 = vrot.slane %v2764, 2
        %v3110 = vsel %vm985, %v3108, %v3109
        %v3111 = vrot.slane %v2855, 2
        %v3112 = vsel %vm985, %v3109, %v3111
        %v3113 = vrot.slane %v2840, 2
        %v3114 = vrot.slane %v2767, 2
        %v3115 = vsel %vm985, %v3113, %v3114
        %v3116 = vrot.slane %v2856, 2
        %v3117 = vsel %vm985, %v3114, %v3116
        %v3118 = vrot.slane %v2841, 2
        %v3119 = vrot.slane %v2770, 2
        %v3120 = vsel %vm985, %v3118, %v3119
        %v3121 = vrot.slane %v2857, 2
        %v3122 = vsel %vm985, %v3119, %v3121
        %v3123 = vrot.slane %v2842, 2
        %v3124 = vrot.slane %v2773, 2
        %v3125 = vsel %vm985, %v3123, %v3124
        %v3126 = vrot.slane %v2858, 2
        %v3127 = vsel %vm985, %v3124, %v3126
        %v3128 = vrot.slane %v2843, 2
        %v3129 = vrot.slane %v2776, 2
        %v3130 = vsel %vm985, %v3128, %v3129
        %v3131 = vrot.slane %v2859, 2
        %v3132 = vsel %vm985, %v3129, %v3131
        %v3133 = vrot.slane %v2844, 2
        %v3134 = vrot.slane %v2779, 2
        %v3135 = vsel %vm985, %v3133, %v3134
        %v3136 = vrot.slane %v2860, 2
        %v3137 = vsel %vm985, %v3134, %v3136
        %3138 = vrot.lane.b32.xlu0 %v3065, 32
        %v3139 = vpop.permute.xlu0 %3138
        %3140 = vrot.lane.b32.xlu0 %v3067, 32
        %v3141 = vpop.permute.xlu0 %3140
        %3142 = vrot.lane.b32.xlu0 %v3070, 32
        %v3143 = vpop.permute.xlu0 %3142
        %3144 = vrot.lane.b32.xlu0 %v3072, 32
        %v3145 = vpop.permute.xlu0 %3144
        %3146 = vrot.lane.b32.xlu0 %v3075, 32
        %v3147 = vpop.permute.xlu0 %3146
        %3148 = vrot.lane.b32.xlu0 %v3077, 32
        %v3149 = vpop.permute.xlu0 %3148
        %3150 = vrot.lane.b32.xlu0 %v3080, 32
        %v3151 = vpop.permute.xlu0 %3150
        %3152 = vrot.lane.b32.xlu0 %v3082, 32
        %v3153 = vpop.permute.xlu0 %3152
        %3154 = vrot.lane.b32.xlu0 %v3085, 32
        %v3155 = vpop.permute.xlu0 %3154
        %3156 = vrot.lane.b32.xlu0 %v3087, 32
        %v3157 = vpop.permute.xlu0 %3156
        %3158 = vrot.lane.b32.xlu0 %v3090, 32
        %v3159 = vpop.permute.xlu0 %3158
        %3160 = vrot.lane.b32.xlu0 %v3092, 32
        %v3161 = vpop.permute.xlu0 %3160
        %3162 = vrot.lane.b32.xlu0 %v3095, 32
        %v3163 = vpop.permute.xlu0 %3162
        %3164 = vrot.lane.b32.xlu0 %v3097, 32
        %v3165 = vpop.permute.xlu0 %3164
        %3166 = vrot.lane.b32.xlu0 %v3100, 32
        %v3167 = vpop.permute.xlu0 %3166
        %3168 = vrot.lane.b32.xlu0 %v3102, 32
        %v3169 = vpop.permute.xlu0 %3168
        %3170 = vrot.lane.b32.xlu0 %v3105, 32
        %v3171 = vpop.permute.xlu0 %3170
        %3172 = vrot.lane.b32.xlu0 %v3107, 32
        %v3173 = vpop.permute.xlu0 %3172
        %3174 = vrot.lane.b32.xlu0 %v3110, 32
        %v3175 = vpop.permute.xlu0 %3174
        %3176 = vrot.lane.b32.xlu0 %v3112, 32
        %v3177 = vpop.permute.xlu0 %3176
        %3178 = vrot.lane.b32.xlu0 %v3115, 32
        %v3179 = vpop.permute.xlu0 %3178
        %3180 = vrot.lane.b32.xlu0 %v3117, 32
        %v3181 = vpop.permute.xlu0 %3180
        %3182 = vrot.lane.b32.xlu0 %v3120, 32
        %v3183 = vpop.permute.xlu0 %3182
        %3184 = vrot.lane.b32.xlu0 %v3122, 32
        %v3185 = vpop.permute.xlu0 %3184
        %3186 = vrot.lane.b32.xlu0 %v3125, 32
        %v3187 = vpop.permute.xlu0 %3186
        %3188 = vrot.lane.b32.xlu0 %v3127, 32
        %v3189 = vpop.permute.xlu0 %3188
        %3190 = vrot.lane.b32.xlu0 %v3130, 32
        %v3191 = vpop.permute.xlu0 %3190
        %3192 = vrot.lane.b32.xlu0 %v3132, 32
        %v3193 = vpop.permute.xlu0 %3192
        %3194 = vrot.lane.b32.xlu0 %v3135, 32
        %v3195 = vpop.permute.xlu0 %3194
        %3196 = vrot.lane.b32.xlu0 %v3137, 32
        %v3197 = vpop.permute.xlu0 %3196
        %3229 = vrot.lane.b32.xlu0 %v2830, 48
        %v3230 = vpop.permute.xlu0 %3229
        %3231 = vrot.lane.b32.xlu0 %v2737, 48
        %v3232 = vpop.permute.xlu0 %3231
        %3233 = vrot.lane.b32.xlu0 %v2831, 48
        %v3234 = vpop.permute.xlu0 %3233
        %3235 = vrot.lane.b32.xlu0 %v2740, 48
        %v3236 = vpop.permute.xlu0 %3235
        %3237 = vrot.lane.b32.xlu0 %v2832, 48
        %v3238 = vpop.permute.xlu0 %3237
        %3239 = vrot.lane.b32.xlu0 %v2743, 48
        %v3240 = vpop.permute.xlu0 %3239
        %3241 = vrot.lane.b32.xlu0 %v2833, 48
        %v3242 = vpop.permute.xlu0 %3241
        %3243 = vrot.lane.b32.xlu0 %v2746, 48
        %v3244 = vpop.permute.xlu0 %3243
        %3245 = vrot.lane.b32.xlu0 %v2834, 48
        %v3246 = vpop.permute.xlu0 %3245
        %3247 = vrot.lane.b32.xlu0 %v2749, 48
        %v3248 = vpop.permute.xlu0 %3247
        %3249 = vrot.lane.b32.xlu0 %v2835, 48
        %v3250 = vpop.permute.xlu0 %3249
        %3251 = vrot.lane.b32.xlu0 %v2752, 48
        %v3252 = vpop.permute.xlu0 %3251
        %3253 = vrot.lane.b32.xlu0 %v2836, 48
        %v3254 = vpop.permute.xlu0 %3253
        %3255 = vrot.lane.b32.xlu0 %v2755, 48
        %v3256 = vpop.permute.xlu0 %3255
        %3257 = vrot.lane.b32.xlu0 %v2837, 48
        %v3258 = vpop.permute.xlu0 %3257
        %3259 = vrot.lane.b32.xlu0 %v2758, 48
        %v3260 = vpop.permute.xlu0 %3259
        %3261 = vrot.lane.b32.xlu0 %v2838, 48
        %v3262 = vpop.permute.xlu0 %3261
        %3263 = vrot.lane.b32.xlu0 %v2761, 48
        %v3264 = vpop.permute.xlu0 %3263
        %3265 = vrot.lane.b32.xlu0 %v2839, 48
        %v3266 = vpop.permute.xlu0 %3265
        %3267 = vrot.lane.b32.xlu0 %v2764, 48
        %v3268 = vpop.permute.xlu0 %3267
        %3269 = vrot.lane.b32.xlu0 %v2840, 48
        %v3270 = vpop.permute.xlu0 %3269
        %3271 = vrot.lane.b32.xlu0 %v2767, 48
        %v3272 = vpop.permute.xlu0 %3271
        %3273 = vrot.lane.b32.xlu0 %v2841, 48
        %v3274 = vpop.permute.xlu0 %3273
        %3275 = vrot.lane.b32.xlu0 %v2770, 48
        %v3276 = vpop.permute.xlu0 %3275
        %3277 = vrot.lane.b32.xlu0 %v2842, 48
        %v3278 = vpop.permute.xlu0 %3277
        %3279 = vrot.lane.b32.xlu0 %v2773, 48
        %v3280 = vpop.permute.xlu0 %3279
        %3281 = vrot.lane.b32.xlu0 %v2843, 48
        %v3282 = vpop.permute.xlu0 %3281
        %3283 = vrot.lane.b32.xlu0 %v2776, 48
        %v3284 = vpop.permute.xlu0 %3283
        %3285 = vrot.lane.b32.xlu0 %v2844, 48
        %v3286 = vpop.permute.xlu0 %3285
        %3287 = vrot.lane.b32.xlu0 %v2779, 48
        %v3288 = vpop.permute.xlu0 %3287
        %3289 = vrot.lane.b32.xlu0 %v2845, 48
        %v3290 = vpop.permute.xlu0 %3289
        %3291 = vrot.lane.b32.xlu0 %v2782, 48
        %v3292 = vpop.permute.xlu0 %3291
        %v3326 = vrot.slane %v2845, 1
        %v3327 = vrot.slane %v2782, 1
        %v3328 = vsel %vm808, %v3326, %v3327
        %v3329 = vrot.slane %v2861, 1
        %v3330 = vsel %vm808, %v3327, %v3329
        %3331 = vrot.lane.b32.xlu0 %v2894, 64
        %v3332 = vpop.permute.xlu0 %3331
        %3333 = vrot.lane.b32.xlu0 %v2896, 64
        %v3334 = vpop.permute.xlu0 %3333
        %3335 = vrot.lane.b32.xlu0 %v2899, 64
        %v3336 = vpop.permute.xlu0 %3335
        %3337 = vrot.lane.b32.xlu0 %v2901, 64
        %v3338 = vpop.permute.xlu0 %3337
        %3339 = vrot.lane.b32.xlu0 %v2904, 64
        %v3340 = vpop.permute.xlu0 %3339
        %3341 = vrot.lane.b32.xlu0 %v2906, 64
        %v3342 = vpop.permute.xlu0 %3341
        %3343 = vrot.lane.b32.xlu0 %v2909, 64
        %v3344 = vpop.permute.xlu0 %3343
        %3345 = vrot.lane.b32.xlu0 %v2911, 64
        %v3346 = vpop.permute.xlu0 %3345
        %3347 = vrot.lane.b32.xlu0 %v2914, 64
        %v3348 = vpop.permute.xlu0 %3347
        %3349 = vrot.lane.b32.xlu0 %v2916, 64
        %v3350 = vpop.permute.xlu0 %3349
        %3351 = vrot.lane.b32.xlu0 %v2919, 64
        %v3352 = vpop.permute.xlu0 %3351
        %3353 = vrot.lane.b32.xlu0 %v2921, 64
        %v3354 = vpop.permute.xlu0 %3353
        %3355 = vrot.lane.b32.xlu0 %v2924, 64
        %v3356 = vpop.permute.xlu0 %3355
        %3357 = vrot.lane.b32.xlu0 %v2926, 64
        %v3358 = vpop.permute.xlu0 %3357
        %3359 = vrot.lane.b32.xlu0 %v2929, 64
        %v3360 = vpop.permute.xlu0 %3359
        %3361 = vrot.lane.b32.xlu0 %v2931, 64
        %v3362 = vpop.permute.xlu0 %3361
        %3363 = vrot.lane.b32.xlu0 %v2934, 64
        %v3364 = vpop.permute.xlu0 %3363
        %3365 = vrot.lane.b32.xlu0 %v2936, 64
        %v3366 = vpop.permute.xlu0 %3365
        %3367 = vrot.lane.b32.xlu0 %v2939, 64
        %v3368 = vpop.permute.xlu0 %3367
        %3369 = vrot.lane.b32.xlu0 %v2941, 64
        %v3370 = vpop.permute.xlu0 %3369
        %3371 = vrot.lane.b32.xlu0 %v2944, 64
        %v3372 = vpop.permute.xlu0 %3371
        %3373 = vrot.lane.b32.xlu0 %v2946, 64
        %v3374 = vpop.permute.xlu0 %3373
        %3375 = vrot.lane.b32.xlu0 %v2949, 64
        %v3376 = vpop.permute.xlu0 %3375
        %3377 = vrot.lane.b32.xlu0 %v2951, 64
        %v3378 = vpop.permute.xlu0 %3377
        %3379 = vrot.lane.b32.xlu0 %v2954, 64
        %v3380 = vpop.permute.xlu0 %3379
        %3381 = vrot.lane.b32.xlu0 %v2956, 64
        %v3382 = vpop.permute.xlu0 %3381
        %3383 = vrot.lane.b32.xlu0 %v2959, 64
        %v3384 = vpop.permute.xlu0 %3383
        %3385 = vrot.lane.b32.xlu0 %v2961, 64
        %v3386 = vpop.permute.xlu0 %3385
        %3387 = vrot.lane.b32.xlu0 %v2964, 64
        %v3388 = vpop.permute.xlu0 %3387
        %3389 = vrot.lane.b32.xlu0 %v2966, 64
        %v3390 = vpop.permute.xlu0 %3389
        %3391 = vrot.lane.b32.xlu0 %v3328, 64
        %v3392 = vpop.permute.xlu0 %3391
        %3393 = vrot.lane.b32.xlu0 %v3330, 64
        %v3394 = vpop.permute.xlu0 %3393
        %v3427 = vrot.slane %v2845, 2
        %v3428 = vrot.slane %v2782, 2
        %v3429 = vsel %vm985, %v3427, %v3428
        %v3430 = vrot.slane %v2861, 2
        %v3431 = vsel %vm985, %v3428, %v3430
        %3432 = vrot.lane.b32.xlu0 %v3065, 80
        %v3433 = vpop.permute.xlu0 %3432
        %3434 = vrot.lane.b32.xlu0 %v3067, 80
        %v3435 = vpop.permute.xlu0 %3434
        %3436 = vrot.lane.b32.xlu0 %v3070, 80
        %v3437 = vpop.permute.xlu0 %3436
        %3438 = vrot.lane.b32.xlu0 %v3072, 80
        %v3439 = vpop.permute.xlu0 %3438
        %3440 = vrot.lane.b32.xlu0 %v3075, 80
        %v3441 = vpop.permute.xlu0 %3440
        %3442 = vrot.lane.b32.xlu0 %v3077, 80
        %v3443 = vpop.permute.xlu0 %3442
        %3444 = vrot.lane.b32.xlu0 %v3080, 80
        %v3445 = vpop.permute.xlu0 %3444
        %3446 = vrot.lane.b32.xlu0 %v3082, 80
        %v3447 = vpop.permute.xlu0 %3446
        %3448 = vrot.lane.b32.xlu0 %v3085, 80
        %v3449 = vpop.permute.xlu0 %3448
        %3450 = vrot.lane.b32.xlu0 %v3087, 80
        %v3451 = vpop.permute.xlu0 %3450
        %3452 = vrot.lane.b32.xlu0 %v3090, 80
        %v3453 = vpop.permute.xlu0 %3452
        %3454 = vrot.lane.b32.xlu0 %v3092, 80
        %v3455 = vpop.permute.xlu0 %3454
        %3456 = vrot.lane.b32.xlu0 %v3095, 80
        %v3457 = vpop.permute.xlu0 %3456
        %3458 = vrot.lane.b32.xlu0 %v3097, 80
        %v3459 = vpop.permute.xlu0 %3458
        %3460 = vrot.lane.b32.xlu0 %v3100, 80
        %v3461 = vpop.permute.xlu0 %3460
        %3462 = vrot.lane.b32.xlu0 %v3102, 80
        %v3463 = vpop.permute.xlu0 %3462
        %3464 = vrot.lane.b32.xlu0 %v3105, 80
        %v3465 = vpop.permute.xlu0 %3464
        %3466 = vrot.lane.b32.xlu0 %v3107, 80
        %v3467 = vpop.permute.xlu0 %3466
        %3468 = vrot.lane.b32.xlu0 %v3110, 80
        %v3469 = vpop.permute.xlu0 %3468
        %3470 = vrot.lane.b32.xlu0 %v3112, 80
        %v3471 = vpop.permute.xlu0 %3470
        %3472 = vrot.lane.b32.xlu0 %v3115, 80
        %v3473 = vpop.permute.xlu0 %3472
        %3474 = vrot.lane.b32.xlu0 %v3117, 80
        %v3475 = vpop.permute.xlu0 %3474
        %3476 = vrot.lane.b32.xlu0 %v3120, 80
        %v3477 = vpop.permute.xlu0 %3476
        %3478 = vrot.lane.b32.xlu0 %v3122, 80
        %v3479 = vpop.permute.xlu0 %3478
        %3480 = vrot.lane.b32.xlu0 %v3125, 80
        %v3481 = vpop.permute.xlu0 %3480
        %3482 = vrot.lane.b32.xlu0 %v3127, 80
        %v3483 = vpop.permute.xlu0 %3482
        %3484 = vrot.lane.b32.xlu0 %v3130, 80
        %v3485 = vpop.permute.xlu0 %3484
        %3486 = vrot.lane.b32.xlu0 %v3132, 80
        %v3487 = vpop.permute.xlu0 %3486
        %3488 = vrot.lane.b32.xlu0 %v3135, 80
        %v3489 = vpop.permute.xlu0 %3488
        %3490 = vrot.lane.b32.xlu0 %v3137, 80
        %v3491 = vpop.permute.xlu0 %3490
        %3492 = vrot.lane.b32.xlu0 %v3429, 80
        %v3493 = vpop.permute.xlu0 %3492
        %3494 = vrot.lane.b32.xlu0 %v3431, 80
        %v3495 = vpop.permute.xlu0 %3494
        %3528 = vrot.lane.b32.xlu0 %v2831, 96
        %v3529 = vpop.permute.xlu0 %3528
        %3530 = vrot.lane.b32.xlu0 %v2740, 96
        %v3531 = vpop.permute.xlu0 %3530
        %3532 = vrot.lane.b32.xlu0 %v2832, 96
        %v3533 = vpop.permute.xlu0 %3532
        %3534 = vrot.lane.b32.xlu0 %v2743, 96
        %v3535 = vpop.permute.xlu0 %3534
        %3536 = vrot.lane.b32.xlu0 %v2833, 96
        %v3537 = vpop.permute.xlu0 %3536
        %3538 = vrot.lane.b32.xlu0 %v2746, 96
        %v3539 = vpop.permute.xlu0 %3538
        %3540 = vrot.lane.b32.xlu0 %v2834, 96
        %v3541 = vpop.permute.xlu0 %3540
        %3542 = vrot.lane.b32.xlu0 %v2749, 96
        %v3543 = vpop.permute.xlu0 %3542
        %3544 = vrot.lane.b32.xlu0 %v2835, 96
        %v3545 = vpop.permute.xlu0 %3544
        %3546 = vrot.lane.b32.xlu0 %v2752, 96
        %v3547 = vpop.permute.xlu0 %3546
        %3548 = vrot.lane.b32.xlu0 %v2836, 96
        %v3549 = vpop.permute.xlu0 %3548
        %3550 = vrot.lane.b32.xlu0 %v2755, 96
        %v3551 = vpop.permute.xlu0 %3550
        %3552 = vrot.lane.b32.xlu0 %v2837, 96
        %v3553 = vpop.permute.xlu0 %3552
        %3554 = vrot.lane.b32.xlu0 %v2758, 96
        %v3555 = vpop.permute.xlu0 %3554
        %3556 = vrot.lane.b32.xlu0 %v2838, 96
        %v3557 = vpop.permute.xlu0 %3556
        %3558 = vrot.lane.b32.xlu0 %v2761, 96
        %v3559 = vpop.permute.xlu0 %3558
        %3560 = vrot.lane.b32.xlu0 %v2839, 96
        %v3561 = vpop.permute.xlu0 %3560
        %3562 = vrot.lane.b32.xlu0 %v2764, 96
        %v3563 = vpop.permute.xlu0 %3562
        %3564 = vrot.lane.b32.xlu0 %v2840, 96
        %v3565 = vpop.permute.xlu0 %3564
        %3566 = vrot.lane.b32.xlu0 %v2767, 96
        %v3567 = vpop.permute.xlu0 %3566
        %3568 = vrot.lane.b32.xlu0 %v2841, 96
        %v3569 = vpop.permute.xlu0 %3568
        %3570 = vrot.lane.b32.xlu0 %v2770, 96
        %v3571 = vpop.permute.xlu0 %3570
        %3572 = vrot.lane.b32.xlu0 %v2842, 96
        %v3573 = vpop.permute.xlu0 %3572
        %3574 = vrot.lane.b32.xlu0 %v2773, 96
        %v3575 = vpop.permute.xlu0 %3574
        %3576 = vrot.lane.b32.xlu0 %v2843, 96
        %v3577 = vpop.permute.xlu0 %3576
        %3578 = vrot.lane.b32.xlu0 %v2776, 96
        %v3579 = vpop.permute.xlu0 %3578
        %3580 = vrot.lane.b32.xlu0 %v2844, 96
        %v3581 = vpop.permute.xlu0 %3580
        %3582 = vrot.lane.b32.xlu0 %v2779, 96
        %v3583 = vpop.permute.xlu0 %3582
        %3584 = vrot.lane.b32.xlu0 %v2845, 96
        %v3585 = vpop.permute.xlu0 %3584
        %3586 = vrot.lane.b32.xlu0 %v2782, 96
        %v3587 = vpop.permute.xlu0 %3586
        %3588 = vrot.lane.b32.xlu0 %v742, 96
        %v3589 = vpop.permute.xlu0 %3588
        %3590 = vrot.lane.b32.xlu0 %v644, 96
        %v3591 = vpop.permute.xlu0 %3590
        %3624 = vrot.lane.b32.xlu0 %v2899, 112
        %v3625 = vpop.permute.xlu0 %3624
        %3626 = vrot.lane.b32.xlu0 %v2901, 112
        %v3627 = vpop.permute.xlu0 %3626
        %3628 = vrot.lane.b32.xlu0 %v2904, 112
        %v3629 = vpop.permute.xlu0 %3628
        %3630 = vrot.lane.b32.xlu0 %v2906, 112
        %v3631 = vpop.permute.xlu0 %3630
        %3632 = vrot.lane.b32.xlu0 %v2909, 112
        %v3633 = vpop.permute.xlu0 %3632
        %3634 = vrot.lane.b32.xlu0 %v2911, 112
        %v3635 = vpop.permute.xlu0 %3634
        %3636 = vrot.lane.b32.xlu0 %v2914, 112
        %v3637 = vpop.permute.xlu0 %3636
        %3638 = vrot.lane.b32.xlu0 %v2916, 112
        %v3639 = vpop.permute.xlu0 %3638
        %3640 = vrot.lane.b32.xlu0 %v2919, 112
        %v3641 = vpop.permute.xlu0 %3640
        %3642 = vrot.lane.b32.xlu0 %v2921, 112
        %v3643 = vpop.permute.xlu0 %3642
        %3644 = vrot.lane.b32.xlu0 %v2924, 112
        %v3645 = vpop.permute.xlu0 %3644
        %3646 = vrot.lane.b32.xlu0 %v2926, 112
        %v3647 = vpop.permute.xlu0 %3646
        %3648 = vrot.lane.b32.xlu0 %v2929, 112
        %v3649 = vpop.permute.xlu0 %3648
        %3650 = vrot.lane.b32.xlu0 %v2931, 112
        %v3651 = vpop.permute.xlu0 %3650
        %3652 = vrot.lane.b32.xlu0 %v2934, 112
        %v3653 = vpop.permute.xlu0 %3652
        %3654 = vrot.lane.b32.xlu0 %v2936, 112
        %v3655 = vpop.permute.xlu0 %3654
        %3656 = vrot.lane.b32.xlu0 %v2939, 112
        %v3657 = vpop.permute.xlu0 %3656
        %3658 = vrot.lane.b32.xlu0 %v2941, 112
        %v3659 = vpop.permute.xlu0 %3658
        %3660 = vrot.lane.b32.xlu0 %v2944, 112
        %v3661 = vpop.permute.xlu0 %3660
        %3662 = vrot.lane.b32.xlu0 %v2946, 112
        %v3663 = vpop.permute.xlu0 %3662
        %3664 = vrot.lane.b32.xlu0 %v2949, 112
        %v3665 = vpop.permute.xlu0 %3664
        %3666 = vrot.lane.b32.xlu0 %v2951, 112
        %v3667 = vpop.permute.xlu0 %3666
        %3668 = vrot.lane.b32.xlu0 %v2954, 112
        %v3669 = vpop.permute.xlu0 %3668
        %3670 = vrot.lane.b32.xlu0 %v2956, 112
        %v3671 = vpop.permute.xlu0 %3670
        %3672 = vrot.lane.b32.xlu0 %v2959, 112
        %v3673 = vpop.permute.xlu0 %3672
        %3674 = vrot.lane.b32.xlu0 %v2961, 112
        %v3675 = vpop.permute.xlu0 %3674
        %3676 = vrot.lane.b32.xlu0 %v2964, 112
        %v3677 = vpop.permute.xlu0 %3676
        %3678 = vrot.lane.b32.xlu0 %v2966, 112
        %v3679 = vpop.permute.xlu0 %3678
        %3680 = vrot.lane.b32.xlu0 %v3328, 112
        %v3681 = vpop.permute.xlu0 %3680
        %3682 = vrot.lane.b32.xlu0 %v3330, 112
        %v3683 = vpop.permute.xlu0 %3682
        %3684 = vrot.lane.b32.xlu0 %v811, 112
        %v3685 = vpop.permute.xlu0 %3684
        %3686 = vrot.lane.b32.xlu0 %v813, 112
        %v3687 = vpop.permute.xlu0 %3686
        %v3752 = vsel %vm1849, %v742, %v2968
        %v3753 = vsel %vm1849, %v644, %v2970
        %v3754 = vsel %vm1849, %v2830, %v2972
        %v3755 = vsel %vm1849, %v2737, %v2974
        %v3756 = vsel %vm1849, %v2831, %v2976
        %v3757 = vsel %vm1849, %v2740, %v2978
        %v3758 = vsel %vm1849, %v2832, %v2980
        %v3759 = vsel %vm1849, %v2743, %v2982
        %v3760 = vsel %vm1849, %v2833, %v2984
        %v3761 = vsel %vm1849, %v2746, %v2986
        %v3762 = vsel %vm1849, %v2834, %v2988
        %v3763 = vsel %vm1849, %v2749, %v2990
        %v3764 = vsel %vm1849, %v2835, %v2992
        %v3765 = vsel %vm1849, %v2752, %v2994
        %v3766 = vsel %vm1849, %v2836, %v2996
        %v3767 = vsel %vm1849, %v2755, %v2998
        %v3768 = vsel %vm1849, %v2837, %v3000
        %v3769 = vsel %vm1849, %v2758, %v3002
        %v3770 = vsel %vm1849, %v2838, %v3004
        %v3771 = vsel %vm1849, %v2761, %v3006
        %v3772 = vsel %vm1849, %v2839, %v3008
        %v3773 = vsel %vm1849, %v2764, %v3010
        %v3774 = vsel %vm1849, %v2840, %v3012
        %v3775 = vsel %vm1849, %v2767, %v3014
        %v3776 = vsel %vm1849, %v2841, %v3016
        %v3777 = vsel %vm1849, %v2770, %v3018
        %v3778 = vsel %vm1849, %v2842, %v3020
        %v3779 = vsel %vm1849, %v2773, %v3022
        %v3780 = vsel %vm1849, %v2843, %v3024
        %v3781 = vsel %vm1849, %v2776, %v3026
        %v3782 = vsel %vm1849, %v2844, %v3028
        %v3783 = vsel %vm1849, %v2779, %v3030
        %v3784 = vsel %vm1981, %v3752, %v1715
        %v3785 = vsel %vm1981, %v3753, %v1717
        %v3786 = vsel %vm1981, %v3754, %v3139
        %v3787 = vsel %vm1981, %v3755, %v3141
        %v3788 = vsel %vm1981, %v3756, %v3143
        %v3789 = vsel %vm1981, %v3757, %v3145
        %v3790 = vsel %vm1981, %v3758, %v3147
        %v3791 = vsel %vm1981, %v3759, %v3149
        %v3792 = vsel %vm1981, %v3760, %v3151
        %v3793 = vsel %vm1981, %v3761, %v3153
        %v3794 = vsel %vm1981, %v3762, %v3155
        %v3795 = vsel %vm1981, %v3763, %v3157
        %v3796 = vsel %vm1981, %v3764, %v3159
        %v3797 = vsel %vm1981, %v3765, %v3161
        %v3798 = vsel %vm1981, %v3766, %v3163
        %v3799 = vsel %vm1981, %v3767, %v3165
        %v3800 = vsel %vm1981, %v3768, %v3167
        %v3801 = vsel %vm1981, %v3769, %v3169
        %v3802 = vsel %vm1981, %v3770, %v3171
        %v3803 = vsel %vm1981, %v3771, %v3173
        %v3804 = vsel %vm1981, %v3772, %v3175
        %v3805 = vsel %vm1981, %v3773, %v3177
        %v3806 = vsel %vm1981, %v3774, %v3179
        %v3807 = vsel %vm1981, %v3775, %v3181
        %v3808 = vsel %vm1981, %v3776, %v3183
        %v3809 = vsel %vm1981, %v3777, %v3185
        %v3810 = vsel %vm1981, %v3778, %v3187
        %v3811 = vsel %vm1981, %v3779, %v3189
        %v3812 = vsel %vm1981, %v3780, %v3191
        %v3813 = vsel %vm1981, %v3781, %v3193
        %v3814 = vsel %vm1981, %v3782, %v3195
        %v3815 = vsel %vm1981, %v3783, %v3197
        %vm3816 = vcmask 392192
        %v3817 = vsel %vm3816, %v3784, %v3230
        %v3818 = vsel %vm3816, %v3785, %v3232
        %v3819 = vsel %vm3816, %v3786, %v3234
        %v3820 = vsel %vm3816, %v3787, %v3236
        %v3821 = vsel %vm3816, %v3788, %v3238
        %v3822 = vsel %vm3816, %v3789, %v3240
        %v3823 = vsel %vm3816, %v3790, %v3242
        %v3824 = vsel %vm3816, %v3791, %v3244
        %v3825 = vsel %vm3816, %v3792, %v3246
        %v3826 = vsel %vm3816, %v3793, %v3248
        %v3827 = vsel %vm3816, %v3794, %v3250
        %v3828 = vsel %vm3816, %v3795, %v3252
        %v3829 = vsel %vm3816, %v3796, %v3254
        %v3830 = vsel %vm3816, %v3797, %v3256
        %v3831 = vsel %vm3816, %v3798, %v3258
        %v3832 = vsel %vm3816, %v3799, %v3260
        %v3833 = vsel %vm3816, %v3800, %v3262
        %v3834 = vsel %vm3816, %v3801, %v3264
        %v3835 = vsel %vm3816, %v3802, %v3266
        %v3836 = vsel %vm3816, %v3803, %v3268
        %v3837 = vsel %vm3816, %v3804, %v3270
        %v3838 = vsel %vm3816, %v3805, %v3272
        %v3839 = vsel %vm3816, %v3806, %v3274
        %v3840 = vsel %vm3816, %v3807, %v3276
        %v3841 = vsel %vm3816, %v3808, %v3278
        %v3842 = vsel %vm3816, %v3809, %v3280
        %v3843 = vsel %vm3816, %v3810, %v3282
        %v3844 = vsel %vm3816, %v3811, %v3284
        %v3845 = vsel %vm3816, %v3812, %v3286
        %v3846 = vsel %vm3816, %v3813, %v3288
        %v3847 = vsel %vm3816, %v3814, %v3290
        %v3848 = vsel %vm3816, %v3815, %v3292
        %vm3849 = vcmask 523264
        %v3850 = vsel %vm3849, %v3817, %v3332
        %v3851 = vsel %vm3849, %v3818, %v3334
        %v3852 = vsel %vm3849, %v3819, %v3336
        %v3853 = vsel %vm3849, %v3820, %v3338
        %v3854 = vsel %vm3849, %v3821, %v3340
        %v3855 = vsel %vm3849, %v3822, %v3342
        %v3856 = vsel %vm3849, %v3823, %v3344
        %v3857 = vsel %vm3849, %v3824, %v3346
        %v3858 = vsel %vm3849, %v3825, %v3348
        %v3859 = vsel %vm3849, %v3826, %v3350
        %v3860 = vsel %vm3849, %v3827, %v3352
        %v3861 = vsel %vm3849, %v3828, %v3354
        %v3862 = vsel %vm3849, %v3829, %v3356
        %v3863 = vsel %vm3849, %v3830, %v3358
        %v3864 = vsel %vm3849, %v3831, %v3360
        %v3865 = vsel %vm3849, %v3832, %v3362
        %v3866 = vsel %vm3849, %v3833, %v3364
        %v3867 = vsel %vm3849, %v3834, %v3366
        %v3868 = vsel %vm3849, %v3835, %v3368
        %v3869 = vsel %vm3849, %v3836, %v3370
        %v3870 = vsel %vm3849, %v3837, %v3372
        %v3871 = vsel %vm3849, %v3838, %v3374
        %v3872 = vsel %vm3849, %v3839, %v3376
        %v3873 = vsel %vm3849, %v3840, %v3378
        %v3874 = vsel %vm3849, %v3841, %v3380
        %v3875 = vsel %vm3849, %v3842, %v3382
        %v3876 = vsel %vm3849, %v3843, %v3384
        %v3877 = vsel %vm3849, %v3844, %v3386
        %v3878 = vsel %vm3849, %v3845, %v3388
        %v3879 = vsel %vm3849, %v3846, %v3390
        %v3880 = vsel %vm3849, %v3847, %v3392
        %v3881 = vsel %vm3849, %v3848, %v3394
        %vm3882 = vcmask 654336
        %v3883 = vsel %vm3882, %v3850, %v3433
        %v3884 = vsel %vm3882, %v3851, %v3435
        %v3885 = vsel %vm3882, %v3852, %v3437
        %v3886 = vsel %vm3882, %v3853, %v3439
        %v3887 = vsel %vm3882, %v3854, %v3441
        %v3888 = vsel %vm3882, %v3855, %v3443
        %v3889 = vsel %vm3882, %v3856, %v3445
        %v3890 = vsel %vm3882, %v3857, %v3447
        %v3891 = vsel %vm3882, %v3858, %v3449
        %v3892 = vsel %vm3882, %v3859, %v3451
        %v3893 = vsel %vm3882, %v3860, %v3453
        %v3894 = vsel %vm3882, %v3861, %v3455
        %v3895 = vsel %vm3882, %v3862, %v3457
        %v3896 = vsel %vm3882, %v3863, %v3459
        %v3897 = vsel %vm3882, %v3864, %v3461
        %v3898 = vsel %vm3882, %v3865, %v3463
        %v3899 = vsel %vm3882, %v3866, %v3465
        %v3900 = vsel %vm3882, %v3867, %v3467
        %v3901 = vsel %vm3882, %v3868, %v3469
        %v3902 = vsel %vm3882, %v3869, %v3471
        %v3903 = vsel %vm3882, %v3870, %v3473
        %v3904 = vsel %vm3882, %v3871, %v3475
        %v3905 = vsel %vm3882, %v3872, %v3477
        %v3906 = vsel %vm3882, %v3873, %v3479
        %v3907 = vsel %vm3882, %v3874, %v3481
        %v3908 = vsel %vm3882, %v3875, %v3483
        %v3909 = vsel %vm3882, %v3876, %v3485
        %v3910 = vsel %vm3882, %v3877, %v3487
        %v3911 = vsel %vm3882, %v3878, %v3489
        %v3912 = vsel %vm3882, %v3879, %v3491
        %v3913 = vsel %vm3882, %v3880, %v3493
        %v3914 = vsel %vm3882, %v3881, %v3495
        %vm3915 = vcmask 785408
        %v3916 = vsel %vm3915, %v3883, %v3529
        %v3917 = vsel %vm3915, %v3884, %v3531
        %v3918 = vsel %vm3915, %v3885, %v3533
        %v3919 = vsel %vm3915, %v3886, %v3535
        %v3920 = vsel %vm3915, %v3887, %v3537
        %v3921 = vsel %vm3915, %v3888, %v3539
        %v3922 = vsel %vm3915, %v3889, %v3541
        %v3923 = vsel %vm3915, %v3890, %v3543
        %v3924 = vsel %vm3915, %v3891, %v3545
        %v3925 = vsel %vm3915, %v3892, %v3547
        %v3926 = vsel %vm3915, %v3893, %v3549
        %v3927 = vsel %vm3915, %v3894, %v3551
        %v3928 = vsel %vm3915, %v3895, %v3553
        %v3929 = vsel %vm3915, %v3896, %v3555
        %v3930 = vsel %vm3915, %v3897, %v3557
        %v3931 = vsel %vm3915, %v3898, %v3559
        %v3932 = vsel %vm3915, %v3899, %v3561
        %v3933 = vsel %vm3915, %v3900, %v3563
        %v3934 = vsel %vm3915, %v3901, %v3565
        %v3935 = vsel %vm3915, %v3902, %v3567
        %v3936 = vsel %vm3915, %v3903, %v3569
        %v3937 = vsel %vm3915, %v3904, %v3571
        %v3938 = vsel %vm3915, %v3905, %v3573
        %v3939 = vsel %vm3915, %v3906, %v3575
        %v3940 = vsel %vm3915, %v3907, %v3577
        %v3941 = vsel %vm3915, %v3908, %v3579
        %v3942 = vsel %vm3915, %v3909, %v3581
        %v3943 = vsel %vm3915, %v3910, %v3583
        %v3944 = vsel %vm3915, %v3911, %v3585
        %v3945 = vsel %vm3915, %v3912, %v3587
        %v3946 = vsel %vm3915, %v3913, %v3589
        %v3947 = vsel %vm3915, %v3914, %v3591
        %vm3948 = vcmask 916480
        %v3949 = vsel %vm3948, %v3916, %v3625
        %v3950 = vsel %vm3948, %v3917, %v3627
        %v3951 = vsel %vm3948, %v3918, %v3629
        %v3952 = vsel %vm3948, %v3919, %v3631
        %v3953 = vsel %vm3948, %v3920, %v3633
        %v3954 = vsel %vm3948, %v3921, %v3635
        %v3955 = vsel %vm3948, %v3922, %v3637
        %v3956 = vsel %vm3948, %v3923, %v3639
        %v3957 = vsel %vm3948, %v3924, %v3641
        %v3958 = vsel %vm3948, %v3925, %v3643
        %v3959 = vsel %vm3948, %v3926, %v3645
        %v3960 = vsel %vm3948, %v3927, %v3647
        %v3961 = vsel %vm3948, %v3928, %v3649
        %v3962 = vsel %vm3948, %v3929, %v3651
        %v3963 = vsel %vm3948, %v3930, %v3653
        %v3964 = vsel %vm3948, %v3931, %v3655
        %v3965 = vsel %vm3948, %v3932, %v3657
        %v3966 = vsel %vm3948, %v3933, %v3659
        %v3967 = vsel %vm3948, %v3934, %v3661
        %v3968 = vsel %vm3948, %v3935, %v3663
        %v3969 = vsel %vm3948, %v3936, %v3665
        %v3970 = vsel %vm3948, %v3937, %v3667
        %v3971 = vsel %vm3948, %v3938, %v3669
        %v3972 = vsel %vm3948, %v3939, %v3671
        %v3973 = vsel %vm3948, %v3940, %v3673
        %v3974 = vsel %vm3948, %v3941, %v3675
        %v3975 = vsel %vm3948, %v3942, %v3677
        %v3976 = vsel %vm3948, %v3943, %v3679
        %v3977 = vsel %vm3948, %v3944, %v3681
        %v3978 = vsel %vm3948, %v3945, %v3683
        %v3979 = vsel %vm3948, %v3946, %v3685
        %v3980 = vsel %vm3948, %v3947, %v3687
        %v3981 = vpack.c.bf16 %v3950, %v3949
        %v3982 = vpack.c.bf16 %v3072, %v3070
        %v3983 = vpack.c.bf16 %v3952, %v3951
        %v3984 = vpack.c.bf16 %v3077, %v3075
        %v3985 = vpack.c.bf16 %v3954, %v3953
        %v3986 = vpack.c.bf16 %v3082, %v3080
        %v3987 = vpack.c.bf16 %v3956, %v3955
        %v3988 = vpack.c.bf16 %v3087, %v3085
        %v3989 = vpack.c.bf16 %v3958, %v3957
        %v3990 = vpack.c.bf16 %v3092, %v3090
        %v3991 = vpack.c.bf16 %v3960, %v3959
        %v3992 = vpack.c.bf16 %v3097, %v3095
        %v3993 = vpack.c.bf16 %v3962, %v3961
        %v3994 = vpack.c.bf16 %v3102, %v3100
        %v3995 = vpack.c.bf16 %v3964, %v3963
        %v3996 = vpack.c.bf16 %v3107, %v3105
        %v3997 = vpack.c.bf16 %v3966, %v3965
        %v3998 = vpack.c.bf16 %v3112, %v3110
        %v3999 = vpack.c.bf16 %v3968, %v3967
        %v4000 = vpack.c.bf16 %v3117, %v3115
        %v4001 = vpack.c.bf16 %v3970, %v3969
        %v4002 = vpack.c.bf16 %v3122, %v3120
        %v4003 = vpack.c.bf16 %v3972, %v3971
        %v4004 = vpack.c.bf16 %v3127, %v3125
        %v4005 = vpack.c.bf16 %v3974, %v3973
        %v4006 = vpack.c.bf16 %v3132, %v3130
        %v4007 = vpack.c.bf16 %v3976, %v3975
        %v4008 = vpack.c.bf16 %v3137, %v3135
        %v4009 = vpack.c.bf16 %v3978, %v3977
        %v4010 = vpack.c.bf16 %v3431, %v3429
        %v4011 = vpack.c.bf16 %v3980, %v3979
        %v4012 = vpack.c.bf16 %v990, %v988
        %v4013 = vld [vmem:[%s9] sm:$0xff]
        %v4014 = vld [vmem:[%s9 + $0x8] sm:$0xff]
        %v4015 = vld [vmem:[%s9 + $0x10] sm:$0xff]
        %v4016 = vld [vmem:[%s9 + $0x18] sm:$0xff]
        %v4017 = vld [vmem:[%s9 + $0x20] sm:$0xff]
        %v4018 = vld [vmem:[%s9 + $0x28] sm:$0xff]
        %v4019 = vld [vmem:[%s9 + $0x30] sm:$0xff]
        %v4020 = vld [vmem:[%s9 + $0x38] sm:$0xff]
        %v4021 = vld [vmem:[%s9 + $0x40] sm:$0xff]
        %v4022 = vld [vmem:[%s9 + $0x48] sm:$0xff]
        %v4023 = vld [vmem:[%s9 + $0x50] sm:$0xff]
        %v4024 = vld [vmem:[%s9 + $0x58] sm:$0xff]
        %v4025 = vld [vmem:[%s9 + $0x60] sm:$0xff]
        %v4026 = vld [vmem:[%s9 + $0x68] sm:$0xff]
        %v4027 = vld [vmem:[%s9 + $0x70] sm:$0xff]
        %v4028 = vld [vmem:[%s9 + $0x78] sm:$0xff]
        %v4029 = vld [vmem:[%s9 + $0x80] sm:$0xff]
        %v4030 = vld [vmem:[%s9 + $0x88] sm:$0xff]
        %v4031 = vpack.c.bf16 %v4014, %v4013
        %v4032 = vpack.c.bf16 %v4016, %v4015
        %v4033 = vpack.c.bf16 %v4018, %v4017
        %v4034 = vpack.c.bf16 %v4020, %v4019
        %v4035 = vpack.c.bf16 %v4022, %v4021
        %v4036 = vpack.c.bf16 %v4024, %v4023
        %v4037 = vpack.c.bf16 %v4026, %v4025
        %v4038 = vpack.c.bf16 %v4028, %v4027
        %v4039 = vpack.c.bf16 %v4030, %v4029
        %v4041 = vsel %vm1849, %v3982, 0
        %v4044 = vsel %vm1849, %v3984, 0
        %v4047 = vsel %vm1849, %v3986, 0
        %v4050 = vsel %vm1849, %v3988, 0
        %v4053 = vsel %vm1849, %v3990, 0
        %v4056 = vsel %vm1849, %v3992, 0
        %v4059 = vsel %vm1849, %v3994, 0
        %v4062 = vsel %vm1849, %v3996, 0
        %v4065 = vsel %vm1849, %v3998, 0
        %v4068 = vsel %vm1849, %v4000, 0
        %v4071 = vsel %vm1849, %v4002, 0
        %v4074 = vsel %vm1849, %v4004, 0
        %v4077 = vsel %vm1849, %v4006, 0
        %v4080 = vsel %vm1849, %v4008, 0
        %v4083 = vsel %vm1849, %v4010, 0
        %v4086 = vsel %vm1849, %v4012, 0
        %4088 = vmatprep.subr.bf16.mxu0 0
        %4089 = vmatpush1.bf16.msra.mxu0 %v4038
        %4090 = vmatprep.subr.bf16.mxu0 0
        %4091 = vmatpush1.bf16.msra.mxu0 %v4037
        %4092 = vmatprep.subr.bf16.mxu0 0
        %4093 = vmatpush1.bf16.msra.mxu0 %v4036
        %4094 = vmatprep.subr.bf16.mxu0 0
        %4095 = vmatpush1.bf16.msra.mxu0 %v4035
        %4096 = vmatprep.subr.bf16.mxu0 0
        %4097 = vmatpush1.bf16.msra.mxu0 %v4034
        %4098 = vmatprep.subr.bf16.mxu0 0
        %4099 = vmatpush1.bf16.msra.mxu0 %v4033
        %4100 = vmatprep.subr.bf16.mxu0 0
        %4101 = vmatpush1.bf16.msra.mxu0 %v4032
        %4102 = vmatprep.subr.bf16.mxu0 0
        %4103 = vmatpush1.bf16.msra.mxu0 %v4031
        %4104 = vmatprep.subr.bf16.mxu0 0
        %4105 = vmatpush2.bf16.msra.mxu0 0
        %4106 = vmatprep.subr.bf16.mxu0 0
        %4107 = vmatpush2.bf16.msra.mxu0 0
        %4108 = vmatprep.subr.bf16.mxu0 0
        %4109 = vmatpush2.bf16.msra.mxu0 0
        %4110 = vmatprep.subr.bf16.mxu0 0
        %4111 = vmatpush2.bf16.msra.mxu0 0
        %4112 = vmatprep.subr.bf16.mxu0 0
        %4113 = vmatpush2.bf16.msra.mxu0 0
        %4114 = vmatprep.subr.bf16.mxu0 0
        %4115 = vmatpush2.bf16.msra.mxu0 0
        %4116 = vmatprep.subr.bf16.mxu0 0
        %4117 = vmatpush2.bf16.msra.mxu0 0
        %4118 = vmatprep.subr.bf16.mxu0 0
        %4119 = vmatpush2.bf16.msra.mxu0 %v4039
        %4120 = vmatprep.mubr.bf16.mxu0 %v4041
        %4121 = vmatmul.mubr.bf16.gmra.mxu0 %v3981
        %v4122 = vpop.f32.mrf.mxu0
        %v4123 = vadd.f32 0.0, %v4122
        %v4124 = vpop.f32.mrf.mxu0
        %v4125 = vpop.f32.mrf.mxu0
        %v4126 = vadd.f32 0.0, %v4125
        %v4127 = vpop.f32.mrf.mxu0
        %4128 = vmatprep.mubr.bf16.mxu0 %v4044
        %4129 = vmatmul.mubr.bf16.gmra.mxu0 %v3983
        %v4130 = vpop.f32.mrf.mxu0
        %v4131 = vadd.f32 0.0, %v4130
        %v4132 = vpop.f32.mrf.mxu0
        %v4133 = vpop.f32.mrf.mxu0
        %v4134 = vadd.f32 0.0, %v4133
        %v4135 = vpop.f32.mrf.mxu0
        %4136 = vmatprep.mubr.bf16.mxu0 %v4047
        %4137 = vmatmul.mubr.bf16.gmra.mxu0 %v3985
        %v4138 = vpop.f32.mrf.mxu0
        %v4139 = vadd.f32 0.0, %v4138
        %v4140 = vpop.f32.mrf.mxu0
        %v4141 = vpop.f32.mrf.mxu0
        %v4142 = vadd.f32 0.0, %v4141
        %v4143 = vpop.f32.mrf.mxu0
        %4144 = vmatprep.mubr.bf16.mxu0 %v4050
        %4145 = vmatmul.mubr.bf16.gmra.mxu0 %v3987
        %v4146 = vpop.f32.mrf.mxu0
        %v4147 = vadd.f32 0.0, %v4146
        %v4148 = vpop.f32.mrf.mxu0
        %v4149 = vpop.f32.mrf.mxu0
        %v4150 = vadd.f32 0.0, %v4149
        %v4151 = vpop.f32.mrf.mxu0
        %4152 = vmatprep.mubr.bf16.mxu0 %v4053
        %4153 = vmatmul.mubr.bf16.gmra.mxu0 %v3989
        %v4154 = vpop.f32.mrf.mxu0
        %v4155 = vadd.f32 0.0, %v4154
        %v4156 = vpop.f32.mrf.mxu0
        %v4157 = vpop.f32.mrf.mxu0
        %v4158 = vadd.f32 0.0, %v4157
        %v4159 = vpop.f32.mrf.mxu0
        %4160 = vmatprep.mubr.bf16.mxu0 %v4056
        %4161 = vmatmul.mubr.bf16.gmra.mxu0 %v3991
        %v4162 = vpop.f32.mrf.mxu0
        %v4163 = vadd.f32 0.0, %v4162
        %v4164 = vpop.f32.mrf.mxu0
        %v4165 = vpop.f32.mrf.mxu0
        %v4166 = vadd.f32 0.0, %v4165
        %v4167 = vpop.f32.mrf.mxu0
        %4168 = vmatprep.mubr.bf16.mxu0 %v4059
        %4169 = vmatmul.mubr.bf16.gmra.mxu0 %v3993
        %v4170 = vpop.f32.mrf.mxu0
        %v4171 = vadd.f32 0.0, %v4170
        %v4172 = vpop.f32.mrf.mxu0
        %v4173 = vpop.f32.mrf.mxu0
        %v4174 = vadd.f32 0.0, %v4173
        %v4175 = vpop.f32.mrf.mxu0
        %4176 = vmatprep.mubr.bf16.mxu0 %v4062
        %4177 = vmatmul.mubr.bf16.gmra.mxu0 %v3995
        %v4178 = vpop.f32.mrf.mxu0
        %v4179 = vadd.f32 0.0, %v4178
        %v4180 = vpop.f32.mrf.mxu0
        %v4181 = vpop.f32.mrf.mxu0
        %v4182 = vadd.f32 0.0, %v4181
        %v4183 = vpop.f32.mrf.mxu0
        %4184 = vmatprep.mubr.bf16.mxu0 %v4065
        %4185 = vmatmul.mubr.bf16.gmra.mxu0 %v3997
        %v4186 = vpop.f32.mrf.mxu0
        %v4187 = vadd.f32 0.0, %v4186
        %v4188 = vpop.f32.mrf.mxu0
        %v4189 = vpop.f32.mrf.mxu0
        %v4190 = vadd.f32 0.0, %v4189
        %v4191 = vpop.f32.mrf.mxu0
        %4192 = vmatprep.mubr.bf16.mxu0 %v4068
        %4193 = vmatmul.mubr.bf16.gmra.mxu0 %v3999
        %v4194 = vpop.f32.mrf.mxu0
        %v4195 = vadd.f32 0.0, %v4194
        %v4196 = vpop.f32.mrf.mxu0
        %v4197 = vpop.f32.mrf.mxu0
        %v4198 = vadd.f32 0.0, %v4197
        %v4199 = vpop.f32.mrf.mxu0
        %4200 = vmatprep.mubr.bf16.mxu0 %v4071
        %4201 = vmatmul.mubr.bf16.gmra.mxu0 %v4001
        %v4202 = vpop.f32.mrf.mxu0
        %v4203 = vadd.f32 0.0, %v4202
        %v4204 = vpop.f32.mrf.mxu0
        %v4205 = vpop.f32.mrf.mxu0
        %v4206 = vadd.f32 0.0, %v4205
        %v4207 = vpop.f32.mrf.mxu0
        %4208 = vmatprep.mubr.bf16.mxu0 %v4074
        %4209 = vmatmul.mubr.bf16.gmra.mxu0 %v4003
        %v4210 = vpop.f32.mrf.mxu0
        %v4211 = vadd.f32 0.0, %v4210
        %v4212 = vpop.f32.mrf.mxu0
        %v4213 = vpop.f32.mrf.mxu0
        %v4214 = vadd.f32 0.0, %v4213
        %v4215 = vpop.f32.mrf.mxu0
        %4216 = vmatprep.mubr.bf16.mxu0 %v4077
        %4217 = vmatmul.mubr.bf16.gmra.mxu0 %v4005
        %v4218 = vpop.f32.mrf.mxu0
        %v4219 = vadd.f32 0.0, %v4218
        %v4220 = vpop.f32.mrf.mxu0
        %v4221 = vpop.f32.mrf.mxu0
        %v4222 = vadd.f32 0.0, %v4221
        %v4223 = vpop.f32.mrf.mxu0
        %4224 = vmatprep.mubr.bf16.mxu0 %v4080
        %4225 = vmatmul.mubr.bf16.gmra.mxu0 %v4007
        %v4226 = vpop.f32.mrf.mxu0
        %v4227 = vadd.f32 0.0, %v4226
        %v4228 = vpop.f32.mrf.mxu0
        %v4229 = vpop.f32.mrf.mxu0
        %v4230 = vadd.f32 0.0, %v4229
        %v4231 = vpop.f32.mrf.mxu0
        %4232 = vmatprep.mubr.bf16.mxu0 %v4083
        %4233 = vmatmul.mubr.bf16.gmra.mxu0 %v4009
        %v4234 = vpop.f32.mrf.mxu0
        %v4235 = vadd.f32 0.0, %v4234
        %v4236 = vpop.f32.mrf.mxu0
        %v4237 = vpop.f32.mrf.mxu0
        %v4238 = vadd.f32 0.0, %v4237
        %v4239 = vpop.f32.mrf.mxu0
        %4240 = vmatprep.mubr.bf16.mxu0 %v4086
        %4241 = vmatmul.mubr.bf16.gmra.mxu0 %v4011
        %v4242 = vpop.f32.mrf.mxu0
        %v4243 = vadd.f32 0.0, %v4242
        %v4244 = vpop.f32.mrf.mxu0
        %v4245 = vpop.f32.mrf.mxu0
        %v4246 = vadd.f32 0.0, %v4245
        %v4247 = vpop.f32.mrf.mxu0
        %4248 = vdwg.mxu0
        %v4249 = vld [vmem:[%s10] sm:$0x1]
        %v4251 = vlaneseq
        %v4252 = vshrl.u32 %v4251, 7
        %v4253 = vsub.s32 0, %v4252
        %v4254 = vrot.slane %v4249, %v4253
        %v4256 = vmul.f32 %v4123, %v4254
        %v4257 = vmul.f32 %v4126, %v4254
        %v4258 = vmul.f32 %v4131, %v4254
        %v4259 = vmul.f32 %v4134, %v4254
        %v4260 = vmul.f32 %v4139, %v4254
        %v4261 = vmul.f32 %v4142, %v4254
        %v4262 = vmul.f32 %v4147, %v4254
        %v4263 = vmul.f32 %v4150, %v4254
        %v4264 = vmul.f32 %v4155, %v4254
        %v4265 = vmul.f32 %v4158, %v4254
        %v4266 = vmul.f32 %v4163, %v4254
        %v4267 = vmul.f32 %v4166, %v4254
        %v4268 = vmul.f32 %v4171, %v4254
        %v4269 = vmul.f32 %v4174, %v4254
        %v4270 = vmul.f32 %v4179, %v4254
        %v4271 = vmul.f32 %v4182, %v4254
        %v4272 = vmul.f32 %v4187, %v4254
        %v4273 = vmul.f32 %v4190, %v4254
        %v4274 = vmul.f32 %v4195, %v4254
        %v4275 = vmul.f32 %v4198, %v4254
        %v4276 = vmul.f32 %v4203, %v4254
        %v4277 = vmul.f32 %v4206, %v4254
        %v4278 = vmul.f32 %v4211, %v4254
        %v4279 = vmul.f32 %v4214, %v4254
        %v4280 = vmul.f32 %v4219, %v4254
        %v4281 = vmul.f32 %v4222, %v4254
        %v4282 = vmul.f32 %v4227, %v4254
        %v4283 = vmul.f32 %v4230, %v4254
        %v4284 = vmul.f32 %v4235, %v4254
        %v4285 = vmul.f32 %v4238, %v4254
        %v4286 = vmul.f32 %v4243, %v4254
        %v4287 = vmul.f32 %v4246, %v4254
        %v4288 = vld [vmem:[%s11] sm:$0x1]
        %v4290 = vlaneseq
        %v4291 = vshrl.u32 %v4290, 7
        %v4292 = vsub.s32 0, %v4291
        %v4293 = vrot.slane %v4288, %v4292
        %v4295 = vadd.f32 %v4256, %v4293
        %v4296 = vadd.f32 %v4257, %v4293
        %v4297 = vadd.f32 %v4258, %v4293
        %v4298 = vadd.f32 %v4259, %v4293
        %v4299 = vadd.f32 %v4260, %v4293
        %v4300 = vadd.f32 %v4261, %v4293
        %v4301 = vadd.f32 %v4262, %v4293
        %v4302 = vadd.f32 %v4263, %v4293
        %v4303 = vadd.f32 %v4264, %v4293
        %v4304 = vadd.f32 %v4265, %v4293
        %v4305 = vadd.f32 %v4266, %v4293
        %v4306 = vadd.f32 %v4267, %v4293
        %v4307 = vadd.f32 %v4268, %v4293
        %v4308 = vadd.f32 %v4269, %v4293
        %v4309 = vadd.f32 %v4270, %v4293
        %v4310 = vadd.f32 %v4271, %v4293
        %v4311 = vadd.f32 %v4272, %v4293
        %v4312 = vadd.f32 %v4273, %v4293
        %v4313 = vadd.f32 %v4274, %v4293
        %v4314 = vadd.f32 %v4275, %v4293
        %v4315 = vadd.f32 %v4276, %v4293
        %v4316 = vadd.f32 %v4277, %v4293
        %v4317 = vadd.f32 %v4278, %v4293
        %v4318 = vadd.f32 %v4279, %v4293
        %v4319 = vadd.f32 %v4280, %v4293
        %v4320 = vadd.f32 %v4281, %v4293
        %v4321 = vadd.f32 %v4282, %v4293
        %v4322 = vadd.f32 %v4283, %v4293
        %v4323 = vadd.f32 %v4284, %v4293
        %v4324 = vadd.f32 %v4285, %v4293
        %v4325 = vadd.f32 %v4286, %v4293
        %v4326 = vadd.f32 %v4287, %v4293
        %v4327 = vmax.f32 %v4295, 0.0
        %v4328 = vmax.f32 %v4296, 0.0
        %v4329 = vmax.f32 %v4297, 0.0
        %v4330 = vmax.f32 %v4298, 0.0
        %v4331 = vmax.f32 %v4299, 0.0
        %v4332 = vmax.f32 %v4300, 0.0
        %v4333 = vmax.f32 %v4301, 0.0
        %v4334 = vmax.f32 %v4302, 0.0
        %v4335 = vmax.f32 %v4303, 0.0
        %v4336 = vmax.f32 %v4304, 0.0
        %v4337 = vmax.f32 %v4305, 0.0
        %v4338 = vmax.f32 %v4306, 0.0
        %v4339 = vmax.f32 %v4307, 0.0
        %v4340 = vmax.f32 %v4308, 0.0
        %v4341 = vmax.f32 %v4309, 0.0
        %v4342 = vmax.f32 %v4310, 0.0
        %v4343 = vmax.f32 %v4311, 0.0
        %v4344 = vmax.f32 %v4312, 0.0
        %v4345 = vmax.f32 %v4313, 0.0
        %v4346 = vmax.f32 %v4314, 0.0
        %v4347 = vmax.f32 %v4315, 0.0
        %v4348 = vmax.f32 %v4316, 0.0
        %v4349 = vmax.f32 %v4317, 0.0
        %v4350 = vmax.f32 %v4318, 0.0
        %v4351 = vmax.f32 %v4319, 0.0
        %v4352 = vmax.f32 %v4320, 0.0
        %v4353 = vmax.f32 %v4321, 0.0
        %v4354 = vmax.f32 %v4322, 0.0
        %v4355 = vmax.f32 %v4323, 0.0
        %v4356 = vmax.f32 %v4324, 0.0
        %v4357 = vmax.f32 %v4325, 0.0
        %v4358 = vmax.f32 %v4326, 0.0
        %v4391 = vrot.slane %v4327, 7
        %v4392 = vrot.slane %v4328, 7
        %v4393 = vsel %vm642, %v4391, %v4392
        %v4394 = vrot.slane %v4329, 7
        %v4395 = vrot.slane %v4330, 7
        %v4396 = vsel %vm642, %v4394, %v4395
        %v4397 = vrot.slane %v4331, 7
        %v4398 = vrot.slane %v4332, 7
        %v4399 = vsel %vm642, %v4397, %v4398
        %v4400 = vrot.slane %v4333, 7
        %v4401 = vrot.slane %v4334, 7
        %v4402 = vsel %vm642, %v4400, %v4401
        %v4403 = vrot.slane %v4335, 7
        %v4404 = vrot.slane %v4336, 7
        %v4405 = vsel %vm642, %v4403, %v4404
        %v4406 = vrot.slane %v4337, 7
        %v4407 = vrot.slane %v4338, 7
        %v4408 = vsel %vm642, %v4406, %v4407
        %v4409 = vrot.slane %v4339, 7
        %v4410 = vrot.slane %v4340, 7
        %v4411 = vsel %vm642, %v4409, %v4410
        %v4412 = vrot.slane %v4341, 7
        %v4413 = vrot.slane %v4342, 7
        %v4414 = vsel %vm642, %v4412, %v4413
        %v4415 = vrot.slane %v4343, 7
        %v4416 = vrot.slane %v4344, 7
        %v4417 = vsel %vm642, %v4415, %v4416
        %v4418 = vrot.slane %v4345, 7
        %v4419 = vrot.slane %v4346, 7
        %v4420 = vsel %vm642, %v4418, %v4419
        %v4421 = vrot.slane %v4347, 7
        %v4422 = vrot.slane %v4348, 7
        %v4423 = vsel %vm642, %v4421, %v4422
        %v4424 = vrot.slane %v4349, 7
        %v4425 = vrot.slane %v4350, 7
        %v4426 = vsel %vm642, %v4424, %v4425
        %v4427 = vrot.slane %v4351, 7
        %v4428 = vrot.slane %v4352, 7
        %v4429 = vsel %vm642, %v4427, %v4428
        %v4430 = vrot.slane %v4353, 7
        %v4431 = vrot.slane %v4354, 7
        %v4432 = vsel %vm642, %v4430, %v4431
        %v4433 = vrot.slane %v4355, 7
        %v4434 = vrot.slane %v4356, 7
        %v4435 = vsel %vm642, %v4433, %v4434
        %v4436 = vrot.slane %v4357, 7
        %v4437 = vrot.slane %v4358, 7
        %v4438 = vsel %vm642, %v4436, %v4437
        %v4486 = vsel %vm642, 0.0, %v4391
        %v4487 = vsel %vm642, 0.0, %v4394
        %v4488 = vsel %vm642, 0.0, %v4397
        %v4489 = vsel %vm642, 0.0, %v4400
        %v4490 = vsel %vm642, 0.0, %v4403
        %v4491 = vsel %vm642, 0.0, %v4406
        %v4492 = vsel %vm642, 0.0, %v4409
        %v4493 = vsel %vm642, 0.0, %v4412
        %v4494 = vsel %vm642, 0.0, %v4415
        %v4495 = vsel %vm642, 0.0, %v4418
        %v4496 = vsel %vm642, 0.0, %v4421
        %v4497 = vsel %vm642, 0.0, %v4424
        %v4498 = vsel %vm642, 0.0, %v4427
        %v4499 = vsel %vm642, 0.0, %v4430
        %v4500 = vsel %vm642, 0.0, %v4433
        %v4501 = vsel %vm642, 0.0, %v4436
        %v4502 = vsel %vm642, %v4392, 0.0
        %v4503 = vsel %vm642, %v4395, 0.0
        %v4504 = vsel %vm642, %v4398, 0.0
        %v4505 = vsel %vm642, %v4401, 0.0
        %v4506 = vsel %vm642, %v4404, 0.0
        %v4507 = vsel %vm642, %v4407, 0.0
        %v4508 = vsel %vm642, %v4410, 0.0
        %v4509 = vsel %vm642, %v4413, 0.0
        %v4510 = vsel %vm642, %v4416, 0.0
        %v4511 = vsel %vm642, %v4419, 0.0
        %v4512 = vsel %vm642, %v4422, 0.0
        %v4513 = vsel %vm642, %v4425, 0.0
        %v4514 = vsel %vm642, %v4428, 0.0
        %v4515 = vsel %vm642, %v4431, 0.0
        %v4516 = vsel %vm642, %v4434, 0.0
        %v4517 = vsel %vm642, %v4437, 0.0
        %v4548 = vrot.slane %v4486, 1
        %v4549 = vrot.slane %v4393, 1
        %v4550 = vsel %vm808, %v4548, %v4549
        %v4551 = vrot.slane %v4502, 1
        %v4552 = vsel %vm808, %v4549, %v4551
        %v4553 = vrot.slane %v4487, 1
        %v4554 = vrot.slane %v4396, 1
        %v4555 = vsel %vm808, %v4553, %v4554
        %v4556 = vrot.slane %v4503, 1
        %v4557 = vsel %vm808, %v4554, %v4556
        %v4558 = vrot.slane %v4488, 1
        %v4559 = vrot.slane %v4399, 1
        %v4560 = vsel %vm808, %v4558, %v4559
        %v4561 = vrot.slane %v4504, 1
        %v4562 = vsel %vm808, %v4559, %v4561
        %v4563 = vrot.slane %v4489, 1
        %v4564 = vrot.slane %v4402, 1
        %v4565 = vsel %vm808, %v4563, %v4564
        %v4566 = vrot.slane %v4505, 1
        %v4567 = vsel %vm808, %v4564, %v4566
        %v4568 = vrot.slane %v4490, 1
        %v4569 = vrot.slane %v4405, 1
        %v4570 = vsel %vm808, %v4568, %v4569
        %v4571 = vrot.slane %v4506, 1
        %v4572 = vsel %vm808, %v4569, %v4571
        %v4573 = vrot.slane %v4491, 1
        %v4574 = vrot.slane %v4408, 1
        %v4575 = vsel %vm808, %v4573, %v4574
        %v4576 = vrot.slane %v4507, 1
        %v4577 = vsel %vm808, %v4574, %v4576
        %v4578 = vrot.slane %v4492, 1
        %v4579 = vrot.slane %v4411, 1
        %v4580 = vsel %vm808, %v4578, %v4579
        %v4581 = vrot.slane %v4508, 1
        %v4582 = vsel %vm808, %v4579, %v4581
        %v4583 = vrot.slane %v4493, 1
        %v4584 = vrot.slane %v4414, 1
        %v4585 = vsel %vm808, %v4583, %v4584
        %v4586 = vrot.slane %v4509, 1
        %v4587 = vsel %vm808, %v4584, %v4586
        %v4588 = vrot.slane %v4494, 1
        %v4589 = vrot.slane %v4417, 1
        %v4590 = vsel %vm808, %v4588, %v4589
        %v4591 = vrot.slane %v4510, 1
        %v4592 = vsel %vm808, %v4589, %v4591
        %v4593 = vrot.slane %v4495, 1
        %v4594 = vrot.slane %v4420, 1
        %v4595 = vsel %vm808, %v4593, %v4594
        %v4596 = vrot.slane %v4511, 1
        %v4597 = vsel %vm808, %v4594, %v4596
        %v4598 = vrot.slane %v4496, 1
        %v4599 = vrot.slane %v4423, 1
        %v4600 = vsel %vm808, %v4598, %v4599
        %v4601 = vrot.slane %v4512, 1
        %v4602 = vsel %vm808, %v4599, %v4601
        %v4603 = vrot.slane %v4497, 1
        %v4604 = vrot.slane %v4426, 1
        %v4605 = vsel %vm808, %v4603, %v4604
        %v4606 = vrot.slane %v4513, 1
        %v4607 = vsel %vm808, %v4604, %v4606
        %v4608 = vrot.slane %v4498, 1
        %v4609 = vrot.slane %v4429, 1
        %v4610 = vsel %vm808, %v4608, %v4609
        %v4611 = vrot.slane %v4514, 1
        %v4612 = vsel %vm808, %v4609, %v4611
        %v4613 = vrot.slane %v4499, 1
        %v4614 = vrot.slane %v4432, 1
        %v4615 = vsel %vm808, %v4613, %v4614
        %v4616 = vrot.slane %v4515, 1
        %v4617 = vsel %vm808, %v4614, %v4616
        %v4618 = vrot.slane %v4500, 1
        %v4619 = vrot.slane %v4435, 1
        %v4620 = vsel %vm808, %v4618, %v4619
        %v4621 = vrot.slane %v4516, 1
        %v4622 = vsel %vm808, %v4619, %v4621
        %4623 = vrot.lane.b32.xlu0 %v4550, 16
        %v4624 = vpop.permute.xlu0 %4623
        %4625 = vrot.lane.b32.xlu0 %v4552, 16
        %v4626 = vpop.permute.xlu0 %4625
        %4627 = vrot.lane.b32.xlu0 %v4555, 16
        %v4628 = vpop.permute.xlu0 %4627
        %4629 = vrot.lane.b32.xlu0 %v4557, 16
        %v4630 = vpop.permute.xlu0 %4629
        %4631 = vrot.lane.b32.xlu0 %v4560, 16
        %v4632 = vpop.permute.xlu0 %4631
        %4633 = vrot.lane.b32.xlu0 %v4562, 16
        %v4634 = vpop.permute.xlu0 %4633
        %4635 = vrot.lane.b32.xlu0 %v4565, 16
        %v4636 = vpop.permute.xlu0 %4635
        %4637 = vrot.lane.b32.xlu0 %v4567, 16
        %v4638 = vpop.permute.xlu0 %4637
        %4639 = vrot.lane.b32.xlu0 %v4570, 16
        %v4640 = vpop.permute.xlu0 %4639
        %4641 = vrot.lane.b32.xlu0 %v4572, 16
        %v4642 = vpop.permute.xlu0 %4641
        %4643 = vrot.lane.b32.xlu0 %v4575, 16
        %v4644 = vpop.permute.xlu0 %4643
        %4645 = vrot.lane.b32.xlu0 %v4577, 16
        %v4646 = vpop.permute.xlu0 %4645
        %4647 = vrot.lane.b32.xlu0 %v4580, 16
        %v4648 = vpop.permute.xlu0 %4647
        %4649 = vrot.lane.b32.xlu0 %v4582, 16
        %v4650 = vpop.permute.xlu0 %4649
        %4651 = vrot.lane.b32.xlu0 %v4585, 16
        %v4652 = vpop.permute.xlu0 %4651
        %4653 = vrot.lane.b32.xlu0 %v4587, 16
        %v4654 = vpop.permute.xlu0 %4653
        %4655 = vrot.lane.b32.xlu0 %v4590, 16
        %v4656 = vpop.permute.xlu0 %4655
        %4657 = vrot.lane.b32.xlu0 %v4592, 16
        %v4658 = vpop.permute.xlu0 %4657
        %4659 = vrot.lane.b32.xlu0 %v4595, 16
        %v4660 = vpop.permute.xlu0 %4659
        %4661 = vrot.lane.b32.xlu0 %v4597, 16
        %v4662 = vpop.permute.xlu0 %4661
        %4663 = vrot.lane.b32.xlu0 %v4600, 16
        %v4664 = vpop.permute.xlu0 %4663
        %4665 = vrot.lane.b32.xlu0 %v4602, 16
        %v4666 = vpop.permute.xlu0 %4665
        %4667 = vrot.lane.b32.xlu0 %v4605, 16
        %v4668 = vpop.permute.xlu0 %4667
        %4669 = vrot.lane.b32.xlu0 %v4607, 16
        %v4670 = vpop.permute.xlu0 %4669
        %4671 = vrot.lane.b32.xlu0 %v4610, 16
        %v4672 = vpop.permute.xlu0 %4671
        %4673 = vrot.lane.b32.xlu0 %v4612, 16
        %v4674 = vpop.permute.xlu0 %4673
        %4675 = vrot.lane.b32.xlu0 %v4615, 16
        %v4676 = vpop.permute.xlu0 %4675
        %4677 = vrot.lane.b32.xlu0 %v4617, 16
        %v4678 = vpop.permute.xlu0 %4677
        %4679 = vrot.lane.b32.xlu0 %v4620, 16
        %v4680 = vpop.permute.xlu0 %4679
        %4681 = vrot.lane.b32.xlu0 %v4622, 16
        %v4682 = vpop.permute.xlu0 %4681
        %v4713 = vrot.slane %v4486, 2
        %v4714 = vrot.slane %v4393, 2
        %v4715 = vsel %vm985, %v4713, %v4714
        %v4716 = vrot.slane %v4502, 2
        %v4717 = vsel %vm985, %v4714, %v4716
        %v4718 = vrot.slane %v4487, 2
        %v4719 = vrot.slane %v4396, 2
        %v4720 = vsel %vm985, %v4718, %v4719
        %v4721 = vrot.slane %v4503, 2
        %v4722 = vsel %vm985, %v4719, %v4721
        %v4723 = vrot.slane %v4488, 2
        %v4724 = vrot.slane %v4399, 2
        %v4725 = vsel %vm985, %v4723, %v4724
        %v4726 = vrot.slane %v4504, 2
        %v4727 = vsel %vm985, %v4724, %v4726
        %v4728 = vrot.slane %v4489, 2
        %v4729 = vrot.slane %v4402, 2
        %v4730 = vsel %vm985, %v4728, %v4729
        %v4731 = vrot.slane %v4505, 2
        %v4732 = vsel %vm985, %v4729, %v4731
        %v4733 = vrot.slane %v4490, 2
        %v4734 = vrot.slane %v4405, 2
        %v4735 = vsel %vm985, %v4733, %v4734
        %v4736 = vrot.slane %v4506, 2
        %v4737 = vsel %vm985, %v4734, %v4736
        %v4738 = vrot.slane %v4491, 2
        %v4739 = vrot.slane %v4408, 2
        %v4740 = vsel %vm985, %v4738, %v4739
        %v4741 = vrot.slane %v4507, 2
        %v4742 = vsel %vm985, %v4739, %v4741
        %v4743 = vrot.slane %v4492, 2
        %v4744 = vrot.slane %v4411, 2
        %v4745 = vsel %vm985, %v4743, %v4744
        %v4746 = vrot.slane %v4508, 2
        %v4747 = vsel %vm985, %v4744, %v4746
        %v4748 = vrot.slane %v4493, 2
        %v4749 = vrot.slane %v4414, 2
        %v4750 = vsel %vm985, %v4748, %v4749
        %v4751 = vrot.slane %v4509, 2
        %v4752 = vsel %vm985, %v4749, %v4751
        %v4753 = vrot.slane %v4494, 2
        %v4754 = vrot.slane %v4417, 2
        %v4755 = vsel %vm985, %v4753, %v4754
        %v4756 = vrot.slane %v4510, 2
        %v4757 = vsel %vm985, %v4754, %v4756
        %v4758 = vrot.slane %v4495, 2
        %v4759 = vrot.slane %v4420, 2
        %v4760 = vsel %vm985, %v4758, %v4759
        %v4761 = vrot.slane %v4511, 2
        %v4762 = vsel %vm985, %v4759, %v4761
        %v4763 = vrot.slane %v4496, 2
        %v4764 = vrot.slane %v4423, 2
        %v4765 = vsel %vm985, %v4763, %v4764
        %v4766 = vrot.slane %v4512, 2
        %v4767 = vsel %vm985, %v4764, %v4766
        %v4768 = vrot.slane %v4497, 2
        %v4769 = vrot.slane %v4426, 2
        %v4770 = vsel %vm985, %v4768, %v4769
        %v4771 = vrot.slane %v4513, 2
        %v4772 = vsel %vm985, %v4769, %v4771
        %v4773 = vrot.slane %v4498, 2
        %v4774 = vrot.slane %v4429, 2
        %v4775 = vsel %vm985, %v4773, %v4774
        %v4776 = vrot.slane %v4514, 2
        %v4777 = vsel %vm985, %v4774, %v4776
        %v4778 = vrot.slane %v4499, 2
        %v4779 = vrot.slane %v4432, 2
        %v4780 = vsel %vm985, %v4778, %v4779
        %v4781 = vrot.slane %v4515, 2
        %v4782 = vsel %vm985, %v4779, %v4781
        %v4783 = vrot.slane %v4500, 2
        %v4784 = vrot.slane %v4435, 2
        %v4785 = vsel %vm985, %v4783, %v4784
        %v4786 = vrot.slane %v4516, 2
        %v4787 = vsel %vm985, %v4784, %v4786
        %4788 = vrot.lane.b32.xlu0 %v4715, 32
        %v4789 = vpop.permute.xlu0 %4788
        %4790 = vrot.lane.b32.xlu0 %v4717, 32
        %v4791 = vpop.permute.xlu0 %4790
        %4792 = vrot.lane.b32.xlu0 %v4720, 32
        %v4793 = vpop.permute.xlu0 %4792
        %4794 = vrot.lane.b32.xlu0 %v4722, 32
        %v4795 = vpop.permute.xlu0 %4794
        %4796 = vrot.lane.b32.xlu0 %v4725, 32
        %v4797 = vpop.permute.xlu0 %4796
        %4798 = vrot.lane.b32.xlu0 %v4727, 32
        %v4799 = vpop.permute.xlu0 %4798
        %4800 = vrot.lane.b32.xlu0 %v4730, 32
        %v4801 = vpop.permute.xlu0 %4800
        %4802 = vrot.lane.b32.xlu0 %v4732, 32
        %v4803 = vpop.permute.xlu0 %4802
        %4804 = vrot.lane.b32.xlu0 %v4735, 32
        %v4805 = vpop.permute.xlu0 %4804
        %4806 = vrot.lane.b32.xlu0 %v4737, 32
        %v4807 = vpop.permute.xlu0 %4806
        %4808 = vrot.lane.b32.xlu0 %v4740, 32
        %v4809 = vpop.permute.xlu0 %4808
        %4810 = vrot.lane.b32.xlu0 %v4742, 32
        %v4811 = vpop.permute.xlu0 %4810
        %4812 = vrot.lane.b32.xlu0 %v4745, 32
        %v4813 = vpop.permute.xlu0 %4812
        %4814 = vrot.lane.b32.xlu0 %v4747, 32
        %v4815 = vpop.permute.xlu0 %4814
        %4816 = vrot.lane.b32.xlu0 %v4750, 32
        %v4817 = vpop.permute.xlu0 %4816
        %4818 = vrot.lane.b32.xlu0 %v4752, 32
        %v4819 = vpop.permute.xlu0 %4818
        %4820 = vrot.lane.b32.xlu0 %v4755, 32
        %v4821 = vpop.permute.xlu0 %4820
        %4822 = vrot.lane.b32.xlu0 %v4757, 32
        %v4823 = vpop.permute.xlu0 %4822
        %4824 = vrot.lane.b32.xlu0 %v4760, 32
        %v4825 = vpop.permute.xlu0 %4824
        %4826 = vrot.lane.b32.xlu0 %v4762, 32
        %v4827 = vpop.permute.xlu0 %4826
        %4828 = vrot.lane.b32.xlu0 %v4765, 32
        %v4829 = vpop.permute.xlu0 %4828
        %4830 = vrot.lane.b32.xlu0 %v4767, 32
        %v4831 = vpop.permute.xlu0 %4830
        %4832 = vrot.lane.b32.xlu0 %v4770, 32
        %v4833 = vpop.permute.xlu0 %4832
        %4834 = vrot.lane.b32.xlu0 %v4772, 32
        %v4835 = vpop.permute.xlu0 %4834
        %4836 = vrot.lane.b32.xlu0 %v4775, 32
        %v4837 = vpop.permute.xlu0 %4836
        %4838 = vrot.lane.b32.xlu0 %v4777, 32
        %v4839 = vpop.permute.xlu0 %4838
        %4840 = vrot.lane.b32.xlu0 %v4780, 32
        %v4841 = vpop.permute.xlu0 %4840
        %4842 = vrot.lane.b32.xlu0 %v4782, 32
        %v4843 = vpop.permute.xlu0 %4842
        %4844 = vrot.lane.b32.xlu0 %v4785, 32
        %v4845 = vpop.permute.xlu0 %4844
        %4846 = vrot.lane.b32.xlu0 %v4787, 32
        %v4847 = vpop.permute.xlu0 %4846
        %4879 = vrot.lane.b32.xlu0 %v4486, 48
        %v4880 = vpop.permute.xlu0 %4879
        %4881 = vrot.lane.b32.xlu0 %v4393, 48
        %v4882 = vpop.permute.xlu0 %4881
        %4883 = vrot.lane.b32.xlu0 %v4487, 48
        %v4884 = vpop.permute.xlu0 %4883
        %4885 = vrot.lane.b32.xlu0 %v4396, 48
        %v4886 = vpop.permute.xlu0 %4885
        %4887 = vrot.lane.b32.xlu0 %v4488, 48
        %v4888 = vpop.permute.xlu0 %4887
        %4889 = vrot.lane.b32.xlu0 %v4399, 48
        %v4890 = vpop.permute.xlu0 %4889
        %4891 = vrot.lane.b32.xlu0 %v4489, 48
        %v4892 = vpop.permute.xlu0 %4891
        %4893 = vrot.lane.b32.xlu0 %v4402, 48
        %v4894 = vpop.permute.xlu0 %4893
        %4895 = vrot.lane.b32.xlu0 %v4490, 48
        %v4896 = vpop.permute.xlu0 %4895
        %4897 = vrot.lane.b32.xlu0 %v4405, 48
        %v4898 = vpop.permute.xlu0 %4897
        %4899 = vrot.lane.b32.xlu0 %v4491, 48
        %v4900 = vpop.permute.xlu0 %4899
        %4901 = vrot.lane.b32.xlu0 %v4408, 48
        %v4902 = vpop.permute.xlu0 %4901
        %4903 = vrot.lane.b32.xlu0 %v4492, 48
        %v4904 = vpop.permute.xlu0 %4903
        %4905 = vrot.lane.b32.xlu0 %v4411, 48
        %v4906 = vpop.permute.xlu0 %4905
        %4907 = vrot.lane.b32.xlu0 %v4493, 48
        %v4908 = vpop.permute.xlu0 %4907
        %4909 = vrot.lane.b32.xlu0 %v4414, 48
        %v4910 = vpop.permute.xlu0 %4909
        %4911 = vrot.lane.b32.xlu0 %v4494, 48
        %v4912 = vpop.permute.xlu0 %4911
        %4913 = vrot.lane.b32.xlu0 %v4417, 48
        %v4914 = vpop.permute.xlu0 %4913
        %4915 = vrot.lane.b32.xlu0 %v4495, 48
        %v4916 = vpop.permute.xlu0 %4915
        %4917 = vrot.lane.b32.xlu0 %v4420, 48
        %v4918 = vpop.permute.xlu0 %4917
        %4919 = vrot.lane.b32.xlu0 %v4496, 48
        %v4920 = vpop.permute.xlu0 %4919
        %4921 = vrot.lane.b32.xlu0 %v4423, 48
        %v4922 = vpop.permute.xlu0 %4921
        %4923 = vrot.lane.b32.xlu0 %v4497, 48
        %v4924 = vpop.permute.xlu0 %4923
        %4925 = vrot.lane.b32.xlu0 %v4426, 48
        %v4926 = vpop.permute.xlu0 %4925
        %4927 = vrot.lane.b32.xlu0 %v4498, 48
        %v4928 = vpop.permute.xlu0 %4927
        %4929 = vrot.lane.b32.xlu0 %v4429, 48
        %v4930 = vpop.permute.xlu0 %4929
        %4931 = vrot.lane.b32.xlu0 %v4499, 48
        %v4932 = vpop.permute.xlu0 %4931
        %4933 = vrot.lane.b32.xlu0 %v4432, 48
        %v4934 = vpop.permute.xlu0 %4933
        %4935 = vrot.lane.b32.xlu0 %v4500, 48
        %v4936 = vpop.permute.xlu0 %4935
        %4937 = vrot.lane.b32.xlu0 %v4435, 48
        %v4938 = vpop.permute.xlu0 %4937
        %4939 = vrot.lane.b32.xlu0 %v4501, 48
        %v4940 = vpop.permute.xlu0 %4939
        %4941 = vrot.lane.b32.xlu0 %v4438, 48
        %v4942 = vpop.permute.xlu0 %4941
        %v4976 = vrot.slane %v4501, 1
        %v4977 = vrot.slane %v4438, 1
        %v4978 = vsel %vm808, %v4976, %v4977
        %v4979 = vrot.slane %v4517, 1
        %v4980 = vsel %vm808, %v4977, %v4979
        %4981 = vrot.lane.b32.xlu0 %v4550, 64
        %v4982 = vpop.permute.xlu0 %4981
        %4983 = vrot.lane.b32.xlu0 %v4552, 64
        %v4984 = vpop.permute.xlu0 %4983
        %4985 = vrot.lane.b32.xlu0 %v4555, 64
        %v4986 = vpop.permute.xlu0 %4985
        %4987 = vrot.lane.b32.xlu0 %v4557, 64
        %v4988 = vpop.permute.xlu0 %4987
        %4989 = vrot.lane.b32.xlu0 %v4560, 64
        %v4990 = vpop.permute.xlu0 %4989
        %4991 = vrot.lane.b32.xlu0 %v4562, 64
        %v4992 = vpop.permute.xlu0 %4991
        %4993 = vrot.lane.b32.xlu0 %v4565, 64
        %v4994 = vpop.permute.xlu0 %4993
        %4995 = vrot.lane.b32.xlu0 %v4567, 64
        %v4996 = vpop.permute.xlu0 %4995
        %4997 = vrot.lane.b32.xlu0 %v4570, 64
        %v4998 = vpop.permute.xlu0 %4997
        %4999 = vrot.lane.b32.xlu0 %v4572, 64
        %v5000 = vpop.permute.xlu0 %4999
        %5001 = vrot.lane.b32.xlu0 %v4575, 64
        %v5002 = vpop.permute.xlu0 %5001
        %5003 = vrot.lane.b32.xlu0 %v4577, 64
        %v5004 = vpop.permute.xlu0 %5003
        %5005 = vrot.lane.b32.xlu0 %v4580, 64
        %v5006 = vpop.permute.xlu0 %5005
        %5007 = vrot.lane.b32.xlu0 %v4582, 64
        %v5008 = vpop.permute.xlu0 %5007
        %5009 = vrot.lane.b32.xlu0 %v4585, 64
        %v5010 = vpop.permute.xlu0 %5009
        %5011 = vrot.lane.b32.xlu0 %v4587, 64
        %v5012 = vpop.permute.xlu0 %5011
        %5013 = vrot.lane.b32.xlu0 %v4590, 64
        %v5014 = vpop.permute.xlu0 %5013
        %5015 = vrot.lane.b32.xlu0 %v4592, 64
        %v5016 = vpop.permute.xlu0 %5015
        %5017 = vrot.lane.b32.xlu0 %v4595, 64
        %v5018 = vpop.permute.xlu0 %5017
        %5019 = vrot.lane.b32.xlu0 %v4597, 64
        %v5020 = vpop.permute.xlu0 %5019
        %5021 = vrot.lane.b32.xlu0 %v4600, 64
        %v5022 = vpop.permute.xlu0 %5021
        %5023 = vrot.lane.b32.xlu0 %v4602, 64
        %v5024 = vpop.permute.xlu0 %5023
        %5025 = vrot.lane.b32.xlu0 %v4605, 64
        %v5026 = vpop.permute.xlu0 %5025
        %5027 = vrot.lane.b32.xlu0 %v4607, 64
        %v5028 = vpop.permute.xlu0 %5027
        %5029 = vrot.lane.b32.xlu0 %v4610, 64
        %v5030 = vpop.permute.xlu0 %5029
        %5031 = vrot.lane.b32.xlu0 %v4612, 64
        %v5032 = vpop.permute.xlu0 %5031
        %5033 = vrot.lane.b32.xlu0 %v4615, 64
        %v5034 = vpop.permute.xlu0 %5033
        %5035 = vrot.lane.b32.xlu0 %v4617, 64
        %v5036 = vpop.permute.xlu0 %5035
        %5037 = vrot.lane.b32.xlu0 %v4620, 64
        %v5038 = vpop.permute.xlu0 %5037
        %5039 = vrot.lane.b32.xlu0 %v4622, 64
        %v5040 = vpop.permute.xlu0 %5039
        %5041 = vrot.lane.b32.xlu0 %v4978, 64
        %v5042 = vpop.permute.xlu0 %5041
        %5043 = vrot.lane.b32.xlu0 %v4980, 64
        %v5044 = vpop.permute.xlu0 %5043
        %v5077 = vrot.slane %v4501, 2
        %v5078 = vrot.slane %v4438, 2
        %v5079 = vsel %vm985, %v5077, %v5078
        %v5080 = vrot.slane %v4517, 2
        %v5081 = vsel %vm985, %v5078, %v5080
        %5082 = vrot.lane.b32.xlu0 %v4715, 80
        %v5083 = vpop.permute.xlu0 %5082
        %5084 = vrot.lane.b32.xlu0 %v4717, 80
        %v5085 = vpop.permute.xlu0 %5084
        %5086 = vrot.lane.b32.xlu0 %v4720, 80
        %v5087 = vpop.permute.xlu0 %5086
        %5088 = vrot.lane.b32.xlu0 %v4722, 80
        %v5089 = vpop.permute.xlu0 %5088
        %5090 = vrot.lane.b32.xlu0 %v4725, 80
        %v5091 = vpop.permute.xlu0 %5090
        %5092 = vrot.lane.b32.xlu0 %v4727, 80
        %v5093 = vpop.permute.xlu0 %5092
        %5094 = vrot.lane.b32.xlu0 %v4730, 80
        %v5095 = vpop.permute.xlu0 %5094
        %5096 = vrot.lane.b32.xlu0 %v4732, 80
        %v5097 = vpop.permute.xlu0 %5096
        %5098 = vrot.lane.b32.xlu0 %v4735, 80
        %v5099 = vpop.permute.xlu0 %5098
        %5100 = vrot.lane.b32.xlu0 %v4737, 80
        %v5101 = vpop.permute.xlu0 %5100
        %5102 = vrot.lane.b32.xlu0 %v4740, 80
        %v5103 = vpop.permute.xlu0 %5102
        %5104 = vrot.lane.b32.xlu0 %v4742, 80
        %v5105 = vpop.permute.xlu0 %5104
        %5106 = vrot.lane.b32.xlu0 %v4745, 80
        %v5107 = vpop.permute.xlu0 %5106
        %5108 = vrot.lane.b32.xlu0 %v4747, 80
        %v5109 = vpop.permute.xlu0 %5108
        %5110 = vrot.lane.b32.xlu0 %v4750, 80
        %v5111 = vpop.permute.xlu0 %5110
        %5112 = vrot.lane.b32.xlu0 %v4752, 80
        %v5113 = vpop.permute.xlu0 %5112
        %5114 = vrot.lane.b32.xlu0 %v4755, 80
        %v5115 = vpop.permute.xlu0 %5114
        %5116 = vrot.lane.b32.xlu0 %v4757, 80
        %v5117 = vpop.permute.xlu0 %5116
        %5118 = vrot.lane.b32.xlu0 %v4760, 80
        %v5119 = vpop.permute.xlu0 %5118
        %5120 = vrot.lane.b32.xlu0 %v4762, 80
        %v5121 = vpop.permute.xlu0 %5120
        %5122 = vrot.lane.b32.xlu0 %v4765, 80
        %v5123 = vpop.permute.xlu0 %5122
        %5124 = vrot.lane.b32.xlu0 %v4767, 80
        %v5125 = vpop.permute.xlu0 %5124
        %5126 = vrot.lane.b32.xlu0 %v4770, 80
        %v5127 = vpop.permute.xlu0 %5126
        %5128 = vrot.lane.b32.xlu0 %v4772, 80
        %v5129 = vpop.permute.xlu0 %5128
        %5130 = vrot.lane.b32.xlu0 %v4775, 80
        %v5131 = vpop.permute.xlu0 %5130
        %5132 = vrot.lane.b32.xlu0 %v4777, 80
        %v5133 = vpop.permute.xlu0 %5132
        %5134 = vrot.lane.b32.xlu0 %v4780, 80
        %v5135 = vpop.permute.xlu0 %5134
        %5136 = vrot.lane.b32.xlu0 %v4782, 80
        %v5137 = vpop.permute.xlu0 %5136
        %5138 = vrot.lane.b32.xlu0 %v4785, 80
        %v5139 = vpop.permute.xlu0 %5138
        %5140 = vrot.lane.b32.xlu0 %v4787, 80
        %v5141 = vpop.permute.xlu0 %5140
        %5142 = vrot.lane.b32.xlu0 %v5079, 80
        %v5143 = vpop.permute.xlu0 %5142
        %5144 = vrot.lane.b32.xlu0 %v5081, 80
        %v5145 = vpop.permute.xlu0 %5144
        %5178 = vrot.lane.b32.xlu0 %v4487, 96
        %v5179 = vpop.permute.xlu0 %5178
        %5180 = vrot.lane.b32.xlu0 %v4396, 96
        %v5181 = vpop.permute.xlu0 %5180
        %5182 = vrot.lane.b32.xlu0 %v4488, 96
        %v5183 = vpop.permute.xlu0 %5182
        %5184 = vrot.lane.b32.xlu0 %v4399, 96
        %v5185 = vpop.permute.xlu0 %5184
        %5186 = vrot.lane.b32.xlu0 %v4489, 96
        %v5187 = vpop.permute.xlu0 %5186
        %5188 = vrot.lane.b32.xlu0 %v4402, 96
        %v5189 = vpop.permute.xlu0 %5188
        %5190 = vrot.lane.b32.xlu0 %v4490, 96
        %v5191 = vpop.permute.xlu0 %5190
        %5192 = vrot.lane.b32.xlu0 %v4405, 96
        %v5193 = vpop.permute.xlu0 %5192
        %5194 = vrot.lane.b32.xlu0 %v4491, 96
        %v5195 = vpop.permute.xlu0 %5194
        %5196 = vrot.lane.b32.xlu0 %v4408, 96
        %v5197 = vpop.permute.xlu0 %5196
        %5198 = vrot.lane.b32.xlu0 %v4492, 96
        %v5199 = vpop.permute.xlu0 %5198
        %5200 = vrot.lane.b32.xlu0 %v4411, 96
        %v5201 = vpop.permute.xlu0 %5200
        %5202 = vrot.lane.b32.xlu0 %v4493, 96
        %v5203 = vpop.permute.xlu0 %5202
        %5204 = vrot.lane.b32.xlu0 %v4414, 96
        %v5205 = vpop.permute.xlu0 %5204
        %5206 = vrot.lane.b32.xlu0 %v4494, 96
        %v5207 = vpop.permute.xlu0 %5206
        %5208 = vrot.lane.b32.xlu0 %v4417, 96
        %v5209 = vpop.permute.xlu0 %5208
        %5210 = vrot.lane.b32.xlu0 %v4495, 96
        %v5211 = vpop.permute.xlu0 %5210
        %5212 = vrot.lane.b32.xlu0 %v4420, 96
        %v5213 = vpop.permute.xlu0 %5212
        %5214 = vrot.lane.b32.xlu0 %v4496, 96
        %v5215 = vpop.permute.xlu0 %5214
        %5216 = vrot.lane.b32.xlu0 %v4423, 96
        %v5217 = vpop.permute.xlu0 %5216
        %5218 = vrot.lane.b32.xlu0 %v4497, 96
        %v5219 = vpop.permute.xlu0 %5218
        %5220 = vrot.lane.b32.xlu0 %v4426, 96
        %v5221 = vpop.permute.xlu0 %5220
        %5222 = vrot.lane.b32.xlu0 %v4498, 96
        %v5223 = vpop.permute.xlu0 %5222
        %5224 = vrot.lane.b32.xlu0 %v4429, 96
        %v5225 = vpop.permute.xlu0 %5224
        %5226 = vrot.lane.b32.xlu0 %v4499, 96
        %v5227 = vpop.permute.xlu0 %5226
        %5228 = vrot.lane.b32.xlu0 %v4432, 96
        %v5229 = vpop.permute.xlu0 %5228
        %5230 = vrot.lane.b32.xlu0 %v4500, 96
        %v5231 = vpop.permute.xlu0 %5230
        %5232 = vrot.lane.b32.xlu0 %v4435, 96
        %v5233 = vpop.permute.xlu0 %5232
        %5234 = vrot.lane.b32.xlu0 %v4501, 96
        %v5235 = vpop.permute.xlu0 %5234
        %5236 = vrot.lane.b32.xlu0 %v4438, 96
        %v5237 = vpop.permute.xlu0 %5236
        %5268 = vrot.lane.b32.xlu0 %v4555, 112
        %v5269 = vpop.permute.xlu0 %5268
        %5270 = vrot.lane.b32.xlu0 %v4557, 112
        %v5271 = vpop.permute.xlu0 %5270
        %5272 = vrot.lane.b32.xlu0 %v4560, 112
        %v5273 = vpop.permute.xlu0 %5272
        %5274 = vrot.lane.b32.xlu0 %v4562, 112
        %v5275 = vpop.permute.xlu0 %5274
        %5276 = vrot.lane.b32.xlu0 %v4565, 112
        %v5277 = vpop.permute.xlu0 %5276
        %5278 = vrot.lane.b32.xlu0 %v4567, 112
        %v5279 = vpop.permute.xlu0 %5278
        %5280 = vrot.lane.b32.xlu0 %v4570, 112
        %v5281 = vpop.permute.xlu0 %5280
        %5282 = vrot.lane.b32.xlu0 %v4572, 112
        %v5283 = vpop.permute.xlu0 %5282
        %5284 = vrot.lane.b32.xlu0 %v4575, 112
        %v5285 = vpop.permute.xlu0 %5284
        %5286 = vrot.lane.b32.xlu0 %v4577, 112
        %v5287 = vpop.permute.xlu0 %5286
        %5288 = vrot.lane.b32.xlu0 %v4580, 112
        %v5289 = vpop.permute.xlu0 %5288
        %5290 = vrot.lane.b32.xlu0 %v4582, 112
        %v5291 = vpop.permute.xlu0 %5290
        %5292 = vrot.lane.b32.xlu0 %v4585, 112
        %v5293 = vpop.permute.xlu0 %5292
        %5294 = vrot.lane.b32.xlu0 %v4587, 112
        %v5295 = vpop.permute.xlu0 %5294
        %5296 = vrot.lane.b32.xlu0 %v4590, 112
        %v5297 = vpop.permute.xlu0 %5296
        %5298 = vrot.lane.b32.xlu0 %v4592, 112
        %v5299 = vpop.permute.xlu0 %5298
        %5300 = vrot.lane.b32.xlu0 %v4595, 112
        %v5301 = vpop.permute.xlu0 %5300
        %5302 = vrot.lane.b32.xlu0 %v4597, 112
        %v5303 = vpop.permute.xlu0 %5302
        %5304 = vrot.lane.b32.xlu0 %v4600, 112
        %v5305 = vpop.permute.xlu0 %5304
        %5306 = vrot.lane.b32.xlu0 %v4602, 112
        %v5307 = vpop.permute.xlu0 %5306
        %5308 = vrot.lane.b32.xlu0 %v4605, 112
        %v5309 = vpop.permute.xlu0 %5308
        %5310 = vrot.lane.b32.xlu0 %v4607, 112
        %v5311 = vpop.permute.xlu0 %5310
        %5312 = vrot.lane.b32.xlu0 %v4610, 112
        %v5313 = vpop.permute.xlu0 %5312
        %5314 = vrot.lane.b32.xlu0 %v4612, 112
        %v5315 = vpop.permute.xlu0 %5314
        %5316 = vrot.lane.b32.xlu0 %v4615, 112
        %v5317 = vpop.permute.xlu0 %5316
        %5318 = vrot.lane.b32.xlu0 %v4617, 112
        %v5319 = vpop.permute.xlu0 %5318
        %5320 = vrot.lane.b32.xlu0 %v4620, 112
        %v5321 = vpop.permute.xlu0 %5320
        %5322 = vrot.lane.b32.xlu0 %v4622, 112
        %v5323 = vpop.permute.xlu0 %5322
        %5324 = vrot.lane.b32.xlu0 %v4978, 112
        %v5325 = vpop.permute.xlu0 %5324
        %5326 = vrot.lane.b32.xlu0 %v4980, 112
        %v5327 = vpop.permute.xlu0 %5326
        %v5388 = vsel %vm1849, %v4486, %v4624
        %v5389 = vsel %vm1849, %v4393, %v4626
        %v5390 = vsel %vm1849, %v4487, %v4628
        %v5391 = vsel %vm1849, %v4396, %v4630
        %v5392 = vsel %vm1849, %v4488, %v4632
        %v5393 = vsel %vm1849, %v4399, %v4634
        %v5394 = vsel %vm1849, %v4489, %v4636
        %v5395 = vsel %vm1849, %v4402, %v4638
        %v5396 = vsel %vm1849, %v4490, %v4640
        %v5397 = vsel %vm1849, %v4405, %v4642
        %v5398 = vsel %vm1849, %v4491, %v4644
        %v5399 = vsel %vm1849, %v4408, %v4646
        %v5400 = vsel %vm1849, %v4492, %v4648
        %v5401 = vsel %vm1849, %v4411, %v4650
        %v5402 = vsel %vm1849, %v4493, %v4652
        %v5403 = vsel %vm1849, %v4414, %v4654
        %v5404 = vsel %vm1849, %v4494, %v4656
        %v5405 = vsel %vm1849, %v4417, %v4658
        %v5406 = vsel %vm1849, %v4495, %v4660
        %v5407 = vsel %vm1849, %v4420, %v4662
        %v5408 = vsel %vm1849, %v4496, %v4664
        %v5409 = vsel %vm1849, %v4423, %v4666
        %v5410 = vsel %vm1849, %v4497, %v4668
        %v5411 = vsel %vm1849, %v4426, %v4670
        %v5412 = vsel %vm1849, %v4498, %v4672
        %v5413 = vsel %vm1849, %v4429, %v4674
        %v5414 = vsel %vm1849, %v4499, %v4676
        %v5415 = vsel %vm1849, %v4432, %v4678
        %v5416 = vsel %vm1849, %v4500, %v4680
        %v5417 = vsel %vm1849, %v4435, %v4682
        %v5418 = vsel %vm1981, %v5388, %v4789
        %v5419 = vsel %vm1981, %v5389, %v4791
        %v5420 = vsel %vm1981, %v5390, %v4793
        %v5421 = vsel %vm1981, %v5391, %v4795
        %v5422 = vsel %vm1981, %v5392, %v4797
        %v5423 = vsel %vm1981, %v5393, %v4799
        %v5424 = vsel %vm1981, %v5394, %v4801
        %v5425 = vsel %vm1981, %v5395, %v4803
        %v5426 = vsel %vm1981, %v5396, %v4805
        %v5427 = vsel %vm1981, %v5397, %v4807
        %v5428 = vsel %vm1981, %v5398, %v4809
        %v5429 = vsel %vm1981, %v5399, %v4811
        %v5430 = vsel %vm1981, %v5400, %v4813
        %v5431 = vsel %vm1981, %v5401, %v4815
        %v5432 = vsel %vm1981, %v5402, %v4817
        %v5433 = vsel %vm1981, %v5403, %v4819
        %v5434 = vsel %vm1981, %v5404, %v4821
        %v5435 = vsel %vm1981, %v5405, %v4823
        %v5436 = vsel %vm1981, %v5406, %v4825
        %v5437 = vsel %vm1981, %v5407, %v4827
        %v5438 = vsel %vm1981, %v5408, %v4829
        %v5439 = vsel %vm1981, %v5409, %v4831
        %v5440 = vsel %vm1981, %v5410, %v4833
        %v5441 = vsel %vm1981, %v5411, %v4835
        %v5442 = vsel %vm1981, %v5412, %v4837
        %v5443 = vsel %vm1981, %v5413, %v4839
        %v5444 = vsel %vm1981, %v5414, %v4841
        %v5445 = vsel %vm1981, %v5415, %v4843
        %v5446 = vsel %vm1981, %v5416, %v4845
        %v5447 = vsel %vm1981, %v5417, %v4847
        %v5448 = vsel %vm3816, %v3784, %v4880
        %v5449 = vsel %vm3816, %v3785, %v4882
        %v5450 = vsel %vm3816, %v5418, %v4884
        %v5451 = vsel %vm3816, %v5419, %v4886
        %v5452 = vsel %vm3816, %v5420, %v4888
        %v5453 = vsel %vm3816, %v5421, %v4890
        %v5454 = vsel %vm3816, %v5422, %v4892
        %v5455 = vsel %vm3816, %v5423, %v4894
        %v5456 = vsel %vm3816, %v5424, %v4896
        %v5457 = vsel %vm3816, %v5425, %v4898
        %v5458 = vsel %vm3816, %v5426, %v4900
        %v5459 = vsel %vm3816, %v5427, %v4902
        %v5460 = vsel %vm3816, %v5428, %v4904
        %v5461 = vsel %vm3816, %v5429, %v4906
        %v5462 = vsel %vm3816, %v5430, %v4908
        %v5463 = vsel %vm3816, %v5431, %v4910
        %v5464 = vsel %vm3816, %v5432, %v4912
        %v5465 = vsel %vm3816, %v5433, %v4914
        %v5466 = vsel %vm3816, %v5434, %v4916
        %v5467 = vsel %vm3816, %v5435, %v4918
        %v5468 = vsel %vm3816, %v5436, %v4920
        %v5469 = vsel %vm3816, %v5437, %v4922
        %v5470 = vsel %vm3816, %v5438, %v4924
        %v5471 = vsel %vm3816, %v5439, %v4926
        %v5472 = vsel %vm3816, %v5440, %v4928
        %v5473 = vsel %vm3816, %v5441, %v4930
        %v5474 = vsel %vm3816, %v5442, %v4932
        %v5475 = vsel %vm3816, %v5443, %v4934
        %v5476 = vsel %vm3816, %v5444, %v4936
        %v5477 = vsel %vm3816, %v5445, %v4938
        %v5478 = vsel %vm3816, %v5446, %v4940
        %v5479 = vsel %vm3816, %v5447, %v4942
        %v5480 = vsel %vm3849, %v5448, %v4982
        %v5481 = vsel %vm3849, %v5449, %v4984
        %v5482 = vsel %vm3849, %v5450, %v4986
        %v5483 = vsel %vm3849, %v5451, %v4988
        %v5484 = vsel %vm3849, %v5452, %v4990
        %v5485 = vsel %vm3849, %v5453, %v4992
        %v5486 = vsel %vm3849, %v5454, %v4994
        %v5487 = vsel %vm3849, %v5455, %v4996
        %v5488 = vsel %vm3849, %v5456, %v4998
        %v5489 = vsel %vm3849, %v5457, %v5000
        %v5490 = vsel %vm3849, %v5458, %v5002
        %v5491 = vsel %vm3849, %v5459, %v5004
        %v5492 = vsel %vm3849, %v5460, %v5006
        %v5493 = vsel %vm3849, %v5461, %v5008
        %v5494 = vsel %vm3849, %v5462, %v5010
        %v5495 = vsel %vm3849, %v5463, %v5012
        %v5496 = vsel %vm3849, %v5464, %v5014
        %v5497 = vsel %vm3849, %v5465, %v5016
        %v5498 = vsel %vm3849, %v5466, %v5018
        %v5499 = vsel %vm3849, %v5467, %v5020
        %v5500 = vsel %vm3849, %v5468, %v5022
        %v5501 = vsel %vm3849, %v5469, %v5024
        %v5502 = vsel %vm3849, %v5470, %v5026
        %v5503 = vsel %vm3849, %v5471, %v5028
        %v5504 = vsel %vm3849, %v5472, %v5030
        %v5505 = vsel %vm3849, %v5473, %v5032
        %v5506 = vsel %vm3849, %v5474, %v5034
        %v5507 = vsel %vm3849, %v5475, %v5036
        %v5508 = vsel %vm3849, %v5476, %v5038
        %v5509 = vsel %vm3849, %v5477, %v5040
        %v5510 = vsel %vm3849, %v5478, %v5042
        %v5511 = vsel %vm3849, %v5479, %v5044
        %v5512 = vsel %vm3882, %v5480, %v5083
        %v5513 = vsel %vm3882, %v5481, %v5085
        %v5514 = vsel %vm3882, %v5482, %v5087
        %v5515 = vsel %vm3882, %v5483, %v5089
        %v5516 = vsel %vm3882, %v5484, %v5091
        %v5517 = vsel %vm3882, %v5485, %v5093
        %v5518 = vsel %vm3882, %v5486, %v5095
        %v5519 = vsel %vm3882, %v5487, %v5097
        %v5520 = vsel %vm3882, %v5488, %v5099
        %v5521 = vsel %vm3882, %v5489, %v5101
        %v5522 = vsel %vm3882, %v5490, %v5103
        %v5523 = vsel %vm3882, %v5491, %v5105
        %v5524 = vsel %vm3882, %v5492, %v5107
        %v5525 = vsel %vm3882, %v5493, %v5109
        %v5526 = vsel %vm3882, %v5494, %v5111
        %v5527 = vsel %vm3882, %v5495, %v5113
        %v5528 = vsel %vm3882, %v5496, %v5115
        %v5529 = vsel %vm3882, %v5497, %v5117
        %v5530 = vsel %vm3882, %v5498, %v5119
        %v5531 = vsel %vm3882, %v5499, %v5121
        %v5532 = vsel %vm3882, %v5500, %v5123
        %v5533 = vsel %vm3882, %v5501, %v5125
        %v5534 = vsel %vm3882, %v5502, %v5127
        %v5535 = vsel %vm3882, %v5503, %v5129
        %v5536 = vsel %vm3882, %v5504, %v5131
        %v5537 = vsel %vm3882, %v5505, %v5133
        %v5538 = vsel %vm3882, %v5506, %v5135
        %v5539 = vsel %vm3882, %v5507, %v5137
        %v5540 = vsel %vm3882, %v5508, %v5139
        %v5541 = vsel %vm3882, %v5509, %v5141
        %v5542 = vsel %vm3882, %v5510, %v5143
        %v5543 = vsel %vm3882, %v5511, %v5145
        %v5544 = vsel %vm3915, %v5512, %v5179
        %v5545 = vsel %vm3915, %v5513, %v5181
        %v5546 = vsel %vm3915, %v5514, %v5183
        %v5547 = vsel %vm3915, %v5515, %v5185
        %v5548 = vsel %vm3915, %v5516, %v5187
        %v5549 = vsel %vm3915, %v5517, %v5189
        %v5550 = vsel %vm3915, %v5518, %v5191
        %v5551 = vsel %vm3915, %v5519, %v5193
        %v5552 = vsel %vm3915, %v5520, %v5195
        %v5553 = vsel %vm3915, %v5521, %v5197
        %v5554 = vsel %vm3915, %v5522, %v5199
        %v5555 = vsel %vm3915, %v5523, %v5201
        %v5556 = vsel %vm3915, %v5524, %v5203
        %v5557 = vsel %vm3915, %v5525, %v5205
        %v5558 = vsel %vm3915, %v5526, %v5207
        %v5559 = vsel %vm3915, %v5527, %v5209
        %v5560 = vsel %vm3915, %v5528, %v5211
        %v5561 = vsel %vm3915, %v5529, %v5213
        %v5562 = vsel %vm3915, %v5530, %v5215
        %v5563 = vsel %vm3915, %v5531, %v5217
        %v5564 = vsel %vm3915, %v5532, %v5219
        %v5565 = vsel %vm3915, %v5533, %v5221
        %v5566 = vsel %vm3915, %v5534, %v5223
        %v5567 = vsel %vm3915, %v5535, %v5225
        %v5568 = vsel %vm3915, %v5536, %v5227
        %v5569 = vsel %vm3915, %v5537, %v5229
        %v5570 = vsel %vm3915, %v5538, %v5231
        %v5571 = vsel %vm3915, %v5539, %v5233
        %v5572 = vsel %vm3915, %v5540, %v5235
        %v5573 = vsel %vm3915, %v5541, %v5237
        %v5574 = vsel %vm3915, %v5542, %v3589
        %v5575 = vsel %vm3915, %v5543, %v3591
        %v5576 = vsel %vm3948, %v5544, %v5269
        %v5577 = vsel %vm3948, %v5545, %v5271
        %v5578 = vsel %vm3948, %v5546, %v5273
        %v5579 = vsel %vm3948, %v5547, %v5275
        %v5580 = vsel %vm3948, %v5548, %v5277
        %v5581 = vsel %vm3948, %v5549, %v5279
        %v5582 = vsel %vm3948, %v5550, %v5281
        %v5583 = vsel %vm3948, %v5551, %v5283
        %v5584 = vsel %vm3948, %v5552, %v5285
        %v5585 = vsel %vm3948, %v5553, %v5287
        %v5586 = vsel %vm3948, %v5554, %v5289
        %v5587 = vsel %vm3948, %v5555, %v5291
        %v5588 = vsel %vm3948, %v5556, %v5293
        %v5589 = vsel %vm3948, %v5557, %v5295
        %v5590 = vsel %vm3948, %v5558, %v5297
        %v5591 = vsel %vm3948, %v5559, %v5299
        %v5592 = vsel %vm3948, %v5560, %v5301
        %v5593 = vsel %vm3948, %v5561, %v5303
        %v5594 = vsel %vm3948, %v5562, %v5305
        %v5595 = vsel %vm3948, %v5563, %v5307
        %v5596 = vsel %vm3948, %v5564, %v5309
        %v5597 = vsel %vm3948, %v5565, %v5311
        %v5598 = vsel %vm3948, %v5566, %v5313
        %v5599 = vsel %vm3948, %v5567, %v5315
        %v5600 = vsel %vm3948, %v5568, %v5317
        %v5601 = vsel %vm3948, %v5569, %v5319
        %v5602 = vsel %vm3948, %v5570, %v5321
        %v5603 = vsel %vm3948, %v5571, %v5323
        %v5604 = vsel %vm3948, %v5572, %v5325
        %v5605 = vsel %vm3948, %v5573, %v5327
        %v5606 = vsel %vm3948, %v5574, %v3685
        %v5607 = vsel %vm3948, %v5575, %v3687
        %v5608 = vpack.c.bf16 %v5577, %v5576
        %v5609 = vpack.c.bf16 %v4722, %v4720
        %v5610 = vpack.c.bf16 %v5579, %v5578
        %v5611 = vpack.c.bf16 %v4727, %v4725
        %v5612 = vpack.c.bf16 %v5581, %v5580
        %v5613 = vpack.c.bf16 %v4732, %v4730
        %v5614 = vpack.c.bf16 %v5583, %v5582
        %v5615 = vpack.c.bf16 %v4737, %v4735
        %v5616 = vpack.c.bf16 %v5585, %v5584
        %v5617 = vpack.c.bf16 %v4742, %v4740
        %v5618 = vpack.c.bf16 %v5587, %v5586
        %v5619 = vpack.c.bf16 %v4747, %v4745
        %v5620 = vpack.c.bf16 %v5589, %v5588
        %v5621 = vpack.c.bf16 %v4752, %v4750
        %v5622 = vpack.c.bf16 %v5591, %v5590
        %v5623 = vpack.c.bf16 %v4757, %v4755
        %v5624 = vpack.c.bf16 %v5593, %v5592
        %v5625 = vpack.c.bf16 %v4762, %v4760
        %v5626 = vpack.c.bf16 %v5595, %v5594
        %v5627 = vpack.c.bf16 %v4767, %v4765
        %v5628 = vpack.c.bf16 %v5597, %v5596
        %v5629 = vpack.c.bf16 %v4772, %v4770
        %v5630 = vpack.c.bf16 %v5599, %v5598
        %v5631 = vpack.c.bf16 %v4777, %v4775
        %v5632 = vpack.c.bf16 %v5601, %v5600
        %v5633 = vpack.c.bf16 %v4782, %v4780
        %v5634 = vpack.c.bf16 %v5603, %v5602
        %v5635 = vpack.c.bf16 %v4787, %v4785
        %v5636 = vpack.c.bf16 %v5605, %v5604
        %v5637 = vpack.c.bf16 %v5081, %v5079
        %v5638 = vpack.c.bf16 %v5607, %v5606
        %v5639 = vld [vmem:[%s12] sm:$0xff]
        %v5640 = vld [vmem:[%s12 + $0x8] sm:$0xff]
        %v5641 = vld [vmem:[%s12 + $0x10] sm:$0xff]
        %v5642 = vld [vmem:[%s12 + $0x18] sm:$0xff]
        %v5643 = vld [vmem:[%s12 + $0x20] sm:$0xff]
        %v5644 = vld [vmem:[%s12 + $0x28] sm:$0xff]
        %v5645 = vld [vmem:[%s12 + $0x30] sm:$0xff]
        %v5646 = vld [vmem:[%s12 + $0x38] sm:$0xff]
        %v5647 = vld [vmem:[%s12 + $0x40] sm:$0xff]
        %v5648 = vld [vmem:[%s12 + $0x48] sm:$0xff]
        %v5649 = vld [vmem:[%s12 + $0x50] sm:$0xff]
        %v5650 = vld [vmem:[%s12 + $0x58] sm:$0xff]
        %v5651 = vld [vmem:[%s12 + $0x60] sm:$0xff]
        %v5652 = vld [vmem:[%s12 + $0x68] sm:$0xff]
        %v5653 = vld [vmem:[%s12 + $0x70] sm:$0xff]
        %v5654 = vld [vmem:[%s12 + $0x78] sm:$0xff]
        %v5655 = vld [vmem:[%s12 + $0x80] sm:$0xff]
        %v5656 = vld [vmem:[%s12 + $0x88] sm:$0xff]
        %v5657 = vpack.c.bf16 %v5640, %v5639
        %v5658 = vpack.c.bf16 %v5642, %v5641
        %v5659 = vpack.c.bf16 %v5644, %v5643
        %v5660 = vpack.c.bf16 %v5646, %v5645
        %v5661 = vpack.c.bf16 %v5648, %v5647
        %v5662 = vpack.c.bf16 %v5650, %v5649
        %v5663 = vpack.c.bf16 %v5652, %v5651
        %v5664 = vpack.c.bf16 %v5654, %v5653
        %v5665 = vpack.c.bf16 %v5656, %v5655
        %v5667 = vsel %vm1849, %v5609, 0
        %v5670 = vsel %vm1849, %v5611, 0
        %v5673 = vsel %vm1849, %v5613, 0
        %v5676 = vsel %vm1849, %v5615, 0
        %v5679 = vsel %vm1849, %v5617, 0
        %v5682 = vsel %vm1849, %v5619, 0
        %v5685 = vsel %vm1849, %v5621, 0
        %v5688 = vsel %vm1849, %v5623, 0
        %v5691 = vsel %vm1849, %v5625, 0
        %v5694 = vsel %vm1849, %v5627, 0
        %v5697 = vsel %vm1849, %v5629, 0
        %v5700 = vsel %vm1849, %v5631, 0
        %v5703 = vsel %vm1849, %v5633, 0
        %v5706 = vsel %vm1849, %v5635, 0
        %v5709 = vsel %vm1849, %v5637, 0
        %5711 = vmatprep.subr.bf16.mxu0 0
        %5712 = vmatpush1.bf16.msra.mxu0 %v5664
        %5713 = vmatprep.subr.bf16.mxu0 0
        %5714 = vmatpush1.bf16.msra.mxu0 %v5663
        %5715 = vmatprep.subr.bf16.mxu0 0
        %5716 = vmatpush1.bf16.msra.mxu0 %v5662
        %5717 = vmatprep.subr.bf16.mxu0 0
        %5718 = vmatpush1.bf16.msra.mxu0 %v5661
        %5719 = vmatprep.subr.bf16.mxu0 0
        %5720 = vmatpush1.bf16.msra.mxu0 %v5660
        %5721 = vmatprep.subr.bf16.mxu0 0
        %5722 = vmatpush1.bf16.msra.mxu0 %v5659
        %5723 = vmatprep.subr.bf16.mxu0 0
        %5724 = vmatpush1.bf16.msra.mxu0 %v5658
        %5725 = vmatprep.subr.bf16.mxu0 0
        %5726 = vmatpush1.bf16.msra.mxu0 %v5657
        %5727 = vmatprep.subr.bf16.mxu0 0
        %5728 = vmatpush2.bf16.msra.mxu0 0
        %5729 = vmatprep.subr.bf16.mxu0 0
        %5730 = vmatpush2.bf16.msra.mxu0 0
        %5731 = vmatprep.subr.bf16.mxu0 0
        %5732 = vmatpush2.bf16.msra.mxu0 0
        %5733 = vmatprep.subr.bf16.mxu0 0
        %5734 = vmatpush2.bf16.msra.mxu0 0
        %5735 = vmatprep.subr.bf16.mxu0 0
        %5736 = vmatpush2.bf16.msra.mxu0 0
        %5737 = vmatprep.subr.bf16.mxu0 0
        %5738 = vmatpush2.bf16.msra.mxu0 0
        %5739 = vmatprep.subr.bf16.mxu0 0
        %5740 = vmatpush2.bf16.msra.mxu0 0
        %5741 = vmatprep.subr.bf16.mxu0 0
        %5742 = vmatpush2.bf16.msra.mxu0 %v5665
        %5743 = vmatprep.mubr.bf16.mxu0 %v5667
        %5744 = vmatmul.mubr.bf16.gmra.mxu0 %v5608
        %v5745 = vpop.f32.mrf.mxu0
        %v5746 = vadd.f32 0.0, %v5745
        %v5747 = vpop.f32.mrf.mxu0
        %v5748 = vpop.f32.mrf.mxu0
        %v5749 = vadd.f32 0.0, %v5748
        %v5750 = vpop.f32.mrf.mxu0
        %5751 = vmatprep.mubr.bf16.mxu0 %v5670
        %5752 = vmatmul.mubr.bf16.gmra.mxu0 %v5610
        %v5753 = vpop.f32.mrf.mxu0
        %v5754 = vadd.f32 0.0, %v5753
        %v5755 = vpop.f32.mrf.mxu0
        %v5756 = vpop.f32.mrf.mxu0
        %v5757 = vadd.f32 0.0, %v5756
        %v5758 = vpop.f32.mrf.mxu0
        %5759 = vmatprep.mubr.bf16.mxu0 %v5673
        %5760 = vmatmul.mubr.bf16.gmra.mxu0 %v5612
        %v5761 = vpop.f32.mrf.mxu0
        %v5762 = vadd.f32 0.0, %v5761
        %v5763 = vpop.f32.mrf.mxu0
        %v5764 = vpop.f32.mrf.mxu0
        %v5765 = vadd.f32 0.0, %v5764
        %v5766 = vpop.f32.mrf.mxu0
        %5767 = vmatprep.mubr.bf16.mxu0 %v5676
        %5768 = vmatmul.mubr.bf16.gmra.mxu0 %v5614
        %v5769 = vpop.f32.mrf.mxu0
        %v5770 = vadd.f32 0.0, %v5769
        %v5771 = vpop.f32.mrf.mxu0
        %v5772 = vpop.f32.mrf.mxu0
        %v5773 = vadd.f32 0.0, %v5772
        %v5774 = vpop.f32.mrf.mxu0
        %5775 = vmatprep.mubr.bf16.mxu0 %v5679
        %5776 = vmatmul.mubr.bf16.gmra.mxu0 %v5616
        %v5777 = vpop.f32.mrf.mxu0
        %v5778 = vadd.f32 0.0, %v5777
        %v5779 = vpop.f32.mrf.mxu0
        %v5780 = vpop.f32.mrf.mxu0
        %v5781 = vadd.f32 0.0, %v5780
        %v5782 = vpop.f32.mrf.mxu0
        %5783 = vmatprep.mubr.bf16.mxu0 %v5682
        %5784 = vmatmul.mubr.bf16.gmra.mxu0 %v5618
        %v5785 = vpop.f32.mrf.mxu0
        %v5786 = vadd.f32 0.0, %v5785
        %v5787 = vpop.f32.mrf.mxu0
        %v5788 = vpop.f32.mrf.mxu0
        %v5789 = vadd.f32 0.0, %v5788
        %v5790 = vpop.f32.mrf.mxu0
        %5791 = vmatprep.mubr.bf16.mxu0 %v5685
        %5792 = vmatmul.mubr.bf16.gmra.mxu0 %v5620
        %v5793 = vpop.f32.mrf.mxu0
        %v5794 = vadd.f32 0.0, %v5793
        %v5795 = vpop.f32.mrf.mxu0
        %v5796 = vpop.f32.mrf.mxu0
        %v5797 = vadd.f32 0.0, %v5796
        %v5798 = vpop.f32.mrf.mxu0
        %5799 = vmatprep.mubr.bf16.mxu0 %v5688
        %5800 = vmatmul.mubr.bf16.gmra.mxu0 %v5622
        %v5801 = vpop.f32.mrf.mxu0
        %v5802 = vadd.f32 0.0, %v5801
        %v5803 = vpop.f32.mrf.mxu0
        %v5804 = vpop.f32.mrf.mxu0
        %v5805 = vadd.f32 0.0, %v5804
        %v5806 = vpop.f32.mrf.mxu0
        %5807 = vmatprep.mubr.bf16.mxu0 %v5691
        %5808 = vmatmul.mubr.bf16.gmra.mxu0 %v5624
        %v5809 = vpop.f32.mrf.mxu0
        %v5810 = vadd.f32 0.0, %v5809
        %v5811 = vpop.f32.mrf.mxu0
        %v5812 = vpop.f32.mrf.mxu0
        %v5813 = vadd.f32 0.0, %v5812
        %v5814 = vpop.f32.mrf.mxu0
        %5815 = vmatprep.mubr.bf16.mxu0 %v5694
        %5816 = vmatmul.mubr.bf16.gmra.mxu0 %v5626
        %v5817 = vpop.f32.mrf.mxu0
        %v5818 = vadd.f32 0.0, %v5817
        %v5819 = vpop.f32.mrf.mxu0
        %v5820 = vpop.f32.mrf.mxu0
        %v5821 = vadd.f32 0.0, %v5820
        %v5822 = vpop.f32.mrf.mxu0
        %5823 = vmatprep.mubr.bf16.mxu0 %v5697
        %5824 = vmatmul.mubr.bf16.gmra.mxu0 %v5628
        %v5825 = vpop.f32.mrf.mxu0
        %v5826 = vadd.f32 0.0, %v5825
        %v5827 = vpop.f32.mrf.mxu0
        %v5828 = vpop.f32.mrf.mxu0
        %v5829 = vadd.f32 0.0, %v5828
        %v5830 = vpop.f32.mrf.mxu0
        %5831 = vmatprep.mubr.bf16.mxu0 %v5700
        %5832 = vmatmul.mubr.bf16.gmra.mxu0 %v5630
        %v5833 = vpop.f32.mrf.mxu0
        %v5834 = vadd.f32 0.0, %v5833
        %v5835 = vpop.f32.mrf.mxu0
        %v5836 = vpop.f32.mrf.mxu0
        %v5837 = vadd.f32 0.0, %v5836
        %v5838 = vpop.f32.mrf.mxu0
        %5839 = vmatprep.mubr.bf16.mxu0 %v5703
        %5840 = vmatmul.mubr.bf16.gmra.mxu0 %v5632
        %v5841 = vpop.f32.mrf.mxu0
        %v5842 = vadd.f32 0.0, %v5841
        %v5843 = vpop.f32.mrf.mxu0
        %v5844 = vpop.f32.mrf.mxu0
        %v5845 = vadd.f32 0.0, %v5844
        %v5846 = vpop.f32.mrf.mxu0
        %5847 = vmatprep.mubr.bf16.mxu0 %v5706
        %5848 = vmatmul.mubr.bf16.gmra.mxu0 %v5634
        %v5849 = vpop.f32.mrf.mxu0
        %v5850 = vadd.f32 0.0, %v5849
        %v5851 = vpop.f32.mrf.mxu0
        %v5852 = vpop.f32.mrf.mxu0
        %v5853 = vadd.f32 0.0, %v5852
        %v5854 = vpop.f32.mrf.mxu0
        %5855 = vmatprep.mubr.bf16.mxu0 %v5709
        %5856 = vmatmul.mubr.bf16.gmra.mxu0 %v5636
        %v5857 = vpop.f32.mrf.mxu0
        %v5858 = vadd.f32 0.0, %v5857
        %v5859 = vpop.f32.mrf.mxu0
        %v5860 = vpop.f32.mrf.mxu0
        %v5861 = vadd.f32 0.0, %v5860
        %v5862 = vpop.f32.mrf.mxu0
        %5863 = vmatprep.mubr.bf16.mxu0 %v4086
        %5864 = vmatmul.mubr.bf16.gmra.mxu0 %v5638
        %v5865 = vpop.f32.mrf.mxu0
        %v5866 = vadd.f32 0.0, %v5865
        %v5867 = vpop.f32.mrf.mxu0
        %v5868 = vpop.f32.mrf.mxu0
        %v5869 = vadd.f32 0.0, %v5868
        %v5870 = vpop.f32.mrf.mxu0
        %5871 = vdwg.mxu0
        %v5872 = vpack.c.bf16 %v468, %v467
        %v5873 = vpack.c.bf16 %v470, %v469
        %v5874 = vpack.c.bf16 %v472, %v471
        %v5875 = vpack.c.bf16 %v474, %v473
        %v5876 = vpack.c.bf16 %v476, %v475
        %v5877 = vpack.c.bf16 %v478, %v477
        %v5878 = vpack.c.bf16 %v480, %v479
        %v5879 = vpack.c.bf16 %v482, %v481
        %v5880 = vpack.c.bf16 %v484, %v483
        %v5881 = vpack.c.bf16 %v486, %v485
        %v5882 = vpack.c.bf16 %v488, %v487
        %v5883 = vpack.c.bf16 %v490, %v489
        %v5884 = vpack.c.bf16 %v492, %v491
        %v5885 = vpack.c.bf16 %v494, %v493
        %v5886 = vpack.c.bf16 %v496, %v495
        %v5887 = vpack.c.bf16 %v498, %v497
        %v5888 = vld [vmem:[%s13] sm:$0xf]
        %v5889 = vpack.c.bf16 %v5888, %v5888
        %v5891 = vsel %vm1750, %v5872, 0
        %v5894 = vsel %vm1750, %v5873, 0
        %v5897 = vsel %vm1750, %v5874, 0
        %v5900 = vsel %vm1750, %v5875, 0
        %v5903 = vsel %vm1750, %v5876, 0
        %v5906 = vsel %vm1750, %v5877, 0
        %v5909 = vsel %vm1750, %v5878, 0
        %v5912 = vsel %vm1750, %v5879, 0
        %v5915 = vsel %vm1750, %v5880, 0
        %v5918 = vsel %vm1750, %v5881, 0
        %v5921 = vsel %vm1750, %v5882, 0
        %v5924 = vsel %vm1750, %v5883, 0
        %v5927 = vsel %vm1750, %v5884, 0
        %v5930 = vsel %vm1750, %v5885, 0
        %v5933 = vsel %vm1750, %v5886, 0
        %v5936 = vsel %vm1750, %v5887, 0
        %v5939 = vsel %vm2087, %v5889, 0
        %5941 = vmatprep.subr.bf16.mxu0 0
        %5942 = vmatpush1.bf16.msra.mxu0 0
        %5943 = vmatprep.subr.bf16.mxu0 0
        %5944 = vmatpush1.bf16.msra.mxu0 0
        %5945 = vmatprep.subr.bf16.mxu0 0
        %5946 = vmatpush1.bf16.msra.mxu0 0
        %5947 = vmatprep.subr.bf16.mxu0 0
        %5948 = vmatpush1.bf16.msra.mxu0 0
        %5949 = vmatprep.subr.bf16.mxu0 0
        %5950 = vmatpush1.bf16.msra.mxu0 0
        %5951 = vmatprep.subr.bf16.mxu0 0
        %5952 = vmatpush1.bf16.msra.mxu0 0
        %5953 = vmatprep.subr.bf16.mxu0 0
        %5954 = vmatpush1.bf16.msra.mxu0 0
        %5955 = vmatprep.subr.bf16.mxu0 0
        %5956 = vmatpush1.bf16.msra.mxu0 %v5939
        %5957 = vmatprep.subr.bf16.mxu0 0
        %5958 = vmatpush2.bf16.msra.mxu0 0
        %5959 = vmatprep.subr.bf16.mxu0 0
        %5960 = vmatpush2.bf16.msra.mxu0 0
        %5961 = vmatprep.subr.bf16.mxu0 0
        %5962 = vmatpush2.bf16.msra.mxu0 0
        %5963 = vmatprep.subr.bf16.mxu0 0
        %5964 = vmatpush2.bf16.msra.mxu0 0
        %5965 = vmatprep.subr.bf16.mxu0 0
        %5966 = vmatpush2.bf16.msra.mxu0 0
        %5967 = vmatprep.subr.bf16.mxu0 0
        %5968 = vmatpush2.bf16.msra.mxu0 0
        %5969 = vmatprep.subr.bf16.mxu0 0
        %5970 = vmatpush2.bf16.msra.mxu0 0
        %5971 = vmatprep.subr.bf16.mxu0 0
        %5972 = vmatpush2.bf16.msra.mxu0 0
        %5973 = vmatprep.mubr.bf16.mxu0 0
        %5974 = vmatmul.mubr.bf16.gmra.mxu0 %v5891
        %v5975 = vpop.f32.mrf.mxu0
        %v5976 = vadd.f32 0.0, %v5975
        %v5977 = vpop.f32.mrf.mxu0
        %v5978 = vpop.f32.mrf.mxu0
        %v5979 = vadd.f32 0.0, %v5978
        %v5980 = vpop.f32.mrf.mxu0
        %5981 = vmatprep.mubr.bf16.mxu0 0
        %5982 = vmatmul.mubr.bf16.gmra.mxu0 %v5894
        %v5983 = vpop.f32.mrf.mxu0
        %v5984 = vadd.f32 0.0, %v5983
        %v5985 = vpop.f32.mrf.mxu0
        %v5986 = vpop.f32.mrf.mxu0
        %v5987 = vadd.f32 0.0, %v5986
        %v5988 = vpop.f32.mrf.mxu0
        %5989 = vmatprep.mubr.bf16.mxu0 0
        %5990 = vmatmul.mubr.bf16.gmra.mxu0 %v5897
        %v5991 = vpop.f32.mrf.mxu0
        %v5992 = vadd.f32 0.0, %v5991
        %v5993 = vpop.f32.mrf.mxu0
        %v5994 = vpop.f32.mrf.mxu0
        %v5995 = vadd.f32 0.0, %v5994
        %v5996 = vpop.f32.mrf.mxu0
        %5997 = vmatprep.mubr.bf16.mxu0 0
        %5998 = vmatmul.mubr.bf16.gmra.mxu0 %v5900
        %v5999 = vpop.f32.mrf.mxu0
        %v6000 = vadd.f32 0.0, %v5999
        %v6001 = vpop.f32.mrf.mxu0
        %v6002 = vpop.f32.mrf.mxu0
        %v6003 = vadd.f32 0.0, %v6002
        %v6004 = vpop.f32.mrf.mxu0
        %6005 = vmatprep.mubr.bf16.mxu0 0
        %6006 = vmatmul.mubr.bf16.gmra.mxu0 %v5903
        %v6007 = vpop.f32.mrf.mxu0
        %v6008 = vadd.f32 0.0, %v6007
        %v6009 = vpop.f32.mrf.mxu0
        %v6010 = vpop.f32.mrf.mxu0
        %v6011 = vadd.f32 0.0, %v6010
        %v6012 = vpop.f32.mrf.mxu0
        %6013 = vmatprep.mubr.bf16.mxu0 0
        %6014 = vmatmul.mubr.bf16.gmra.mxu0 %v5906
        %v6015 = vpop.f32.mrf.mxu0
        %v6016 = vadd.f32 0.0, %v6015
        %v6017 = vpop.f32.mrf.mxu0
        %v6018 = vpop.f32.mrf.mxu0
        %v6019 = vadd.f32 0.0, %v6018
        %v6020 = vpop.f32.mrf.mxu0
        %6021 = vmatprep.mubr.bf16.mxu0 0
        %6022 = vmatmul.mubr.bf16.gmra.mxu0 %v5909
        %v6023 = vpop.f32.mrf.mxu0
        %v6024 = vadd.f32 0.0, %v6023
        %v6025 = vpop.f32.mrf.mxu0
        %v6026 = vpop.f32.mrf.mxu0
        %v6027 = vadd.f32 0.0, %v6026
        %v6028 = vpop.f32.mrf.mxu0
        %6029 = vmatprep.mubr.bf16.mxu0 0
        %6030 = vmatmul.mubr.bf16.gmra.mxu0 %v5912
        %v6031 = vpop.f32.mrf.mxu0
        %v6032 = vadd.f32 0.0, %v6031
        %v6033 = vpop.f32.mrf.mxu0
        %v6034 = vpop.f32.mrf.mxu0
        %v6035 = vadd.f32 0.0, %v6034
        %v6036 = vpop.f32.mrf.mxu0
        %6037 = vmatprep.mubr.bf16.mxu0 0
        %6038 = vmatmul.mubr.bf16.gmra.mxu0 %v5915
        %v6039 = vpop.f32.mrf.mxu0
        %v6040 = vadd.f32 0.0, %v6039
        %v6041 = vpop.f32.mrf.mxu0
        %v6042 = vpop.f32.mrf.mxu0
        %v6043 = vadd.f32 0.0, %v6042
        %v6044 = vpop.f32.mrf.mxu0
        %6045 = vmatprep.mubr.bf16.mxu0 0
        %6046 = vmatmul.mubr.bf16.gmra.mxu0 %v5918
        %v6047 = vpop.f32.mrf.mxu0
        %v6048 = vadd.f32 0.0, %v6047
        %v6049 = vpop.f32.mrf.mxu0
        %v6050 = vpop.f32.mrf.mxu0
        %v6051 = vadd.f32 0.0, %v6050
        %v6052 = vpop.f32.mrf.mxu0
        %6053 = vmatprep.mubr.bf16.mxu0 0
        %6054 = vmatmul.mubr.bf16.gmra.mxu0 %v5921
        %v6055 = vpop.f32.mrf.mxu0
        %v6056 = vadd.f32 0.0, %v6055
        %v6057 = vpop.f32.mrf.mxu0
        %v6058 = vpop.f32.mrf.mxu0
        %v6059 = vadd.f32 0.0, %v6058
        %v6060 = vpop.f32.mrf.mxu0
        %6061 = vmatprep.mubr.bf16.mxu0 0
        %6062 = vmatmul.mubr.bf16.gmra.mxu0 %v5924
        %v6063 = vpop.f32.mrf.mxu0
        %v6064 = vadd.f32 0.0, %v6063
        %v6065 = vpop.f32.mrf.mxu0
        %v6066 = vpop.f32.mrf.mxu0
        %v6067 = vadd.f32 0.0, %v6066
        %v6068 = vpop.f32.mrf.mxu0
        %6069 = vmatprep.mubr.bf16.mxu0 0
        %6070 = vmatmul.mubr.bf16.gmra.mxu0 %v5927
        %v6071 = vpop.f32.mrf.mxu0
        %v6072 = vadd.f32 0.0, %v6071
        %v6073 = vpop.f32.mrf.mxu0
        %v6074 = vpop.f32.mrf.mxu0
        %v6075 = vadd.f32 0.0, %v6074
        %v6076 = vpop.f32.mrf.mxu0
        %6077 = vmatprep.mubr.bf16.mxu0 0
        %6078 = vmatmul.mubr.bf16.gmra.mxu0 %v5930
        %v6079 = vpop.f32.mrf.mxu0
        %v6080 = vadd.f32 0.0, %v6079
        %v6081 = vpop.f32.mrf.mxu0
        %v6082 = vpop.f32.mrf.mxu0
        %v6083 = vadd.f32 0.0, %v6082
        %v6084 = vpop.f32.mrf.mxu0
        %6085 = vmatprep.mubr.bf16.mxu0 0
        %6086 = vmatmul.mubr.bf16.gmra.mxu0 %v5933
        %v6087 = vpop.f32.mrf.mxu0
        %v6088 = vadd.f32 0.0, %v6087
        %v6089 = vpop.f32.mrf.mxu0
        %v6090 = vpop.f32.mrf.mxu0
        %v6091 = vadd.f32 0.0, %v6090
        %v6092 = vpop.f32.mrf.mxu0
        %6093 = vmatprep.mubr.bf16.mxu0 0
        %6094 = vmatmul.mubr.bf16.gmra.mxu0 %v5936
        %v6095 = vpop.f32.mrf.mxu0
        %v6096 = vadd.f32 0.0, %v6095
        %v6097 = vpop.f32.mrf.mxu0
        %v6098 = vpop.f32.mrf.mxu0
        %v6099 = vadd.f32 0.0, %v6098
        %v6100 = vpop.f32.mrf.mxu0
        %6101 = vdwg.mxu0
        %v6102 = vadd.f32 %v5746, %v5976
        %v6103 = vadd.f32 %v5749, %v5979
        %v6104 = vadd.f32 %v5754, %v5984
        %v6105 = vadd.f32 %v5757, %v5987
        %v6106 = vadd.f32 %v5762, %v5992
        %v6107 = vadd.f32 %v5765, %v5995
        %v6108 = vadd.f32 %v5770, %v6000
        %v6109 = vadd.f32 %v5773, %v6003
        %v6110 = vadd.f32 %v5778, %v6008
        %v6111 = vadd.f32 %v5781, %v6011
        %v6112 = vadd.f32 %v5786, %v6016
        %v6113 = vadd.f32 %v5789, %v6019
        %v6114 = vadd.f32 %v5794, %v6024
        %v6115 = vadd.f32 %v5797, %v6027
        %v6116 = vadd.f32 %v5802, %v6032
        %v6117 = vadd.f32 %v5805, %v6035
        %v6118 = vadd.f32 %v5810, %v6040
        %v6119 = vadd.f32 %v5813, %v6043
        %v6120 = vadd.f32 %v5818, %v6048
        %v6121 = vadd.f32 %v5821, %v6051
        %v6122 = vadd.f32 %v5826, %v6056
        %v6123 = vadd.f32 %v5829, %v6059
        %v6124 = vadd.f32 %v5834, %v6064
        %v6125 = vadd.f32 %v5837, %v6067
        %v6126 = vadd.f32 %v5842, %v6072
        %v6127 = vadd.f32 %v5845, %v6075
        %v6128 = vadd.f32 %v5850, %v6080
        %v6129 = vadd.f32 %v5853, %v6083
        %v6130 = vadd.f32 %v5858, %v6088
        %v6131 = vadd.f32 %v5861, %v6091
        %v6132 = vadd.f32 %v5866, %v6096
        %v6133 = vadd.f32 %v5869, %v6099
        %v6134 = vcombine.low %v6102, %v6106
        %v6135 = vcombine.high %v6102, %v6106
        %v6137 = vunpack.c.l.s4 1983009808
        %v6138 = vunpack.c.0.s8 %v6137
        %v6139 = vlaneseq
        %v6140 = vshrl.u32 %v6139, 7
        %v6141 = vsub.s32 %v6138, %v6140
        %v6142 = vrot.slane %v6134, %v6141
        %v6144 = vunpack.c.l.s4 1983009808
        %v6145 = vunpack.c.0.s8 %v6144
        %v6146 = vlaneseq
        %v6147 = vshrl.u32 %v6146, 7
        %v6148 = vsub.s32 %v6145, %v6147
        %v6149 = vrot.slane %v6135, %v6148
        %v6150 = vcombine.low %v6104, %v6108
        %v6151 = vcombine.high %v6104, %v6108
        %v6153 = vunpack.c.l.s4 1983009808
        %v6154 = vunpack.c.0.s8 %v6153
        %v6155 = vlaneseq
        %v6156 = vshrl.u32 %v6155, 7
        %v6157 = vsub.s32 %v6154, %v6156
        %v6158 = vrot.slane %v6150, %v6157
        %v6160 = vunpack.c.l.s4 1983009808
        %v6161 = vunpack.c.0.s8 %v6160
        %v6162 = vlaneseq
        %v6163 = vshrl.u32 %v6162, 7
        %v6164 = vsub.s32 %v6161, %v6163
        %v6165 = vrot.slane %v6151, %v6164
        %v6166 = vcombine.low %v6110, %v6114
        %v6167 = vcombine.high %v6110, %v6114
        %v6169 = vunpack.c.l.s4 1983009808
        %v6170 = vunpack.c.0.s8 %v6169
        %v6171 = vlaneseq
        %v6172 = vshrl.u32 %v6171, 7
        %v6173 = vsub.s32 %v6170, %v6172
        %v6174 = vrot.slane %v6166, %v6173
        %v6176 = vunpack.c.l.s4 1983009808
        %v6177 = vunpack.c.0.s8 %v6176
        %v6178 = vlaneseq
        %v6179 = vshrl.u32 %v6178, 7
        %v6180 = vsub.s32 %v6177, %v6179
        %v6181 = vrot.slane %v6167, %v6180
        %v6182 = vcombine.low %v6112, %v6116
        %v6183 = vcombine.high %v6112, %v6116
        %v6185 = vunpack.c.l.s4 1983009808
        %v6186 = vunpack.c.0.s8 %v6185
        %v6187 = vlaneseq
        %v6188 = vshrl.u32 %v6187, 7
        %v6189 = vsub.s32 %v6186, %v6188
        %v6190 = vrot.slane %v6182, %v6189
        %v6192 = vunpack.c.l.s4 1983009808
        %v6193 = vunpack.c.0.s8 %v6192
        %v6194 = vlaneseq
        %v6195 = vshrl.u32 %v6194, 7
        %v6196 = vsub.s32 %v6193, %v6195
        %v6197 = vrot.slane %v6183, %v6196
        %v6198 = vcombine.low %v6142, %v6158
        %v6199 = vcombine.high %v6142, %v6158
        %v6201 = vunpack.c.l.s4 1934713408
        %v6202 = vunpack.c.0.s8 %v6201
        %v6203 = vlaneseq
        %v6204 = vshrl.u32 %v6203, 7
        %v6205 = vsub.s32 %v6202, %v6204
        %v6206 = vrot.slane %v6198, %v6205
        %v6208 = vunpack.c.l.s4 1934713408
        %v6209 = vunpack.c.0.s8 %v6208
        %v6210 = vlaneseq
        %v6211 = vshrl.u32 %v6210, 7
        %v6212 = vsub.s32 %v6209, %v6211
        %v6213 = vrot.slane %v6199, %v6212
        %v6214 = vcombine.low %v6149, %v6165
        %v6215 = vcombine.high %v6149, %v6165
        %v6217 = vunpack.c.l.s4 1934713408
        %v6218 = vunpack.c.0.s8 %v6217
        %v6219 = vlaneseq
        %v6220 = vshrl.u32 %v6219, 7
        %v6221 = vsub.s32 %v6218, %v6220
        %v6222 = vrot.slane %v6214, %v6221
        %v6224 = vunpack.c.l.s4 1934713408
        %v6225 = vunpack.c.0.s8 %v6224
        %v6226 = vlaneseq
        %v6227 = vshrl.u32 %v6226, 7
        %v6228 = vsub.s32 %v6225, %v6227
        %v6229 = vrot.slane %v6215, %v6228
        %v6230 = vcombine.low %v6174, %v6190
        %v6231 = vcombine.high %v6174, %v6190
        %v6233 = vunpack.c.l.s4 1934713408
        %v6234 = vunpack.c.0.s8 %v6233
        %v6235 = vlaneseq
        %v6236 = vshrl.u32 %v6235, 7
        %v6237 = vsub.s32 %v6234, %v6236
        %v6238 = vrot.slane %v6230, %v6237
        %v6240 = vunpack.c.l.s4 1934713408
        %v6241 = vunpack.c.0.s8 %v6240
        %v6242 = vlaneseq
        %v6243 = vshrl.u32 %v6242, 7
        %v6244 = vsub.s32 %v6241, %v6243
        %v6245 = vrot.slane %v6231, %v6244
        %v6246 = vcombine.low %v6181, %v6197
        %v6247 = vcombine.high %v6181, %v6197
        %v6249 = vunpack.c.l.s4 1934713408
        %v6250 = vunpack.c.0.s8 %v6249
        %v6251 = vlaneseq
        %v6252 = vshrl.u32 %v6251, 7
        %v6253 = vsub.s32 %v6250, %v6252
        %v6254 = vrot.slane %v6246, %v6253
        %v6256 = vunpack.c.l.s4 1934713408
        %v6257 = vunpack.c.0.s8 %v6256
        %v6258 = vlaneseq
        %v6259 = vshrl.u32 %v6258, 7
        %v6260 = vsub.s32 %v6257, %v6259
        %v6261 = vrot.slane %v6247, %v6260
        %v6262 = vcombine.low %v6206, %v6238
        %v6263 = vcombine.high %v6206, %v6238
        %v6264 = vcombine.low %v6213, %v6245
        %v6265 = vcombine.high %v6213, %v6245
        %v6266 = vcombine.low %v6222, %v6254
        %v6267 = vcombine.high %v6222, %v6254
        %v6268 = vcombine.low %v6229, %v6261
        %v6269 = vcombine.high %v6229, %v6261
        %v6270 = vcombine.low %v6118, %v6122
        %v6271 = vcombine.high %v6118, %v6122
        %v6273 = vunpack.c.l.s4 1983009808
        %v6274 = vunpack.c.0.s8 %v6273
        %v6275 = vlaneseq
        %v6276 = vshrl.u32 %v6275, 7
        %v6277 = vsub.s32 %v6274, %v6276
        %v6278 = vrot.slane %v6270, %v6277
        %v6280 = vunpack.c.l.s4 1983009808
        %v6281 = vunpack.c.0.s8 %v6280
        %v6282 = vlaneseq
        %v6283 = vshrl.u32 %v6282, 7
        %v6284 = vsub.s32 %v6281, %v6283
        %v6285 = vrot.slane %v6271, %v6284
        %v6286 = vcombine.low %v6120, %v6124
        %v6287 = vcombine.high %v6120, %v6124
        %v6289 = vunpack.c.l.s4 1983009808
        %v6290 = vunpack.c.0.s8 %v6289
        %v6291 = vlaneseq
        %v6292 = vshrl.u32 %v6291, 7
        %v6293 = vsub.s32 %v6290, %v6292
        %v6294 = vrot.slane %v6286, %v6293
        %v6296 = vunpack.c.l.s4 1983009808
        %v6297 = vunpack.c.0.s8 %v6296
        %v6298 = vlaneseq
        %v6299 = vshrl.u32 %v6298, 7
        %v6300 = vsub.s32 %v6297, %v6299
        %v6301 = vrot.slane %v6287, %v6300
        %v6302 = vcombine.low %v6126, %v6130
        %v6303 = vcombine.high %v6126, %v6130
        %v6305 = vunpack.c.l.s4 1983009808
        %v6306 = vunpack.c.0.s8 %v6305
        %v6307 = vlaneseq
        %v6308 = vshrl.u32 %v6307, 7
        %v6309 = vsub.s32 %v6306, %v6308
        %v6310 = vrot.slane %v6302, %v6309
        %v6312 = vunpack.c.l.s4 1983009808
        %v6313 = vunpack.c.0.s8 %v6312
        %v6314 = vlaneseq
        %v6315 = vshrl.u32 %v6314, 7
        %v6316 = vsub.s32 %v6313, %v6315
        %v6317 = vrot.slane %v6303, %v6316
        %v6318 = vcombine.low %v6128, %v6132
        %v6319 = vcombine.high %v6128, %v6132
        %v6321 = vunpack.c.l.s4 1983009808
        %v6322 = vunpack.c.0.s8 %v6321
        %v6323 = vlaneseq
        %v6324 = vshrl.u32 %v6323, 7
        %v6325 = vsub.s32 %v6322, %v6324
        %v6326 = vrot.slane %v6318, %v6325
        %v6328 = vunpack.c.l.s4 1983009808
        %v6329 = vunpack.c.0.s8 %v6328
        %v6330 = vlaneseq
        %v6331 = vshrl.u32 %v6330, 7
        %v6332 = vsub.s32 %v6329, %v6331
        %v6333 = vrot.slane %v6319, %v6332
        %v6334 = vcombine.low %v6278, %v6294
        %v6335 = vcombine.high %v6278, %v6294
        %v6337 = vunpack.c.l.s4 1934713408
        %v6338 = vunpack.c.0.s8 %v6337
        %v6339 = vlaneseq
        %v6340 = vshrl.u32 %v6339, 7
        %v6341 = vsub.s32 %v6338, %v6340
        %v6342 = vrot.slane %v6334, %v6341
        %v6344 = vunpack.c.l.s4 1934713408
        %v6345 = vunpack.c.0.s8 %v6344
        %v6346 = vlaneseq
        %v6347 = vshrl.u32 %v6346, 7
        %v6348 = vsub.s32 %v6345, %v6347
        %v6349 = vrot.slane %v6335, %v6348
        %v6350 = vcombine.low %v6285, %v6301
        %v6351 = vcombine.high %v6285, %v6301
        %v6353 = vunpack.c.l.s4 1934713408
        %v6354 = vunpack.c.0.s8 %v6353
        %v6355 = vlaneseq
        %v6356 = vshrl.u32 %v6355, 7
        %v6357 = vsub.s32 %v6354, %v6356
        %v6358 = vrot.slane %v6350, %v6357
        %v6360 = vunpack.c.l.s4 1934713408
        %v6361 = vunpack.c.0.s8 %v6360
        %v6362 = vlaneseq
        %v6363 = vshrl.u32 %v6362, 7
        %v6364 = vsub.s32 %v6361, %v6363
        %v6365 = vrot.slane %v6351, %v6364
        %v6366 = vcombine.low %v6310, %v6326
        %v6367 = vcombine.high %v6310, %v6326
        %v6369 = vunpack.c.l.s4 1934713408
        %v6370 = vunpack.c.0.s8 %v6369
        %v6371 = vlaneseq
        %v6372 = vshrl.u32 %v6371, 7
        %v6373 = vsub.s32 %v6370, %v6372
        %v6374 = vrot.slane %v6366, %v6373
        %v6376 = vunpack.c.l.s4 1934713408
        %v6377 = vunpack.c.0.s8 %v6376
        %v6378 = vlaneseq
        %v6379 = vshrl.u32 %v6378, 7
        %v6380 = vsub.s32 %v6377, %v6379
        %v6381 = vrot.slane %v6367, %v6380
        %v6382 = vcombine.low %v6317, %v6333
        %v6383 = vcombine.high %v6317, %v6333
        %v6385 = vunpack.c.l.s4 1934713408
        %v6386 = vunpack.c.0.s8 %v6385
        %v6387 = vlaneseq
        %v6388 = vshrl.u32 %v6387, 7
        %v6389 = vsub.s32 %v6386, %v6388
        %v6390 = vrot.slane %v6382, %v6389
        %v6392 = vunpack.c.l.s4 1934713408
        %v6393 = vunpack.c.0.s8 %v6392
        %v6394 = vlaneseq
        %v6395 = vshrl.u32 %v6394, 7
        %v6396 = vsub.s32 %v6393, %v6395
        %v6397 = vrot.slane %v6383, %v6396
        %v6398 = vcombine.low %v6342, %v6374
        %v6399 = vcombine.high %v6342, %v6374
        %v6400 = vcombine.low %v6349, %v6381
        %v6401 = vcombine.high %v6349, %v6381
        %v6402 = vcombine.low %v6358, %v6390
        %v6403 = vcombine.high %v6358, %v6390
        %v6404 = vcombine.low %v6365, %v6397
        %v6405 = vcombine.high %v6365, %v6397
        %v6406 = vcombine.low %v6103, %v6107
        %v6407 = vcombine.high %v6103, %v6107
        %v6409 = vunpack.c.l.s4 1983009808
        %v6410 = vunpack.c.0.s8 %v6409
        %v6411 = vlaneseq
        %v6412 = vshrl.u32 %v6411, 7
        %v6413 = vsub.s32 %v6410, %v6412
        %v6414 = vrot.slane %v6406, %v6413
        %v6416 = vunpack.c.l.s4 1983009808
        %v6417 = vunpack.c.0.s8 %v6416
        %v6418 = vlaneseq
        %v6419 = vshrl.u32 %v6418, 7
        %v6420 = vsub.s32 %v6417, %v6419
        %v6421 = vrot.slane %v6407, %v6420
        %v6422 = vcombine.low %v6105, %v6109
        %v6423 = vcombine.high %v6105, %v6109
        %v6425 = vunpack.c.l.s4 1983009808
        %v6426 = vunpack.c.0.s8 %v6425
        %v6427 = vlaneseq
        %v6428 = vshrl.u32 %v6427, 7
        %v6429 = vsub.s32 %v6426, %v6428
        %v6430 = vrot.slane %v6422, %v6429
        %v6432 = vunpack.c.l.s4 1983009808
        %v6433 = vunpack.c.0.s8 %v6432
        %v6434 = vlaneseq
        %v6435 = vshrl.u32 %v6434, 7
        %v6436 = vsub.s32 %v6433, %v6435
        %v6437 = vrot.slane %v6423, %v6436
        %v6438 = vcombine.low %v6111, %v6115
        %v6439 = vcombine.high %v6111, %v6115
        %v6441 = vunpack.c.l.s4 1983009808
        %v6442 = vunpack.c.0.s8 %v6441
        %v6443 = vlaneseq
        %v6444 = vshrl.u32 %v6443, 7
        %v6445 = vsub.s32 %v6442, %v6444
        %v6446 = vrot.slane %v6438, %v6445
        %v6448 = vunpack.c.l.s4 1983009808
        %v6449 = vunpack.c.0.s8 %v6448
        %v6450 = vlaneseq
        %v6451 = vshrl.u32 %v6450, 7
        %v6452 = vsub.s32 %v6449, %v6451
        %v6453 = vrot.slane %v6439, %v6452
        %v6454 = vcombine.low %v6113, %v6117
        %v6455 = vcombine.high %v6113, %v6117
        %v6457 = vunpack.c.l.s4 1983009808
        %v6458 = vunpack.c.0.s8 %v6457
        %v6459 = vlaneseq
        %v6460 = vshrl.u32 %v6459, 7
        %v6461 = vsub.s32 %v6458, %v6460
        %v6462 = vrot.slane %v6454, %v6461
        %v6464 = vunpack.c.l.s4 1983009808
        %v6465 = vunpack.c.0.s8 %v6464
        %v6466 = vlaneseq
        %v6467 = vshrl.u32 %v6466, 7
        %v6468 = vsub.s32 %v6465, %v6467
        %v6469 = vrot.slane %v6455, %v6468
        %v6470 = vcombine.low %v6414, %v6430
        %v6471 = vcombine.high %v6414, %v6430
        %v6473 = vunpack.c.l.s4 1934713408
        %v6474 = vunpack.c.0.s8 %v6473
        %v6475 = vlaneseq
        %v6476 = vshrl.u32 %v6475, 7
        %v6477 = vsub.s32 %v6474, %v6476
        %v6478 = vrot.slane %v6470, %v6477
        %v6480 = vunpack.c.l.s4 1934713408
        %v6481 = vunpack.c.0.s8 %v6480
        %v6482 = vlaneseq
        %v6483 = vshrl.u32 %v6482, 7
        %v6484 = vsub.s32 %v6481, %v6483
        %v6485 = vrot.slane %v6471, %v6484
        %v6486 = vcombine.low %v6421, %v6437
        %v6487 = vcombine.high %v6421, %v6437
        %v6489 = vunpack.c.l.s4 1934713408
        %v6490 = vunpack.c.0.s8 %v6489
        %v6491 = vlaneseq
        %v6492 = vshrl.u32 %v6491, 7
        %v6493 = vsub.s32 %v6490, %v6492
        %v6494 = vrot.slane %v6486, %v6493
        %v6496 = vunpack.c.l.s4 1934713408
        %v6497 = vunpack.c.0.s8 %v6496
        %v6498 = vlaneseq
        %v6499 = vshrl.u32 %v6498, 7
        %v6500 = vsub.s32 %v6497, %v6499
        %v6501 = vrot.slane %v6487, %v6500
        %v6502 = vcombine.low %v6446, %v6462
        %v6503 = vcombine.high %v6446, %v6462
        %v6505 = vunpack.c.l.s4 1934713408
        %v6506 = vunpack.c.0.s8 %v6505
        %v6507 = vlaneseq
        %v6508 = vshrl.u32 %v6507, 7
        %v6509 = vsub.s32 %v6506, %v6508
        %v6510 = vrot.slane %v6502, %v6509
        %v6512 = vunpack.c.l.s4 1934713408
        %v6513 = vunpack.c.0.s8 %v6512
        %v6514 = vlaneseq
        %v6515 = vshrl.u32 %v6514, 7
        %v6516 = vsub.s32 %v6513, %v6515
        %v6517 = vrot.slane %v6503, %v6516
        %v6518 = vcombine.low %v6453, %v6469
        %v6519 = vcombine.high %v6453, %v6469
        %v6521 = vunpack.c.l.s4 1934713408
        %v6522 = vunpack.c.0.s8 %v6521
        %v6523 = vlaneseq
        %v6524 = vshrl.u32 %v6523, 7
        %v6525 = vsub.s32 %v6522, %v6524
        %v6526 = vrot.slane %v6518, %v6525
        %v6528 = vunpack.c.l.s4 1934713408
        %v6529 = vunpack.c.0.s8 %v6528
        %v6530 = vlaneseq
        %v6531 = vshrl.u32 %v6530, 7
        %v6532 = vsub.s32 %v6529, %v6531
        %v6533 = vrot.slane %v6519, %v6532
        %v6534 = vcombine.low %v6478, %v6510
        %v6535 = vcombine.high %v6478, %v6510
        %v6536 = vcombine.low %v6485, %v6517
        %v6537 = vcombine.high %v6485, %v6517
        %v6538 = vcombine.low %v6494, %v6526
        %v6539 = vcombine.high %v6494, %v6526
        %v6540 = vcombine.low %v6501, %v6533
        %v6541 = vcombine.high %v6501, %v6533
        %v6542 = vcombine.low %v6119, %v6123
        %v6543 = vcombine.high %v6119, %v6123
        %v6545 = vunpack.c.l.s4 1983009808
        %v6546 = vunpack.c.0.s8 %v6545
        %v6547 = vlaneseq
        %v6548 = vshrl.u32 %v6547, 7
        %v6549 = vsub.s32 %v6546, %v6548
        %v6550 = vrot.slane %v6542, %v6549
        %v6552 = vunpack.c.l.s4 1983009808
        %v6553 = vunpack.c.0.s8 %v6552
        %v6554 = vlaneseq
        %v6555 = vshrl.u32 %v6554, 7
        %v6556 = vsub.s32 %v6553, %v6555
        %v6557 = vrot.slane %v6543, %v6556
        %v6558 = vcombine.low %v6121, %v6125
        %v6559 = vcombine.high %v6121, %v6125
        %v6561 = vunpack.c.l.s4 1983009808
        %v6562 = vunpack.c.0.s8 %v6561
        %v6563 = vlaneseq
        %v6564 = vshrl.u32 %v6563, 7
        %v6565 = vsub.s32 %v6562, %v6564
        %v6566 = vrot.slane %v6558, %v6565
        %v6568 = vunpack.c.l.s4 1983009808
        %v6569 = vunpack.c.0.s8 %v6568
        %v6570 = vlaneseq
        %v6571 = vshrl.u32 %v6570, 7
        %v6572 = vsub.s32 %v6569, %v6571
        %v6573 = vrot.slane %v6559, %v6572
        %v6574 = vcombine.low %v6127, %v6131
        %v6575 = vcombine.high %v6127, %v6131
        %v6577 = vunpack.c.l.s4 1983009808
        %v6578 = vunpack.c.0.s8 %v6577
        %v6579 = vlaneseq
        %v6580 = vshrl.u32 %v6579, 7
        %v6581 = vsub.s32 %v6578, %v6580
        %v6582 = vrot.slane %v6574, %v6581
        %v6584 = vunpack.c.l.s4 1983009808
        %v6585 = vunpack.c.0.s8 %v6584
        %v6586 = vlaneseq
        %v6587 = vshrl.u32 %v6586, 7
        %v6588 = vsub.s32 %v6585, %v6587
        %v6589 = vrot.slane %v6575, %v6588
        %v6590 = vcombine.low %v6129, %v6133
        %v6591 = vcombine.high %v6129, %v6133
        %v6593 = vunpack.c.l.s4 1983009808
        %v6594 = vunpack.c.0.s8 %v6593
        %v6595 = vlaneseq
        %v6596 = vshrl.u32 %v6595, 7
        %v6597 = vsub.s32 %v6594, %v6596
        %v6598 = vrot.slane %v6590, %v6597
        %v6600 = vunpack.c.l.s4 1983009808
        %v6601 = vunpack.c.0.s8 %v6600
        %v6602 = vlaneseq
        %v6603 = vshrl.u32 %v6602, 7
        %v6604 = vsub.s32 %v6601, %v6603
        %v6605 = vrot.slane %v6591, %v6604
        %v6606 = vcombine.low %v6550, %v6566
        %v6607 = vcombine.high %v6550, %v6566
        %v6609 = vunpack.c.l.s4 1934713408
        %v6610 = vunpack.c.0.s8 %v6609
        %v6611 = vlaneseq
        %v6612 = vshrl.u32 %v6611, 7
        %v6613 = vsub.s32 %v6610, %v6612
        %v6614 = vrot.slane %v6606, %v6613
        %v6616 = vunpack.c.l.s4 1934713408
        %v6617 = vunpack.c.0.s8 %v6616
        %v6618 = vlaneseq
        %v6619 = vshrl.u32 %v6618, 7
        %v6620 = vsub.s32 %v6617, %v6619
        %v6621 = vrot.slane %v6607, %v6620
        %v6622 = vcombine.low %v6557, %v6573
        %v6623 = vcombine.high %v6557, %v6573
        %v6625 = vunpack.c.l.s4 1934713408
        %v6626 = vunpack.c.0.s8 %v6625
        %v6627 = vlaneseq
        %v6628 = vshrl.u32 %v6627, 7
        %v6629 = vsub.s32 %v6626, %v6628
        %v6630 = vrot.slane %v6622, %v6629
        %v6632 = vunpack.c.l.s4 1934713408
        %v6633 = vunpack.c.0.s8 %v6632
        %v6634 = vlaneseq
        %v6635 = vshrl.u32 %v6634, 7
        %v6636 = vsub.s32 %v6633, %v6635
        %v6637 = vrot.slane %v6623, %v6636
        %v6638 = vcombine.low %v6582, %v6598
        %v6639 = vcombine.high %v6582, %v6598
        %v6641 = vunpack.c.l.s4 1934713408
        %v6642 = vunpack.c.0.s8 %v6641
        %v6643 = vlaneseq
        %v6644 = vshrl.u32 %v6643, 7
        %v6645 = vsub.s32 %v6642, %v6644
        %v6646 = vrot.slane %v6638, %v6645
        %v6648 = vunpack.c.l.s4 1934713408
        %v6649 = vunpack.c.0.s8 %v6648
        %v6650 = vlaneseq
        %v6651 = vshrl.u32 %v6650, 7
        %v6652 = vsub.s32 %v6649, %v6651
        %v6653 = vrot.slane %v6639, %v6652
        %v6654 = vcombine.low %v6589, %v6605
        %v6655 = vcombine.high %v6589, %v6605
        %v6657 = vunpack.c.l.s4 1934713408
        %v6658 = vunpack.c.0.s8 %v6657
        %v6659 = vlaneseq
        %v6660 = vshrl.u32 %v6659, 7
        %v6661 = vsub.s32 %v6658, %v6660
        %v6662 = vrot.slane %v6654, %v6661
        %v6664 = vunpack.c.l.s4 1934713408
        %v6665 = vunpack.c.0.s8 %v6664
        %v6666 = vlaneseq
        %v6667 = vshrl.u32 %v6666, 7
        %v6668 = vsub.s32 %v6665, %v6667
        %v6669 = vrot.slane %v6655, %v6668
        %v6670 = vcombine.low %v6614, %v6646
        %v6671 = vcombine.high %v6614, %v6646
        %v6672 = vcombine.low %v6621, %v6653
        %v6673 = vcombine.high %v6621, %v6653
        %v6674 = vcombine.low %v6630, %v6662
        %v6675 = vcombine.high %v6630, %v6662
        %v6676 = vcombine.low %v6637, %v6669
        %v6677 = vcombine.high %v6637, %v6669
        %6680 = vrot.lane.b32.xlu0 %v6263, 8
        %v6681 = vpop.permute.xlu0 %6680
        %6682 = vrot.lane.b32.xlu0 %v6399, 8
        %v6683 = vpop.permute.xlu0 %6682
        %6688 = vrot.lane.b32.xlu0 %v6264, 16
        %v6689 = vpop.permute.xlu0 %6688
        %6690 = vrot.lane.b32.xlu0 %v6400, 16
        %v6691 = vpop.permute.xlu0 %6690
        %6696 = vrot.lane.b32.xlu0 %v6265, 24
        %v6697 = vpop.permute.xlu0 %6696
        %6698 = vrot.lane.b32.xlu0 %v6401, 24
        %v6699 = vpop.permute.xlu0 %6698
        %6704 = vrot.lane.b32.xlu0 %v6266, 32
        %v6705 = vpop.permute.xlu0 %6704
        %6706 = vrot.lane.b32.xlu0 %v6402, 32
        %v6707 = vpop.permute.xlu0 %6706
        %6712 = vrot.lane.b32.xlu0 %v6267, 40
        %v6713 = vpop.permute.xlu0 %6712
        %6714 = vrot.lane.b32.xlu0 %v6403, 40
        %v6715 = vpop.permute.xlu0 %6714
        %6720 = vrot.lane.b32.xlu0 %v6268, 48
        %v6721 = vpop.permute.xlu0 %6720
        %6722 = vrot.lane.b32.xlu0 %v6404, 48
        %v6723 = vpop.permute.xlu0 %6722
        %6728 = vrot.lane.b32.xlu0 %v6269, 56
        %v6729 = vpop.permute.xlu0 %6728
        %6730 = vrot.lane.b32.xlu0 %v6405, 56
        %v6731 = vpop.permute.xlu0 %6730
        %6736 = vrot.lane.b32.xlu0 %v6534, 64
        %v6737 = vpop.permute.xlu0 %6736
        %6738 = vrot.lane.b32.xlu0 %v6670, 64
        %v6739 = vpop.permute.xlu0 %6738
        %6744 = vrot.lane.b32.xlu0 %v6535, 72
        %v6745 = vpop.permute.xlu0 %6744
        %6746 = vrot.lane.b32.xlu0 %v6671, 72
        %v6747 = vpop.permute.xlu0 %6746
        %6752 = vrot.lane.b32.xlu0 %v6536, 80
        %v6753 = vpop.permute.xlu0 %6752
        %6754 = vrot.lane.b32.xlu0 %v6672, 80
        %v6755 = vpop.permute.xlu0 %6754
        %6760 = vrot.lane.b32.xlu0 %v6537, 88
        %v6761 = vpop.permute.xlu0 %6760
        %6762 = vrot.lane.b32.xlu0 %v6673, 88
        %v6763 = vpop.permute.xlu0 %6762
        %6768 = vrot.lane.b32.xlu0 %v6538, 96
        %v6769 = vpop.permute.xlu0 %6768
        %6770 = vrot.lane.b32.xlu0 %v6674, 96
        %v6771 = vpop.permute.xlu0 %6770
        %6776 = vrot.lane.b32.xlu0 %v6539, 104
        %v6777 = vpop.permute.xlu0 %6776
        %6778 = vrot.lane.b32.xlu0 %v6675, 104
        %v6779 = vpop.permute.xlu0 %6778
        %6784 = vrot.lane.b32.xlu0 %v6540, 112
        %v6785 = vpop.permute.xlu0 %6784
        %6786 = vrot.lane.b32.xlu0 %v6676, 112
        %v6787 = vpop.permute.xlu0 %6786
        %6792 = vrot.lane.b32.xlu0 %v6541, 120
        %v6793 = vpop.permute.xlu0 %6792
        %6794 = vrot.lane.b32.xlu0 %v6677, 120
        %v6795 = vpop.permute.xlu0 %6794
        %v6798 = vsel %vm1783, %v6262, %v6681
        %v6799 = vsel %vm1783, %v6398, %v6683
        %v6800 = vsel %vm1849, %v6798, %v6689
        %v6801 = vsel %vm1849, %v6799, %v6691
        %v6802 = vsel %vm1915, %v6800, %v6697
        %v6803 = vsel %vm1915, %v6801, %v6699
        %v6804 = vsel %vm1981, %v6802, %v6705
        %v6805 = vsel %vm1981, %v6803, %v6707
        %vm6806 = vcmask 326656
        %v6807 = vsel %vm6806, %v6804, %v6713
        %v6808 = vsel %vm6806, %v6805, %v6715
        %v6809 = vsel %vm3816, %v6807, %v6721
        %v6810 = vsel %vm3816, %v6808, %v6723
        %vm6811 = vcmask 457728
        %v6812 = vsel %vm6811, %v6809, %v6729
        %v6813 = vsel %vm6811, %v6810, %v6731
        %v6814 = vsel %vm3849, %v6812, %v6737
        %v6815 = vsel %vm3849, %v6813, %v6739
        %vm6816 = vcmask 588800
        %v6817 = vsel %vm6816, %v6814, %v6745
        %v6818 = vsel %vm6816, %v6815, %v6747
        %v6819 = vsel %vm3882, %v6817, %v6753
        %v6820 = vsel %vm3882, %v6818, %v6755
        %vm6821 = vcmask 719872
        %v6822 = vsel %vm6821, %v6819, %v6761
        %v6823 = vsel %vm6821, %v6820, %v6763
        %v6824 = vsel %vm3915, %v6822, %v6769
        %v6825 = vsel %vm3915, %v6823, %v6771
        %vm6826 = vcmask 850944
        %v6827 = vsel %vm6826, %v6824, %v6777
        %v6828 = vsel %vm6826, %v6825, %v6779
        %v6829 = vsel %vm3948, %v6827, %v6785
        %v6830 = vsel %vm3948, %v6828, %v6787
        %vm6831 = vcmask 982016
        %v6832 = vsel %vm6831, %v6829, %v6793
        %v6833 = vsel %vm6831, %v6830, %v6795
        %6834 = vst [vmem:[%s460] sm:$0xff] %v6832
        %6835 = vst [vmem:[%s460 + $0x8] sm:$0xff] %v6833
        %s6836 = sand.u32 %s335, 1
        %s6837 = scalar_lea.sflag [#allocation3], %s6836
        %s6838 = sand.u32 %s335, 1
        %s6839 = smul.addr %s6838, 16
        %s6840 = scalar_lea.vmem [#allocation2], %s6839
        // Predicated region
        $region77: #{tpu_custom_call.1} parent=75 // pred_check
          %p6841 = pneg %p345
        $region78: #{tpu_custom_call.1} parent=75 // pred_check_branch
          %6843 = sbr.rel (%p6841) target = $region80
        $region79: #{tpu_custom_call.1} parent=75 // pred_region
          %s6845 = ssub.s32 256, 256
          %6846 = vsyncadd %s6837, %s6845
          %s6847 = smul.addr %s28, 2
          %s6848 = smul.addr %s6847, 128
          %s6849 = scalar_lea.hbm %s14, %s6848
          %s6850 = sshll.u32 %s6840, 4
          %s6851 = int_to_ptr.vmem [resolvable:$true] %s6850
          %6856 = dma.vmem_to_hbm [thread:$0]  %s6851, 256, %s6849, %s6837, 128, 128, 8
        $region80: #{tpu_custom_call.1} parent=75 // pred_fallthru
          _
      $region76: #{tpu_custom_call.1} parent=5 // pred_fallthru
        _
      %p6857 = scmp.le.s32.totalorder 2, %s23
      // Predicated region
      $region81: #{tpu_custom_call.1} parent=5 // pred_check
        %p6858 = pneg %p6857
      $region82: #{tpu_custom_call.1} parent=5 // pred_check_branch
        %6860 = sbr.rel (%p6858) target = $region84
      $region83: #{tpu_custom_call.1} parent=5 // pred_region
        %s6861 = ssub.s32 %s23, 2
        // Predicated region
        $region85: #{tpu_custom_call.1} parent=83 // pred_check
          %p6862 = pneg %p351
        $region86: #{tpu_custom_call.1} parent=83 // pred_check_branch
          %6864 = sbr.rel (%p6862) target = $region88
        $region87: #{tpu_custom_call.1} parent=83 // pred_region
          %s6865 = sand.u32 %s336, 1
          %s6866 = scalar_lea.sflag [#allocation3], %s6865
          %s6867 = sand.u32 %s336, 1
          %s6868 = smul.addr %s6867, 16
          %s6869 = scalar_lea.vmem [#allocation2], %s6868
          %6870 = dma.done %s6866, 256
        $region88: #{tpu_custom_call.1} parent=83 // pred_fallthru
          _
      $region84: #{tpu_custom_call.1} parent=5 // pred_fallthru
        _
    $region6: #{tpu_custom_call.1} parent=1 // loop_footer
      %s27 = sadd.s32 1, %s23
    $region7: #{tpu_custom_call.1} parent=1 // loop_footer_branch
      %22 = sbr.rel target = $region3
    $region8: #{tpu_custom_call.1} parent=1 // loop_exit
      _
    %6871 = vsyncpa [#allocation3], 1
    %s6872 = scalar_lea.sflag [#allocation3], 1
    %6873 = vsyncpa %s6872, 1

</llo_original>
